<compile_context>
chip_gen: v7x
topology: tpu7x:2x2x1
jax: 0.10.0
libtpu: 0.0.40
codegen_flags: <defaults>
</compile_context>

<pallas_src>
import functools
import math

import jax
import jax.numpy as jnp
from jax.experimental import pallas as pl
from jax.experimental.pallas import tpu as pltpu


# ----------------------------- shared math helpers -----------------------------

def _layernorm(x, gamma, beta, eps=1e-5):
    mu = jnp.mean(x, axis=-1, keepdims=True)
    xc = x - mu
    var = jnp.mean(xc * xc, axis=-1, keepdims=True)
    return xc * jax.lax.rsqrt(var + eps) * gamma + beta


def _gelu(x):
    c = math.sqrt(2.0 / math.pi)
    return 0.5 * x * (1.0 + jnp.tanh(c * (x + 0.044715 * x * x * x)))


def sinusoidal_pe(length, d_model):
    pos = jnp.arange(length, dtype=jnp.float32)[:, None]
    div = jnp.exp(jnp.arange(0, d_model, 2, dtype=jnp.float32)
                  * (-math.log(10000.0) / d_model))
    ang = pos * div
    pe = jnp.zeros((length, d_model), jnp.float32)
    pe = pe.at[:, 0::2].set(jnp.sin(ang))
    pe = pe.at[:, 1::2].set(jnp.cos(ang))
    return pe


# ----------------------------- fused Pallas kernel -----------------------------

def _fused_transformer_kernel(n_heads, batch_block, eps,
                              xcat_ref, pe_ref, wemb_ref,
                              wq_ref, bq_ref, wk_ref, bk_ref, wv_ref, bv_ref,
                              wo_ref, bo_ref,
                              w1_ref, b1_ref, w2_ref, b2_ref,
                              g1_ref, be1_ref, g2_ref, be2_ref,
                              gn_ref, bn_ref, wp_ref, bp_ref,
                              o_ref, h_ref, ctx_ref):
    layer = pl.program_id(1)
    n_layers = pl.num_programs(1)
    M, D = h_ref.shape                      # M = Bt * L stacked rows
    Bt = batch_block
    L = M // Bt
    H = n_heads
    dh = D // H
    cd = jnp.bfloat16
    scale = 1.0 / math.sqrt(dh)

    # ---- DataEmbedding (layer 0 only): one lane-dense [M,3C]x[3C,D] matmul + PE ----
    @pl.when(layer == 0)
    def _embed():
        h_ref[...] = (jnp.dot(xcat_ref[...], wemb_ref[...],
                              preferred_element_type=jnp.float32) + pe_ref[...])

    h = h_ref[...]                          # [M, D] fp32 running activation
    hc = h.astype(cd)

    # ---- full-D projections on the stacked Bt*L rows (bf16 MXU, f32 acc) ----
    q = jnp.dot(hc, wq_ref[0], preferred_element_type=jnp.float32) + bq_ref[0]
    k = jnp.dot(hc, wk_ref[0], preferred_element_type=jnp.float32) + bk_ref[0]
    v = jnp.dot(hc, wv_ref[0], preferred_element_type=jnp.float32) + bv_ref[0]
    qc, kc, vc = q.astype(cd), k.astype(cd), v.astype(cd)

    # ---- per-(batch, head) scores / softmax / context on tiny [L, L] tiles ----
    # Per-head context is written into the [M, D] VMEM slab at static column offsets,
    # so the output projection is a single full-D matmul below.
    for b in range(Bt):
        rs = slice(b * L, (b + 1) * L)
        qb, kb, vb = qc[rs], kc[rs], vc[rs]
        for hd in range(H):
            cs = slice(hd * dh, (hd + 1) * dh)
            s = jax.lax.dot_general(qb[:, cs], kb[:, cs],
                                    (((1,), (1,)), ((), ())),
                                    preferred_element_type=jnp.float32) * scale
            s = s - jnp.max(s, axis=-1, keepdims=True)
            p = jnp.exp(s)
            p = p * pl.reciprocal(jnp.sum(p, axis=-1, keepdims=True), approx=True)
            ctx_ref[rs, cs] = jnp.dot(p.astype(cd), vb[:, cs],
                                      preferred_element_type=jnp.float32)

    attn = jnp.dot(ctx_ref[...].astype(cd), wo_ref[0],
                   preferred_element_type=jnp.float32) + bo_ref[0]

    # ---- residual + norm1, FFN (conv1d k=1 == matmul) + gelu, residual + norm2 ----
    h1 = h + attn
    xn = _layernorm(h1, g1_ref[0], be1_ref[0])
    y = jnp.dot(xn.astype(cd), w1_ref[0], preferred_element_type=jnp.float32) + b1_ref[0]
    y = _gelu(y)
    y = jnp.dot(y.astype(cd), w2_ref[0], preferred_element_type=jnp.float32) + b2_ref[0]
    h_out = _layernorm(xn + y, g2_ref[0], be2_ref[0])
    h_ref[...] = h_out

    # ---- final LayerNorm + projection + clamp (last layer only) ----
    @pl.when(layer == n_layers - 1)
    def _finalize():
        hf = _layernorm(h_out, gn_ref[...], bn_ref[...])
        proj = jnp.dot(hf.astype(cd), wp_ref[...],
                       preferred_element_type=jnp.float32) + bp_ref[...]
        o_ref[...] = jnp.clip(proj, -eps, eps).astype(o_ref.dtype)


# ----------------------------- wrapper -----------------------------

_PARAM_NAMES = ['w_emb', 'wq', 'bq', 'wk', 'bk', 'wv', 'bv', 'wo', 'bo',
                'w1', 'b1', 'w2', 'b2', 'g1', 'be1', 'g2', 'be2',
                'gn', 'bn', 'wp', 'bp']
_PER_LAYER = {'wq', 'bq', 'wk', 'bk', 'wv', 'bv', 'wo', 'bo',
              'w1', 'b1', 'w2', 'b2', 'g1', 'be1', 'g2', 'be2'}


def _choose_batch_block(B, L, target_rows=128):
    """Smallest divisor Bt of B with Bt*L >= target_rows (fills the MXU M dim).

    Keeping Bt minimal (subject to the row target) leaves >= 2 parallel grid blocks
    for the two v7x TensorCores whenever there is enough work; if even the whole
    batch is below the target, use it all (B*L rows is all the M we have).
    """
    for bt in range(1, B + 1):
        if B % bt:
            continue
        if bt != B and (bt * L) % 8:        # (8,128) block-shape constraint on rows
            continue
        if bt * L >= target_rows:
            return bt
    return B


def transformer_adv_generator_forward(x, kernel_params, pe, *, n_heads, eps,
                                      batch_block=None):
    B, L, C = x.shape
    n_layers, D, _ = kernel_params['wq'].shape
    d_ff = kernel_params['w1'].shape[2]
    assert D % n_heads == 0

    Bt = batch_block if batch_block is not None else _choose_batch_block(B, L)
    assert B % Bt == 0
    n_bb = B // Bt
    M = Bt * L

    # Host-side prep (cheap XLA ops, once per call):
    #  * circular Conv1d(k=3) folded into a single matmul via channel concat of the
    #    circular shifts [x_{l-1} | x_l | x_{l+1}],
    #  * (B, L) flattened to a single row axis so projections/FFN run on Bt*L rows,
    #  * positional encoding pre-tiled over the batch block.
    x_cat = jnp.concatenate([jnp.roll(x, 1, axis=1), x, jnp.roll(x, -1, axis=1)],
                            axis=-1).astype(jnp.bfloat16).reshape(B * L, 3 * C)
    pe_t = jnp.tile(pe.astype(jnp.float32), (Bt, 1))                    # [M, D]

    def layer_spec(p):
        nd = p.ndim
        return pl.BlockSpec((1,) + p.shape[1:],
                            lambda b, l, _n=nd: (l,) + (0,) * (_n - 1))

    def const_spec(p):
        nd = p.ndim
        return pl.BlockSpec(p.shape, lambda b, l, _n=nd: (0,) * _n)

    in_specs = [pl.BlockSpec((M, 3 * C), lambda b, l: (b, 0)),   # x_cat (row blocks)
                const_spec(pe_t)]
    args = [x_cat, pe_t]
    for name in _PARAM_NAMES:
        p = kernel_params[name]
        in_specs.append(layer_spec(p) if name in _PER_LAYER else const_spec(p))
        args.append(p)

    # advisory cost estimate for the fused custom call
    flops = B * L * (n_layers * (8 * D * D + 4 * L * D + 4 * D * d_ff)
                     + 2 * 3 * C * D + 2 * D * C)
    transcend = B * n_layers * (n_heads * L * L + L * d_ff + 4 * L) + B * L
    bytes_accessed = (int(x_cat.size) * 2 + B * L * C * x.dtype.itemsize
                      + n_bb * int(pe_t.size) * 4
                      + n_bb * sum(int(v.size) * v.dtype.itemsize
                                   for v in kernel_params.values()))
    cost = pl.CostEstimate(flops=int(flops), transcendentals=int(transcend),
                           bytes_accessed=int(bytes_accessed))

    # VMEM budget: double-buffered per-layer weights + constants + activation/context
    # scratch + working tiles, with headroom; capped at v7x's 64 MiB physical budget.
    per_layer_bytes = sum(int(kernel_params[n].size // kernel_params[n].shape[0])
                          * kernel_params[n].dtype.itemsize for n in _PER_LAYER)
    const_bytes = sum(int(kernel_params[n].size) * kernel_params[n].dtype.itemsize
                      for n in _PARAM_NAMES if n not in _PER_LAYER)
    io_bytes = M * (3 * C * 2 + C * x.dtype.itemsize) + M * D * 4
    work_bytes = 4 * M * (6 * D + 2 * d_ff) + 4 * 2 * L * L
    vmem_limit = int(min(64 << 20,
                         max(32 << 20, 2 * (2 * per_layer_bytes + const_bytes
                                            + 2 * io_bytes + 2 * M * D * 4
                                            + work_bytes))))

    out_flat = pl.pallas_call(
        functools.partial(_fused_transformer_kernel, n_heads, Bt, float(eps)),
        out_shape=jax.ShapeDtypeStruct((B * L, C), x.dtype),
        grid=(n_bb, n_layers),
        in_specs=in_specs,
        out_specs=pl.BlockSpec((M, C), lambda b, l: (b, 0)),
        scratch_shapes=[pltpu.VMEM((M, D), jnp.float32),    # running activation
                        pltpu.VMEM((M, D), jnp.float32)],   # per-head context slab
        compiler_params=pltpu.CompilerParams(
            dimension_semantics=("parallel", "arbitrary"),
            vmem_limit_bytes=vmem_limit),
        cost_estimate=cost,
    )(*args)
    return out_flat.reshape(B, L, C)


# ----------------------------- parameter construction -----------------------------

def init_full_params(key, n_layers, c_in, d_model, d_ff):
    ks = jax.random.split(key, 21)

    def nrm(k, shape, scale):
        return scale * jax.random.normal(k, shape, jnp.float32)

    return {
        'w_emb': nrm(ks[0], (3, c_in, d_model), 0.3),
        'wq': nrm(ks[1], (n_layers, d_model, d_model), 0.08),
        'bq': nrm(ks[2], (n_layers, 1, d_model), 0.02),
        'wk': nrm(ks[3], (n_layers, d_model, d_model), 0.08),
        'bk': nrm(ks[4], (n_layers, 1, d_model), 0.02),
        'wv': nrm(ks[5], (n_layers, d_model, d_model), 0.08),
        'bv': nrm(ks[6], (n_layers, 1, d_model), 0.02),
        'wo': nrm(ks[7], (n_layers, d_model, d_model), 0.08),
        'bo': nrm(ks[8], (n_layers, 1, d_model), 0.02),
        'w1': nrm(ks[9], (n_layers, d_model, d_ff), 0.08),
        'b1': nrm(ks[10], (n_layers, 1, d_ff), 0.02),
        'w2': nrm(ks[11], (n_layers, d_ff, d_model), 0.08),
        'b2': nrm(ks[12], (n_layers, 1, d_model), 0.02),
        'g1': 1.0 + nrm(ks[13], (n_layers, 1, d_model), 0.05),
        'be1': nrm(ks[14], (n_layers, 1, d_model), 0.02),
        'g2': 1.0 + nrm(ks[15], (n_layers, 1, d_model), 0.05),
        'be2': nrm(ks[16], (n_layers, 1, d_model), 0.02),
        'gn': 1.0 + nrm(ks[17], (1, d_model), 0.05),
        'bn': nrm(ks[18], (1, d_model), 0.02),
        'wp': nrm(ks[19], (d_model, c_in), 0.08),
        'bp': nrm(ks[20], (1, c_in), 0.02),
    }


def pack_kernel_params(full):
    """Host-side packing: bf16 MXU weights (conv kernel concatenated into one [3C, D]
    matrix); biases / LayerNorm params stay fp32 and lane-dense [*, D] / [*, d_ff]."""
    # NOTE(synk): when importing real PyTorch weights, nn.Linear / Conv1d kernels must
    # be transposed into the [in, out] layout used here.
    bf = jnp.bfloat16
    w_emb = jnp.concatenate([full['w_emb'][0], full['w_emb'][1], full['w_emb'][2]],
                            axis=0)                                    # [3C, D]
    out = {'w_emb': w_emb.astype(bf)}
    for n in ('wq', 'wk', 'wv', 'wo', 'w1', 'w2', 'wp'):
        out[n] = full[n].astype(bf)
    for n in ('bq', 'bk', 'bv', 'bo', 'b1', 'b2',
              'g1', 'be1', 'g2', 'be2', 'gn', 'bn', 'bp'):
        out[n] = full[n].astype(jnp.float32)
    return out


# ----------------------------- plain-JAX reference -----------------------------

def reference_forward(x, full, pe, n_heads, eps):
    cd = jnp.bfloat16
    f32 = jnp.float32

    def mm(a, b):  # bf16 MXU inputs, f32 accumulation (mirrors the kernel's casts)
        return jnp.einsum('...ij,jk->...ik', a.astype(cd), b.astype(cd),
                          preferred_element_type=f32)

    B, L, C = x.shape
    w_emb = full['w_emb']
    h = (mm(jnp.roll(x, 1, axis=1), w_emb[0]) + mm(x, w_emb[1])
         + mm(jnp.roll(x, -1, axis=1), w_emb[2]) + pe[None])
    D = h.shape[-1]
    H, dh = n_heads, D // n_heads
    n_layers = full['wq'].shape[0]

    for i in range(n_layers):
        q = (mm(h, full['wq'][i]) + full['bq'][i]).reshape(B, L, H, dh)
        k = (mm(h, full['wk'][i]) + full['bk'][i]).reshape(B, L, H, dh)
        v = (mm(h, full['wv'][i]) + full['bv'][i]).reshape(B, L, H, dh)
        s = jnp.einsum('blhe,bshe->bhls', q.astype(cd), k.astype(cd),
                       preferred_element_type=f32) / math.sqrt(dh)
        a = jax.nn.softmax(s, axis=-1)
        ctx = jnp.einsum('bhls,bshd->blhd', a.astype(cd), v.astype(cd),
                         preferred_element_type=f32).reshape(B, L, D)
        h = h + mm(ctx, full['wo'][i]) + full['bo'][i]
        xn = _layernorm(h, full['g1'][i], full['be1'][i])
        y = _gelu(mm(xn, full['w1'][i]) + full['b1'][i])
        y = mm(y, full['w2'][i]) + full['b2'][i]
        h = _layernorm(xn + y, full['g2'][i], full['be2'][i])

    h = _layernorm(h, full['gn'], full['bn'])
    out = mm(h, full['wp']) + full['bp']
    return jnp.clip(out, -eps, eps)


# ----------------------------- demo -----------------------------

if __name__ == "__main__":
    # small shapes consistent with Transformer_Adv_generator(win_size, enc_in, ...)
    B, L, C = 2, 16, 8            # batch, win_size, enc_in
    D, H, n_layers, d_ff = 32, 4, 2, 64
    eps = 0.02

    key = jax.random.PRNGKey(0)
    k_x, k_p = jax.random.split(key)
    x = jax.random.normal(k_x, (B, L, C), jnp.float32)

    full_params = init_full_params(k_p, n_layers, C, D, d_ff)
    kernel_params = pack_kernel_params(full_params)
    pe = sinusoidal_pe(L, D)

    out = transformer_adv_generator_forward(x, kernel_params, pe, n_heads=H, eps=eps)
    out = jax.block_until_ready(out)

    ref = reference_forward(x, full_params, pe, H, eps)
    assert out.shape == (B, L, C)
    max_err = float(jnp.max(jnp.abs(out - ref)))
    assert jnp.allclose(out, ref, atol=2e-3, rtol=2e-3), f"max abs err = {max_err}"

    print("KERNEL_OK")
</pallas_src>

<mosaic_0001>
module attributes {stable_mosaic.version = 11 : i64} {
  func.func @_fused_transformer_kernel(%arg0: i32, %arg1: i32, %arg2: memref<32x24xbf16, #tpu.memory_space<vmem>>, %arg3: memref<32x32xf32, #tpu.memory_space<vmem>>, %arg4: memref<24x32xbf16, #tpu.memory_space<vmem>>, %arg5: memref<1x32x32xbf16, #tpu.memory_space<vmem>>, %arg6: memref<1x1x32xf32, #tpu.memory_space<vmem>>, %arg7: memref<1x32x32xbf16, #tpu.memory_space<vmem>>, %arg8: memref<1x1x32xf32, #tpu.memory_space<vmem>>, %arg9: memref<1x32x32xbf16, #tpu.memory_space<vmem>>, %arg10: memref<1x1x32xf32, #tpu.memory_space<vmem>>, %arg11: memref<1x32x32xbf16, #tpu.memory_space<vmem>>, %arg12: memref<1x1x32xf32, #tpu.memory_space<vmem>>, %arg13: memref<1x32x64xbf16, #tpu.memory_space<vmem>>, %arg14: memref<1x1x64xf32, #tpu.memory_space<vmem>>, %arg15: memref<1x64x32xbf16, #tpu.memory_space<vmem>>, %arg16: memref<1x1x32xf32, #tpu.memory_space<vmem>>, %arg17: memref<1x1x32xf32, #tpu.memory_space<vmem>>, %arg18: memref<1x1x32xf32, #tpu.memory_space<vmem>>, %arg19: memref<1x1x32xf32, #tpu.memory_space<vmem>>, %arg20: memref<1x1x32xf32, #tpu.memory_space<vmem>>, %arg21: memref<1x32xf32, #tpu.memory_space<vmem>>, %arg22: memref<1x32xf32, #tpu.memory_space<vmem>>, %arg23: memref<32x8xbf16, #tpu.memory_space<vmem>>, %arg24: memref<1x8xf32, #tpu.memory_space<vmem>>, %arg25: memref<32x8xf32, #tpu.memory_space<vmem>>, %arg26: memref<32x32xf32, #tpu.memory_space<vmem>>, %arg27: memref<32x32xf32, #tpu.memory_space<vmem>>) attributes {dimension_semantics = [#tpu.dimension_semantics<parallel>, #tpu.dimension_semantics<arbitrary>], iteration_bounds = array<i64: 1, 2>, scalar_prefetch = 0 : i64, scratch_operands = 2 : i64, tpu.core_type = #tpu.core_type<tc>, window_params = [{transform_indices = @transform_0, window_bounds = array<i64: 32, 24>}, {pipeline_mode = #tpu.pipeline_mode<synchronous>, transform_indices = @transform_1, window_bounds = array<i64: 32, 32>}, {pipeline_mode = #tpu.pipeline_mode<synchronous>, transform_indices = @transform_2, window_bounds = array<i64: 24, 32>}, {transform_indices = @transform_3, window_bounds = array<i64: 1, 32, 32>}, {transform_indices = @transform_4, window_bounds = array<i64: 1, 1, 32>}, {transform_indices = @transform_5, window_bounds = array<i64: 1, 32, 32>}, {transform_indices = @transform_6, window_bounds = array<i64: 1, 1, 32>}, {transform_indices = @transform_7, window_bounds = array<i64: 1, 32, 32>}, {transform_indices = @transform_8, window_bounds = array<i64: 1, 1, 32>}, {transform_indices = @transform_9, window_bounds = array<i64: 1, 32, 32>}, {transform_indices = @transform_10, window_bounds = array<i64: 1, 1, 32>}, {transform_indices = @transform_11, window_bounds = array<i64: 1, 32, 64>}, {transform_indices = @transform_12, window_bounds = array<i64: 1, 1, 64>}, {transform_indices = @transform_13, window_bounds = array<i64: 1, 64, 32>}, {transform_indices = @transform_14, window_bounds = array<i64: 1, 1, 32>}, {transform_indices = @transform_15, window_bounds = array<i64: 1, 1, 32>}, {transform_indices = @transform_16, window_bounds = array<i64: 1, 1, 32>}, {transform_indices = @transform_17, window_bounds = array<i64: 1, 1, 32>}, {transform_indices = @transform_18, window_bounds = array<i64: 1, 1, 32>}, {pipeline_mode = #tpu.pipeline_mode<synchronous>, transform_indices = @transform_19, window_bounds = array<i64: 1, 32>}, {pipeline_mode = #tpu.pipeline_mode<synchronous>, transform_indices = @transform_20, window_bounds = array<i64: 1, 32>}, {pipeline_mode = #tpu.pipeline_mode<synchronous>, transform_indices = @transform_21, window_bounds = array<i64: 32, 8>}, {pipeline_mode = #tpu.pipeline_mode<synchronous>, transform_indices = @transform_22, window_bounds = array<i64: 1, 8>}, {transform_indices = @transform_23, window_bounds = array<i64: 32, 8>}]} {
    %c0_i32 = arith.constant 0 : i32
    %0 = arith.cmpi eq, %arg1, %c0_i32 : i32
    %1 = arith.extui %0 : i1 to i32
    %c0_i32_0 = arith.constant 0 : i32
    %2 = arith.cmpi ne, %1, %c0_i32_0 : i32
    scf.if %2 {
      %c0_127 = arith.constant 0 : index
      %c0_128 = arith.constant 0 : index
      %279 = vector.load %arg2[%c0_127, %c0_128] : memref<32x24xbf16, #tpu.memory_space<vmem>>, vector<32x24xbf16>
      %c0_129 = arith.constant 0 : index
      %c0_130 = arith.constant 0 : index
      %280 = vector.load %arg4[%c0_129, %c0_130] : memref<24x32xbf16, #tpu.memory_space<vmem>>, vector<24x32xbf16>
      %cst_131 = arith.constant dense<0.000000e+00> : vector<32x32xf32>
      %281 = tpu.matmul %279, %280, %cst_131 {dimension_numbers = #tpu.dot_dimension_numbers<[1], [0], [0], [1], [0, 0, 1, 1], [], []>} : vector<32x24xbf16>, vector<24x32xbf16>, vector<32x32xf32> -> vector<32x32xf32>
      %c0_132 = arith.constant 0 : index
      %c0_133 = arith.constant 0 : index
      %282 = vector.load %arg3[%c0_132, %c0_133] : memref<32x32xf32, #tpu.memory_space<vmem>>, vector<32x32xf32>
      %283 = arith.addf %281, %282 : vector<32x32xf32>
      %c0_134 = arith.constant 0 : index
      %c0_135 = arith.constant 0 : index
      %284 = vector.load %arg26[%c0_134, %c0_135] : memref<32x32xf32, #tpu.memory_space<vmem>>, vector<32x32xf32>
      tpu.vector_store %arg26[%c0_134, %c0_135], %283 {strides = array<i32>} : memref<32x32xf32, #tpu.memory_space<vmem>>, vector<32x32xf32>,
    } else {
    }
    %c0 = arith.constant 0 : index
    %c0_1 = arith.constant 0 : index
    %3 = vector.load %arg26[%c0, %c0_1] : memref<32x32xf32, #tpu.memory_space<vmem>>, vector<32x32xf32>
    %4 = arith.truncf %3 : vector<32x32xf32> to vector<32x32xbf16>
    %c0_2 = arith.constant 0 : index
    %c0_3 = arith.constant 0 : index
    %c0_4 = arith.constant 0 : index
    %5 = vector.load %arg5[%c0_2, %c0_3, %c0_4] : memref<1x32x32xbf16, #tpu.memory_space<vmem>>, vector<1x32x32xbf16>
    %6 = vector.shape_cast %5 : vector<1x32x32xbf16> to vector<32x32xbf16>
    %cst = arith.constant dense<0.000000e+00> : vector<32x32xf32>
    %7 = tpu.matmul %4, %6, %cst {dimension_numbers = #tpu.dot_dimension_numbers<[1], [0], [0], [1], [0, 0, 1, 1], [], []>} : vector<32x32xbf16>, vector<32x32xbf16>, vector<32x32xf32> -> vector<32x32xf32>
    %c0_5 = arith.constant 0 : index
    %c0_6 = arith.constant 0 : index
    %c0_7 = arith.constant 0 : index
    %8 = vector.load %arg6[%c0_5, %c0_6, %c0_7] : memref<1x1x32xf32, #tpu.memory_space<vmem>>, vector<1x1x32xf32>
    %9 = vector.shape_cast %8 : vector<1x1x32xf32> to vector<1x32xf32>
    %10 = vector.broadcast %9 : vector<1x32xf32> to vector<32x32xf32>
    %11 = arith.addf %7, %10 : vector<32x32xf32>
    %c0_8 = arith.constant 0 : index
    %c0_9 = arith.constant 0 : index
    %c0_10 = arith.constant 0 : index
    %12 = vector.load %arg7[%c0_8, %c0_9, %c0_10] : memref<1x32x32xbf16, #tpu.memory_space<vmem>>, vector<1x32x32xbf16>
    %13 = vector.shape_cast %12 : vector<1x32x32xbf16> to vector<32x32xbf16>
    %cst_11 = arith.constant dense<0.000000e+00> : vector<32x32xf32>
    %14 = tpu.matmul %4, %13, %cst_11 {dimension_numbers = #tpu.dot_dimension_numbers<[1], [0], [0], [1], [0, 0, 1, 1], [], []>} : vector<32x32xbf16>, vector<32x32xbf16>, vector<32x32xf32> -> vector<32x32xf32>
    %c0_12 = arith.constant 0 : index
    %c0_13 = arith.constant 0 : index
    %c0_14 = arith.constant 0 : index
    %15 = vector.load %arg8[%c0_12, %c0_13, %c0_14] : memref<1x1x32xf32, #tpu.memory_space<vmem>>, vector<1x1x32xf32>
    %16 = vector.shape_cast %15 : vector<1x1x32xf32> to vector<1x32xf32>
    %17 = vector.broadcast %16 : vector<1x32xf32> to vector<32x32xf32>
    %18 = arith.addf %14, %17 : vector<32x32xf32>
    %c0_15 = arith.constant 0 : index
    %c0_16 = arith.constant 0 : index
    %c0_17 = arith.constant 0 : index
    %19 = vector.load %arg9[%c0_15, %c0_16, %c0_17] : memref<1x32x32xbf16, #tpu.memory_space<vmem>>, vector<1x32x32xbf16>
    %20 = vector.shape_cast %19 : vector<1x32x32xbf16> to vector<32x32xbf16>
    %cst_18 = arith.constant dense<0.000000e+00> : vector<32x32xf32>
    %21 = tpu.matmul %4, %20, %cst_18 {dimension_numbers = #tpu.dot_dimension_numbers<[1], [0], [0], [1], [0, 0, 1, 1], [], []>} : vector<32x32xbf16>, vector<32x32xbf16>, vector<32x32xf32> -> vector<32x32xf32>
    %c0_19 = arith.constant 0 : index
    %c0_20 = arith.constant 0 : index
    %c0_21 = arith.constant 0 : index
    %22 = vector.load %arg10[%c0_19, %c0_20, %c0_21] : memref<1x1x32xf32, #tpu.memory_space<vmem>>, vector<1x1x32xf32>
    %23 = vector.shape_cast %22 : vector<1x1x32xf32> to vector<1x32xf32>
    %24 = vector.broadcast %23 : vector<1x32xf32> to vector<32x32xf32>
    %25 = arith.addf %21, %24 : vector<32x32xf32>
    %26 = arith.truncf %11 : vector<32x32xf32> to vector<32x32xbf16>
    %27 = arith.truncf %18 : vector<32x32xf32> to vector<32x32xbf16>
    %28 = arith.truncf %25 : vector<32x32xf32> to vector<32x32xbf16>
    %29 = vector.extract_strided_slice %26 {offsets = [0, 0], sizes = [16, 32], strides = [1, 1]} : vector<32x32xbf16> to vector<16x32xbf16>
    %30 = vector.extract_strided_slice %27 {offsets = [0, 0], sizes = [16, 32], strides = [1, 1]} : vector<32x32xbf16> to vector<16x32xbf16>
    %31 = vector.extract_strided_slice %28 {offsets = [0, 0], sizes = [16, 32], strides = [1, 1]} : vector<32x32xbf16> to vector<16x32xbf16>
    %32 = vector.extract_strided_slice %29 {offsets = [0, 0], sizes = [16, 8], strides = [1, 1]} : vector<16x32xbf16> to vector<16x8xbf16>
    %33 = vector.extract_strided_slice %30 {offsets = [0, 0], sizes = [16, 8], strides = [1, 1]} : vector<16x32xbf16> to vector<16x8xbf16>
    %cst_22 = arith.constant dense<0.000000e+00> : vector<16x16xf32>
    %34 = tpu.matmul %32, %33, %cst_22 {dimension_numbers = #tpu.dot_dimension_numbers<[1], [1], [0], [0], [0, 0, 1, 0], [], []>} : vector<16x8xbf16>, vector<16x8xbf16>, vector<16x16xf32> -> vector<16x16xf32>
    %cst_23 = arith.constant 0.353553385 : f32
    %35 = vector.broadcast %cst_23 : f32 to vector<16x16xf32>
    %36 = arith.mulf %34, %35 : vector<16x16xf32>
    %cst_24 = arith.constant dense<0xFF800000> : vector<16xf32>
    %37 = vector.multi_reduction <maximumf>, %36, %cst_24 [1] : vector<16x16xf32> to vector<16xf32>
    %38 = vector.shape_cast %37 : vector<16xf32> to vector<16x1xf32>
    %39 = vector.broadcast %38 : vector<16x1xf32> to vector<16x16xf32>
    %40 = arith.subf %36, %39 : vector<16x16xf32>
    %41 = math.exp %40 : vector<16x16xf32>
    %cst_25 = arith.constant dense<0.000000e+00> : vector<16xf32>
    %42 = vector.multi_reduction <add>, %41, %cst_25 [1] : vector<16x16xf32> to vector<16xf32>
    %43 = vector.shape_cast %42 : vector<16xf32> to vector<16x1xf32>
    %44 = tpu.reciprocal %43 {approx = true} : vector<16x1xf32> -> vector<16x1xf32>
    %45 = vector.broadcast %44 : vector<16x1xf32> to vector<16x16xf32>
    %46 = arith.mulf %41, %45 : vector<16x16xf32>
    %47 = arith.truncf %46 : vector<16x16xf32> to vector<16x16xbf16>
    %48 = vector.extract_strided_slice %31 {offsets = [0, 0], sizes = [16, 8], strides = [1, 1]} : vector<16x32xbf16> to vector<16x8xbf16>
    %cst_26 = arith.constant dense<0.000000e+00> : vector<16x8xf32>
    %49 = tpu.matmul %47, %48, %cst_26 {dimension_numbers = #tpu.dot_dimension_numbers<[1], [0], [0], [1], [0, 0, 1, 1], [], []>} : vector<16x16xbf16>, vector<16x8xbf16>, vector<16x8xf32> -> vector<16x8xf32>
    %c0_27 = arith.constant 0 : index
    %c0_28 = arith.constant 0 : index
    %50 = vector.load %arg27[%c0_27, %c0_28] : memref<32x32xf32, #tpu.memory_space<vmem>>, vector<16x8xf32>
    tpu.vector_store %arg27[%c0_27, %c0_28], %49 {strides = array<i32>} : memref<32x32xf32, #tpu.memory_space<vmem>>, vector<16x8xf32>,
    %51 = vector.extract_strided_slice %29 {offsets = [0, 8], sizes = [16, 8], strides = [1, 1]} : vector<16x32xbf16> to vector<16x8xbf16>
    %52 = vector.extract_strided_slice %30 {offsets = [0, 8], sizes = [16, 8], strides = [1, 1]} : vector<16x32xbf16> to vector<16x8xbf16>
    %cst_29 = arith.constant dense<0.000000e+00> : vector<16x16xf32>
    %53 = tpu.matmul %51, %52, %cst_29 {dimension_numbers = #tpu.dot_dimension_numbers<[1], [1], [0], [0], [0, 0, 1, 0], [], []>} : vector<16x8xbf16>, vector<16x8xbf16>, vector<16x16xf32> -> vector<16x16xf32>
    %cst_30 = arith.constant 0.353553385 : f32
    %54 = vector.broadcast %cst_30 : f32 to vector<16x16xf32>
    %55 = arith.mulf %53, %54 : vector<16x16xf32>
    %cst_31 = arith.constant dense<0xFF800000> : vector<16xf32>
    %56 = vector.multi_reduction <maximumf>, %55, %cst_31 [1] : vector<16x16xf32> to vector<16xf32>
    %57 = vector.shape_cast %56 : vector<16xf32> to vector<16x1xf32>
    %58 = vector.broadcast %57 : vector<16x1xf32> to vector<16x16xf32>
    %59 = arith.subf %55, %58 : vector<16x16xf32>
    %60 = math.exp %59 : vector<16x16xf32>
    %cst_32 = arith.constant dense<0.000000e+00> : vector<16xf32>
    %61 = vector.multi_reduction <add>, %60, %cst_32 [1] : vector<16x16xf32> to vector<16xf32>
    %62 = vector.shape_cast %61 : vector<16xf32> to vector<16x1xf32>
    %63 = tpu.reciprocal %62 {approx = true} : vector<16x1xf32> -> vector<16x1xf32>
    %64 = vector.broadcast %63 : vector<16x1xf32> to vector<16x16xf32>
    %65 = arith.mulf %60, %64 : vector<16x16xf32>
    %66 = arith.truncf %65 : vector<16x16xf32> to vector<16x16xbf16>
    %67 = vector.extract_strided_slice %31 {offsets = [0, 8], sizes = [16, 8], strides = [1, 1]} : vector<16x32xbf16> to vector<16x8xbf16>
    %cst_33 = arith.constant dense<0.000000e+00> : vector<16x8xf32>
    %68 = tpu.matmul %66, %67, %cst_33 {dimension_numbers = #tpu.dot_dimension_numbers<[1], [0], [0], [1], [0, 0, 1, 1], [], []>} : vector<16x16xbf16>, vector<16x8xbf16>, vector<16x8xf32> -> vector<16x8xf32>
    %c0_34 = arith.constant 0 : index
    %c8 = arith.constant 8 : index
    %69 = vector.load %arg27[%c0_34, %c8] : memref<32x32xf32, #tpu.memory_space<vmem>>, vector<16x8xf32>
    tpu.vector_store %arg27[%c0_34, %c8], %68 {strides = array<i32>} : memref<32x32xf32, #tpu.memory_space<vmem>>, vector<16x8xf32>,
    %70 = vector.extract_strided_slice %29 {offsets = [0, 16], sizes = [16, 8], strides = [1, 1]} : vector<16x32xbf16> to vector<16x8xbf16>
    %71 = vector.extract_strided_slice %30 {offsets = [0, 16], sizes = [16, 8], strides = [1, 1]} : vector<16x32xbf16> to vector<16x8xbf16>
    %cst_35 = arith.constant dense<0.000000e+00> : vector<16x16xf32>
    %72 = tpu.matmul %70, %71, %cst_35 {dimension_numbers = #tpu.dot_dimension_numbers<[1], [1], [0], [0], [0, 0, 1, 0], [], []>} : vector<16x8xbf16>, vector<16x8xbf16>, vector<16x16xf32> -> vector<16x16xf32>
    %cst_36 = arith.constant 0.353553385 : f32
    %73 = vector.broadcast %cst_36 : f32 to vector<16x16xf32>
    %74 = arith.mulf %72, %73 : vector<16x16xf32>
    %cst_37 = arith.constant dense<0xFF800000> : vector<16xf32>
    %75 = vector.multi_reduction <maximumf>, %74, %cst_37 [1] : vector<16x16xf32> to vector<16xf32>
    %76 = vector.shape_cast %75 : vector<16xf32> to vector<16x1xf32>
    %77 = vector.broadcast %76 : vector<16x1xf32> to vector<16x16xf32>
    %78 = arith.subf %74, %77 : vector<16x16xf32>
    %79 = math.exp %78 : vector<16x16xf32>
    %cst_38 = arith.constant dense<0.000000e+00> : vector<16xf32>
    %80 = vector.multi_reduction <add>, %79, %cst_38 [1] : vector<16x16xf32> to vector<16xf32>
    %81 = vector.shape_cast %80 : vector<16xf32> to vector<16x1xf32>
    %82 = tpu.reciprocal %81 {approx = true} : vector<16x1xf32> -> vector<16x1xf32>
    %83 = vector.broadcast %82 : vector<16x1xf32> to vector<16x16xf32>
    %84 = arith.mulf %79, %83 : vector<16x16xf32>
    %85 = arith.truncf %84 : vector<16x16xf32> to vector<16x16xbf16>
    %86 = vector.extract_strided_slice %31 {offsets = [0, 16], sizes = [16, 8], strides = [1, 1]} : vector<16x32xbf16> to vector<16x8xbf16>
    %cst_39 = arith.constant dense<0.000000e+00> : vector<16x8xf32>
    %87 = tpu.matmul %85, %86, %cst_39 {dimension_numbers = #tpu.dot_dimension_numbers<[1], [0], [0], [1], [0, 0, 1, 1], [], []>} : vector<16x16xbf16>, vector<16x8xbf16>, vector<16x8xf32> -> vector<16x8xf32>
    %c0_40 = arith.constant 0 : index
    %c16 = arith.constant 16 : index
    %88 = vector.load %arg27[%c0_40, %c16] : memref<32x32xf32, #tpu.memory_space<vmem>>, vector<16x8xf32>
    tpu.vector_store %arg27[%c0_40, %c16], %87 {strides = array<i32>} : memref<32x32xf32, #tpu.memory_space<vmem>>, vector<16x8xf32>,
    %89 = vector.extract_strided_slice %29 {offsets = [0, 24], sizes = [16, 8], strides = [1, 1]} : vector<16x32xbf16> to vector<16x8xbf16>
    %90 = vector.extract_strided_slice %30 {offsets = [0, 24], sizes = [16, 8], strides = [1, 1]} : vector<16x32xbf16> to vector<16x8xbf16>
    %cst_41 = arith.constant dense<0.000000e+00> : vector<16x16xf32>
    %91 = tpu.matmul %89, %90, %cst_41 {dimension_numbers = #tpu.dot_dimension_numbers<[1], [1], [0], [0], [0, 0, 1, 0], [], []>} : vector<16x8xbf16>, vector<16x8xbf16>, vector<16x16xf32> -> vector<16x16xf32>
    %cst_42 = arith.constant 0.353553385 : f32
    %92 = vector.broadcast %cst_42 : f32 to vector<16x16xf32>
    %93 = arith.mulf %91, %92 : vector<16x16xf32>
    %cst_43 = arith.constant dense<0xFF800000> : vector<16xf32>
    %94 = vector.multi_reduction <maximumf>, %93, %cst_43 [1] : vector<16x16xf32> to vector<16xf32>
    %95 = vector.shape_cast %94 : vector<16xf32> to vector<16x1xf32>
    %96 = vector.broadcast %95 : vector<16x1xf32> to vector<16x16xf32>
    %97 = arith.subf %93, %96 : vector<16x16xf32>
    %98 = math.exp %97 : vector<16x16xf32>
    %cst_44 = arith.constant dense<0.000000e+00> : vector<16xf32>
    %99 = vector.multi_reduction <add>, %98, %cst_44 [1] : vector<16x16xf32> to vector<16xf32>
    %100 = vector.shape_cast %99 : vector<16xf32> to vector<16x1xf32>
    %101 = tpu.reciprocal %100 {approx = true} : vector<16x1xf32> -> vector<16x1xf32>
    %102 = vector.broadcast %101 : vector<16x1xf32> to vector<16x16xf32>
    %103 = arith.mulf %98, %102 : vector<16x16xf32>
    %104 = arith.truncf %103 : vector<16x16xf32> to vector<16x16xbf16>
    %105 = vector.extract_strided_slice %31 {offsets = [0, 24], sizes = [16, 8], strides = [1, 1]} : vector<16x32xbf16> to vector<16x8xbf16>
    %cst_45 = arith.constant dense<0.000000e+00> : vector<16x8xf32>
    %106 = tpu.matmul %104, %105, %cst_45 {dimension_numbers = #tpu.dot_dimension_numbers<[1], [0], [0], [1], [0, 0, 1, 1], [], []>} : vector<16x16xbf16>, vector<16x8xbf16>, vector<16x8xf32> -> vector<16x8xf32>
    %c0_46 = arith.constant 0 : index
    %c24 = arith.constant 24 : index
    %107 = vector.load %arg27[%c0_46, %c24] : memref<32x32xf32, #tpu.memory_space<vmem>>, vector<16x8xf32>
    tpu.vector_store %arg27[%c0_46, %c24], %106 {strides = array<i32>} : memref<32x32xf32, #tpu.memory_space<vmem>>, vector<16x8xf32>,
    %108 = vector.extract_strided_slice %26 {offsets = [16, 0], sizes = [16, 32], strides = [1, 1]} : vector<32x32xbf16> to vector<16x32xbf16>
    %109 = vector.extract_strided_slice %27 {offsets = [16, 0], sizes = [16, 32], strides = [1, 1]} : vector<32x32xbf16> to vector<16x32xbf16>
    %110 = vector.extract_strided_slice %28 {offsets = [16, 0], sizes = [16, 32], strides = [1, 1]} : vector<32x32xbf16> to vector<16x32xbf16>
    %111 = vector.extract_strided_slice %108 {offsets = [0, 0], sizes = [16, 8], strides = [1, 1]} : vector<16x32xbf16> to vector<16x8xbf16>
    %112 = vector.extract_strided_slice %109 {offsets = [0, 0], sizes = [16, 8], strides = [1, 1]} : vector<16x32xbf16> to vector<16x8xbf16>
    %cst_47 = arith.constant dense<0.000000e+00> : vector<16x16xf32>
    %113 = tpu.matmul %111, %112, %cst_47 {dimension_numbers = #tpu.dot_dimension_numbers<[1], [1], [0], [0], [0, 0, 1, 0], [], []>} : vector<16x8xbf16>, vector<16x8xbf16>, vector<16x16xf32> -> vector<16x16xf32>
    %cst_48 = arith.constant 0.353553385 : f32
    %114 = vector.broadcast %cst_48 : f32 to vector<16x16xf32>
    %115 = arith.mulf %113, %114 : vector<16x16xf32>
    %cst_49 = arith.constant dense<0xFF800000> : vector<16xf32>
    %116 = vector.multi_reduction <maximumf>, %115, %cst_49 [1] : vector<16x16xf32> to vector<16xf32>
    %117 = vector.shape_cast %116 : vector<16xf32> to vector<16x1xf32>
    %118 = vector.broadcast %117 : vector<16x1xf32> to vector<16x16xf32>
    %119 = arith.subf %115, %118 : vector<16x16xf32>
    %120 = math.exp %119 : vector<16x16xf32>
    %cst_50 = arith.constant dense<0.000000e+00> : vector<16xf32>
    %121 = vector.multi_reduction <add>, %120, %cst_50 [1] : vector<16x16xf32> to vector<16xf32>
    %122 = vector.shape_cast %121 : vector<16xf32> to vector<16x1xf32>
    %123 = tpu.reciprocal %122 {approx = true} : vector<16x1xf32> -> vector<16x1xf32>
    %124 = vector.broadcast %123 : vector<16x1xf32> to vector<16x16xf32>
    %125 = arith.mulf %120, %124 : vector<16x16xf32>
    %126 = arith.truncf %125 : vector<16x16xf32> to vector<16x16xbf16>
    %127 = vector.extract_strided_slice %110 {offsets = [0, 0], sizes = [16, 8], strides = [1, 1]} : vector<16x32xbf16> to vector<16x8xbf16>
    %cst_51 = arith.constant dense<0.000000e+00> : vector<16x8xf32>
    %128 = tpu.matmul %126, %127, %cst_51 {dimension_numbers = #tpu.dot_dimension_numbers<[1], [0], [0], [1], [0, 0, 1, 1], [], []>} : vector<16x16xbf16>, vector<16x8xbf16>, vector<16x8xf32> -> vector<16x8xf32>
    %c16_52 = arith.constant 16 : index
    %c0_53 = arith.constant 0 : index
    %129 = vector.load %arg27[%c16_52, %c0_53] : memref<32x32xf32, #tpu.memory_space<vmem>>, vector<16x8xf32>
    tpu.vector_store %arg27[%c16_52, %c0_53], %128 {strides = array<i32>} : memref<32x32xf32, #tpu.memory_space<vmem>>, vector<16x8xf32>,
    %130 = vector.extract_strided_slice %108 {offsets = [0, 8], sizes = [16, 8], strides = [1, 1]} : vector<16x32xbf16> to vector<16x8xbf16>
    %131 = vector.extract_strided_slice %109 {offsets = [0, 8], sizes = [16, 8], strides = [1, 1]} : vector<16x32xbf16> to vector<16x8xbf16>
    %cst_54 = arith.constant dense<0.000000e+00> : vector<16x16xf32>
    %132 = tpu.matmul %130, %131, %cst_54 {dimension_numbers = #tpu.dot_dimension_numbers<[1], [1], [0], [0], [0, 0, 1, 0], [], []>} : vector<16x8xbf16>, vector<16x8xbf16>, vector<16x16xf32> -> vector<16x16xf32>
    %cst_55 = arith.constant 0.353553385 : f32
    %133 = vector.broadcast %cst_55 : f32 to vector<16x16xf32>
    %134 = arith.mulf %132, %133 : vector<16x16xf32>
    %cst_56 = arith.constant dense<0xFF800000> : vector<16xf32>
    %135 = vector.multi_reduction <maximumf>, %134, %cst_56 [1] : vector<16x16xf32> to vector<16xf32>
    %136 = vector.shape_cast %135 : vector<16xf32> to vector<16x1xf32>
    %137 = vector.broadcast %136 : vector<16x1xf32> to vector<16x16xf32>
    %138 = arith.subf %134, %137 : vector<16x16xf32>
    %139 = math.exp %138 : vector<16x16xf32>
    %cst_57 = arith.constant dense<0.000000e+00> : vector<16xf32>
    %140 = vector.multi_reduction <add>, %139, %cst_57 [1] : vector<16x16xf32> to vector<16xf32>
    %141 = vector.shape_cast %140 : vector<16xf32> to vector<16x1xf32>
    %142 = tpu.reciprocal %141 {approx = true} : vector<16x1xf32> -> vector<16x1xf32>
    %143 = vector.broadcast %142 : vector<16x1xf32> to vector<16x16xf32>
    %144 = arith.mulf %139, %143 : vector<16x16xf32>
    %145 = arith.truncf %144 : vector<16x16xf32> to vector<16x16xbf16>
    %146 = vector.extract_strided_slice %110 {offsets = [0, 8], sizes = [16, 8], strides = [1, 1]} : vector<16x32xbf16> to vector<16x8xbf16>
    %cst_58 = arith.constant dense<0.000000e+00> : vector<16x8xf32>
    %147 = tpu.matmul %145, %146, %cst_58 {dimension_numbers = #tpu.dot_dimension_numbers<[1], [0], [0], [1], [0, 0, 1, 1], [], []>} : vector<16x16xbf16>, vector<16x8xbf16>, vector<16x8xf32> -> vector<16x8xf32>
    %c16_59 = arith.constant 16 : index
    %c8_60 = arith.constant 8 : index
    %148 = vector.load %arg27[%c16_59, %c8_60] : memref<32x32xf32, #tpu.memory_space<vmem>>, vector<16x8xf32>
    tpu.vector_store %arg27[%c16_59, %c8_60], %147 {strides = array<i32>} : memref<32x32xf32, #tpu.memory_space<vmem>>, vector<16x8xf32>,
    %149 = vector.extract_strided_slice %108 {offsets = [0, 16], sizes = [16, 8], strides = [1, 1]} : vector<16x32xbf16> to vector<16x8xbf16>
    %150 = vector.extract_strided_slice %109 {offsets = [0, 16], sizes = [16, 8], strides = [1, 1]} : vector<16x32xbf16> to vector<16x8xbf16>
    %cst_61 = arith.constant dense<0.000000e+00> : vector<16x16xf32>
    %151 = tpu.matmul %149, %150, %cst_61 {dimension_numbers = #tpu.dot_dimension_numbers<[1], [1], [0], [0], [0, 0, 1, 0], [], []>} : vector<16x8xbf16>, vector<16x8xbf16>, vector<16x16xf32> -> vector<16x16xf32>
    %cst_62 = arith.constant 0.353553385 : f32
    %152 = vector.broadcast %cst_62 : f32 to vector<16x16xf32>
    %153 = arith.mulf %151, %152 : vector<16x16xf32>
    %cst_63 = arith.constant dense<0xFF800000> : vector<16xf32>
    %154 = vector.multi_reduction <maximumf>, %153, %cst_63 [1] : vector<16x16xf32> to vector<16xf32>
    %155 = vector.shape_cast %154 : vector<16xf32> to vector<16x1xf32>
    %156 = vector.broadcast %155 : vector<16x1xf32> to vector<16x16xf32>
    %157 = arith.subf %153, %156 : vector<16x16xf32>
    %158 = math.exp %157 : vector<16x16xf32>
    %cst_64 = arith.constant dense<0.000000e+00> : vector<16xf32>
    %159 = vector.multi_reduction <add>, %158, %cst_64 [1] : vector<16x16xf32> to vector<16xf32>
    %160 = vector.shape_cast %159 : vector<16xf32> to vector<16x1xf32>
    %161 = tpu.reciprocal %160 {approx = true} : vector<16x1xf32> -> vector<16x1xf32>
    %162 = vector.broadcast %161 : vector<16x1xf32> to vector<16x16xf32>
    %163 = arith.mulf %158, %162 : vector<16x16xf32>
    %164 = arith.truncf %163 : vector<16x16xf32> to vector<16x16xbf16>
    %165 = vector.extract_strided_slice %110 {offsets = [0, 16], sizes = [16, 8], strides = [1, 1]} : vector<16x32xbf16> to vector<16x8xbf16>
    %cst_65 = arith.constant dense<0.000000e+00> : vector<16x8xf32>
    %166 = tpu.matmul %164, %165, %cst_65 {dimension_numbers = #tpu.dot_dimension_numbers<[1], [0], [0], [1], [0, 0, 1, 1], [], []>} : vector<16x16xbf16>, vector<16x8xbf16>, vector<16x8xf32> -> vector<16x8xf32>
    %c16_66 = arith.constant 16 : index
    %c16_67 = arith.constant 16 : index
    %167 = vector.load %arg27[%c16_66, %c16_67] : memref<32x32xf32, #tpu.memory_space<vmem>>, vector<16x8xf32>
    tpu.vector_store %arg27[%c16_66, %c16_67], %166 {strides = array<i32>} : memref<32x32xf32, #tpu.memory_space<vmem>>, vector<16x8xf32>,
    %168 = vector.extract_strided_slice %108 {offsets = [0, 24], sizes = [16, 8], strides = [1, 1]} : vector<16x32xbf16> to vector<16x8xbf16>
    %169 = vector.extract_strided_slice %109 {offsets = [0, 24], sizes = [16, 8], strides = [1, 1]} : vector<16x32xbf16> to vector<16x8xbf16>
    %cst_68 = arith.constant dense<0.000000e+00> : vector<16x16xf32>
    %170 = tpu.matmul %168, %169, %cst_68 {dimension_numbers = #tpu.dot_dimension_numbers<[1], [1], [0], [0], [0, 0, 1, 0], [], []>} : vector<16x8xbf16>, vector<16x8xbf16>, vector<16x16xf32> -> vector<16x16xf32>
    %cst_69 = arith.constant 0.353553385 : f32
    %171 = vector.broadcast %cst_69 : f32 to vector<16x16xf32>
    %172 = arith.mulf %170, %171 : vector<16x16xf32>
    %cst_70 = arith.constant dense<0xFF800000> : vector<16xf32>
    %173 = vector.multi_reduction <maximumf>, %172, %cst_70 [1] : vector<16x16xf32> to vector<16xf32>
    %174 = vector.shape_cast %173 : vector<16xf32> to vector<16x1xf32>
    %175 = vector.broadcast %174 : vector<16x1xf32> to vector<16x16xf32>
    %176 = arith.subf %172, %175 : vector<16x16xf32>
    %177 = math.exp %176 : vector<16x16xf32>
    %cst_71 = arith.constant dense<0.000000e+00> : vector<16xf32>
    %178 = vector.multi_reduction <add>, %177, %cst_71 [1] : vector<16x16xf32> to vector<16xf32>
    %179 = vector.shape_cast %178 : vector<16xf32> to vector<16x1xf32>
    %180 = tpu.reciprocal %179 {approx = true} : vector<16x1xf32> -> vector<16x1xf32>
    %181 = vector.broadcast %180 : vector<16x1xf32> to vector<16x16xf32>
    %182 = arith.mulf %177, %181 : vector<16x16xf32>
    %183 = arith.truncf %182 : vector<16x16xf32> to vector<16x16xbf16>
    %184 = vector.extract_strided_slice %110 {offsets = [0, 24], sizes = [16, 8], strides = [1, 1]} : vector<16x32xbf16> to vector<16x8xbf16>
    %cst_72 = arith.constant dense<0.000000e+00> : vector<16x8xf32>
    %185 = tpu.matmul %183, %184, %cst_72 {dimension_numbers = #tpu.dot_dimension_numbers<[1], [0], [0], [1], [0, 0, 1, 1], [], []>} : vector<16x16xbf16>, vector<16x8xbf16>, vector<16x8xf32> -> vector<16x8xf32>
    %c16_73 = arith.constant 16 : index
    %c24_74 = arith.constant 24 : index
    %186 = vector.load %arg27[%c16_73, %c24_74] : memref<32x32xf32, #tpu.memory_space<vmem>>, vector<16x8xf32>
    tpu.vector_store %arg27[%c16_73, %c24_74], %185 {strides = array<i32>} : memref<32x32xf32, #tpu.memory_space<vmem>>, vector<16x8xf32>,
    %c0_75 = arith.constant 0 : index
    %c0_76 = arith.constant 0 : index
    %187 = vector.load %arg27[%c0_75, %c0_76] : memref<32x32xf32, #tpu.memory_space<vmem>>, vector<32x32xf32>
    %188 = arith.truncf %187 : vector<32x32xf32> to vector<32x32xbf16>
    %c0_77 = arith.constant 0 : index
    %c0_78 = arith.constant 0 : index
    %c0_79 = arith.constant 0 : index
    %189 = vector.load %arg11[%c0_77, %c0_78, %c0_79] : memref<1x32x32xbf16, #tpu.memory_space<vmem>>, vector<1x32x32xbf16>
    %190 = vector.shape_cast %189 : vector<1x32x32xbf16> to vector<32x32xbf16>
    %cst_80 = arith.constant dense<0.000000e+00> : vector<32x32xf32>
    %191 = tpu.matmul %188, %190, %cst_80 {dimension_numbers = #tpu.dot_dimension_numbers<[1], [0], [0], [1], [0, 0, 1, 1], [], []>} : vector<32x32xbf16>, vector<32x32xbf16>, vector<32x32xf32> -> vector<32x32xf32>
    %c0_81 = arith.constant 0 : index
    %c0_82 = arith.constant 0 : index
    %c0_83 = arith.constant 0 : index
    %192 = vector.load %arg12[%c0_81, %c0_82, %c0_83] : memref<1x1x32xf32, #tpu.memory_space<vmem>>, vector<1x1x32xf32>
    %193 = vector.shape_cast %192 : vector<1x1x32xf32> to vector<1x32xf32>
    %194 = vector.broadcast %193 : vector<1x32xf32> to vector<32x32xf32>
    %195 = arith.addf %191, %194 : vector<32x32xf32>
    %196 = arith.addf %3, %195 : vector<32x32xf32>
    %c0_84 = arith.constant 0 : index
    %c0_85 = arith.constant 0 : index
    %c0_86 = arith.constant 0 : index
    %197 = vector.load %arg17[%c0_84, %c0_85, %c0_86] : memref<1x1x32xf32, #tpu.memory_space<vmem>>, vector<1x1x32xf32>
    %198 = vector.shape_cast %197 : vector<1x1x32xf32> to vector<1x32xf32>
    %c0_87 = arith.constant 0 : index
    %c0_88 = arith.constant 0 : index
    %c0_89 = arith.constant 0 : index
    %199 = vector.load %arg18[%c0_87, %c0_88, %c0_89] : memref<1x1x32xf32, #tpu.memory_space<vmem>>, vector<1x1x32xf32>
    %200 = vector.shape_cast %199 : vector<1x1x32xf32> to vector<1x32xf32>
    %cst_90 = arith.constant dense<0.000000e+00> : vector<32xf32>
    %201 = vector.multi_reduction <add>, %196, %cst_90 [1] : vector<32x32xf32> to vector<32xf32>
    %202 = vector.shape_cast %201 : vector<32xf32> to vector<32x1xf32>
    %cst_91 = arith.constant 3.200000e+01 : f32
    %203 = vector.broadcast %cst_91 : f32 to vector<32x1xf32>
    %204 = arith.divf %202, %203 : vector<32x1xf32>
    %205 = vector.broadcast %204 : vector<32x1xf32> to vector<32x32xf32>
    %206 = arith.subf %196, %205 : vector<32x32xf32>
    %207 = arith.mulf %206, %206 : vector<32x32xf32>
    %cst_92 = arith.constant dense<0.000000e+00> : vector<32xf32>
    %208 = vector.multi_reduction <add>, %207, %cst_92 [1] : vector<32x32xf32> to vector<32xf32>
    %209 = vector.shape_cast %208 : vector<32xf32> to vector<32x1xf32>
    %cst_93 = arith.constant 3.200000e+01 : f32
    %210 = vector.broadcast %cst_93 : f32 to vector<32x1xf32>
    %211 = arith.divf %209, %210 : vector<32x1xf32>
    %cst_94 = arith.constant 9.99999974E-6 : f32
    %212 = vector.broadcast %cst_94 : f32 to vector<32x1xf32>
    %213 = arith.addf %211, %212 : vector<32x1xf32>
    %214 = math.rsqrt %213 : vector<32x1xf32>
    %215 = vector.broadcast %214 : vector<32x1xf32> to vector<32x32xf32>
    %216 = arith.mulf %206, %215 : vector<32x32xf32>
    %217 = vector.broadcast %198 : vector<1x32xf32> to vector<32x32xf32>
    %218 = arith.mulf %216, %217 : vector<32x32xf32>
    %219 = vector.broadcast %200 : vector<1x32xf32> to vector<32x32xf32>
    %220 = arith.addf %218, %219 : vector<32x32xf32>
    %221 = arith.truncf %220 : vector<32x32xf32> to vector<32x32xbf16>
    %c0_95 = arith.constant 0 : index
    %c0_96 = arith.constant 0 : index
    %c0_97 = arith.constant 0 : index
    %222 = vector.load %arg13[%c0_95, %c0_96, %c0_97] : memref<1x32x64xbf16, #tpu.memory_space<vmem>>, vector<1x32x64xbf16>
    %223 = vector.shape_cast %222 : vector<1x32x64xbf16> to vector<32x64xbf16>
    %cst_98 = arith.constant dense<0.000000e+00> : vector<32x64xf32>
    %224 = tpu.matmul %221, %223, %cst_98 {dimension_numbers = #tpu.dot_dimension_numbers<[1], [0], [0], [1], [0, 0, 1, 1], [], []>} : vector<32x32xbf16>, vector<32x64xbf16>, vector<32x64xf32> -> vector<32x64xf32>
    %c0_99 = arith.constant 0 : index
    %c0_100 = arith.constant 0 : index
    %c0_101 = arith.constant 0 : index
    %225 = vector.load %arg14[%c0_99, %c0_100, %c0_101] : memref<1x1x64xf32, #tpu.memory_space<vmem>>, vector<1x1x64xf32>
    %226 = vector.shape_cast %225 : vector<1x1x64xf32> to vector<1x64xf32>
    %227 = vector.broadcast %226 : vector<1x64xf32> to vector<32x64xf32>
    %228 = arith.addf %224, %227 : vector<32x64xf32>
    %cst_102 = arith.constant 5.000000e-01 : f32
    %229 = vector.broadcast %cst_102 : f32 to vector<32x64xf32>
    %230 = arith.mulf %229, %228 : vector<32x64xf32>
    %cst_103 = arith.constant 4.471500e-02 : f32
    %231 = vector.broadcast %cst_103 : f32 to vector<32x64xf32>
    %232 = arith.mulf %231, %228 : vector<32x64xf32>
    %233 = arith.mulf %232, %228 : vector<32x64xf32>
    %234 = arith.mulf %233, %228 : vector<32x64xf32>
    %235 = arith.addf %228, %234 : vector<32x64xf32>
    %cst_104 = arith.constant 0.797884583 : f32
    %236 = vector.broadcast %cst_104 : f32 to vector<32x64xf32>
    %237 = arith.mulf %236, %235 : vector<32x64xf32>
    %238 = math.tanh %237 : vector<32x64xf32>
    %cst_105 = arith.constant 1.000000e+00 : f32
    %239 = vector.broadcast %cst_105 : f32 to vector<32x64xf32>
    %240 = arith.addf %239, %238 : vector<32x64xf32>
    %241 = arith.mulf %230, %240 : vector<32x64xf32>
    %242 = arith.truncf %241 : vector<32x64xf32> to vector<32x64xbf16>
    %c0_106 = arith.constant 0 : index
    %c0_107 = arith.constant 0 : index
    %c0_108 = arith.constant 0 : index
    %243 = vector.load %arg15[%c0_106, %c0_107, %c0_108] : memref<1x64x32xbf16, #tpu.memory_space<vmem>>, vector<1x64x32xbf16>
    %244 = vector.shape_cast %243 : vector<1x64x32xbf16> to vector<64x32xbf16>
    %cst_109 = arith.constant dense<0.000000e+00> : vector<32x32xf32>
    %245 = tpu.matmul %242, %244, %cst_109 {dimension_numbers = #tpu.dot_dimension_numbers<[1], [0], [0], [1], [0, 0, 1, 1], [], []>} : vector<32x64xbf16>, vector<64x32xbf16>, vector<32x32xf32> -> vector<32x32xf32>
    %c0_110 = arith.constant 0 : index
    %c0_111 = arith.constant 0 : index
    %c0_112 = arith.constant 0 : index
    %246 = vector.load %arg16[%c0_110, %c0_111, %c0_112] : memref<1x1x32xf32, #tpu.memory_space<vmem>>, vector<1x1x32xf32>
    %247 = vector.shape_cast %246 : vector<1x1x32xf32> to vector<1x32xf32>
    %248 = vector.broadcast %247 : vector<1x32xf32> to vector<32x32xf32>
    %249 = arith.addf %245, %248 : vector<32x32xf32>
    %250 = arith.addf %220, %249 : vector<32x32xf32>
    %c0_113 = arith.constant 0 : index
    %c0_114 = arith.constant 0 : index
    %c0_115 = arith.constant 0 : index
    %251 = vector.load %arg19[%c0_113, %c0_114, %c0_115] : memref<1x1x32xf32, #tpu.memory_space<vmem>>, vector<1x1x32xf32>
    %252 = vector.shape_cast %251 : vector<1x1x32xf32> to vector<1x32xf32>
    %c0_116 = arith.constant 0 : index
    %c0_117 = arith.constant 0 : index
    %c0_118 = arith.constant 0 : index
    %253 = vector.load %arg20[%c0_116, %c0_117, %c0_118] : memref<1x1x32xf32, #tpu.memory_space<vmem>>, vector<1x1x32xf32>
    %254 = vector.shape_cast %253 : vector<1x1x32xf32> to vector<1x32xf32>
    %cst_119 = arith.constant dense<0.000000e+00> : vector<32xf32>
    %255 = vector.multi_reduction <add>, %250, %cst_119 [1] : vector<32x32xf32> to vector<32xf32>
    %256 = vector.shape_cast %255 : vector<32xf32> to vector<32x1xf32>
    %cst_120 = arith.constant 3.200000e+01 : f32
    %257 = vector.broadcast %cst_120 : f32 to vector<32x1xf32>
    %258 = arith.divf %256, %257 : vector<32x1xf32>
    %259 = vector.broadcast %258 : vector<32x1xf32> to vector<32x32xf32>
    %260 = arith.subf %250, %259 : vector<32x32xf32>
    %261 = arith.mulf %260, %260 : vector<32x32xf32>
    %cst_121 = arith.constant dense<0.000000e+00> : vector<32xf32>
    %262 = vector.multi_reduction <add>, %261, %cst_121 [1] : vector<32x32xf32> to vector<32xf32>
    %263 = vector.shape_cast %262 : vector<32xf32> to vector<32x1xf32>
    %cst_122 = arith.constant 3.200000e+01 : f32
    %264 = vector.broadcast %cst_122 : f32 to vector<32x1xf32>
    %265 = arith.divf %263, %264 : vector<32x1xf32>
    %cst_123 = arith.constant 9.99999974E-6 : f32
    %266 = vector.broadcast %cst_123 : f32 to vector<32x1xf32>
    %267 = arith.addf %265, %266 : vector<32x1xf32>
    %268 = math.rsqrt %267 : vector<32x1xf32>
    %269 = vector.broadcast %268 : vector<32x1xf32> to vector<32x32xf32>
    %270 = arith.mulf %260, %269 : vector<32x32xf32>
    %271 = vector.broadcast %252 : vector<1x32xf32> to vector<32x32xf32>
    %272 = arith.mulf %270, %271 : vector<32x32xf32>
    %273 = vector.broadcast %254 : vector<1x32xf32> to vector<32x32xf32>
    %274 = arith.addf %272, %273 : vector<32x32xf32>
    %c0_124 = arith.constant 0 : index
    %c0_125 = arith.constant 0 : index
    %275 = vector.load %arg26[%c0_124, %c0_125] : memref<32x32xf32, #tpu.memory_space<vmem>>, vector<32x32xf32>
    tpu.vector_store %arg26[%c0_124, %c0_125], %274 {strides = array<i32>} : memref<32x32xf32, #tpu.memory_space<vmem>>, vector<32x32xf32>,
    %c1_i32 = arith.constant 1 : i32
    %276 = arith.cmpi eq, %arg1, %c1_i32 : i32
    %277 = arith.extui %276 : i1 to i32
    %c0_i32_126 = arith.constant 0 : i32
    %278 = arith.cmpi ne, %277, %c0_i32_126 : i32
    scf.if %278 {
      %c0_127 = arith.constant 0 : index
      %c0_128 = arith.constant 0 : index
      %279 = vector.load %arg21[%c0_127, %c0_128] : memref<1x32xf32, #tpu.memory_space<vmem>>, vector<1x32xf32>
      %c0_129 = arith.constant 0 : index
      %c0_130 = arith.constant 0 : index
      %280 = vector.load %arg22[%c0_129, %c0_130] : memref<1x32xf32, #tpu.memory_space<vmem>>, vector<1x32xf32>
      %cst_131 = arith.constant dense<0.000000e+00> : vector<32xf32>
      %281 = vector.multi_reduction <add>, %274, %cst_131 [1] : vector<32x32xf32> to vector<32xf32>
      %282 = vector.shape_cast %281 : vector<32xf32> to vector<32x1xf32>
      %cst_132 = arith.constant 3.200000e+01 : f32
      %283 = vector.broadcast %cst_132 : f32 to vector<32x1xf32>
      %284 = arith.divf %282, %283 : vector<32x1xf32>
      %285 = vector.broadcast %284 : vector<32x1xf32> to vector<32x32xf32>
      %286 = arith.subf %274, %285 : vector<32x32xf32>
      %287 = arith.mulf %286, %286 : vector<32x32xf32>
      %cst_133 = arith.constant dense<0.000000e+00> : vector<32xf32>
      %288 = vector.multi_reduction <add>, %287, %cst_133 [1] : vector<32x32xf32> to vector<32xf32>
      %289 = vector.shape_cast %288 : vector<32xf32> to vector<32x1xf32>
      %cst_134 = arith.constant 3.200000e+01 : f32
      %290 = vector.broadcast %cst_134 : f32 to vector<32x1xf32>
      %291 = arith.divf %289, %290 : vector<32x1xf32>
      %cst_135 = arith.constant 9.99999974E-6 : f32
      %292 = vector.broadcast %cst_135 : f32 to vector<32x1xf32>
      %293 = arith.addf %291, %292 : vector<32x1xf32>
      %294 = math.rsqrt %293 : vector<32x1xf32>
      %295 = vector.broadcast %294 : vector<32x1xf32> to vector<32x32xf32>
      %296 = arith.mulf %286, %295 : vector<32x32xf32>
      %297 = vector.broadcast %279 : vector<1x32xf32> to vector<32x32xf32>
      %298 = arith.mulf %296, %297 : vector<32x32xf32>
      %299 = vector.broadcast %280 : vector<1x32xf32> to vector<32x32xf32>
      %300 = arith.addf %298, %299 : vector<32x32xf32>
      %301 = arith.truncf %300 : vector<32x32xf32> to vector<32x32xbf16>
      %c0_136 = arith.constant 0 : index
      %c0_137 = arith.constant 0 : index
      %302 = vector.load %arg23[%c0_136, %c0_137] : memref<32x8xbf16, #tpu.memory_space<vmem>>, vector<32x8xbf16>
      %cst_138 = arith.constant dense<0.000000e+00> : vector<32x8xf32>
      %303 = tpu.matmul %301, %302, %cst_138 {dimension_numbers = #tpu.dot_dimension_numbers<[1], [0], [0], [1], [0, 0, 1, 1], [], []>} : vector<32x32xbf16>, vector<32x8xbf16>, vector<32x8xf32> -> vector<32x8xf32>
      %c0_139 = arith.constant 0 : index
      %c0_140 = arith.constant 0 : index
      %304 = vector.load %arg24[%c0_139, %c0_140] : memref<1x8xf32, #tpu.memory_space<vmem>>, vector<1x8xf32>
      %305 = vector.broadcast %304 : vector<1x8xf32> to vector<32x8xf32>
      %306 = arith.addf %303, %305 : vector<32x8xf32>
      %cst_141 = arith.constant -2.000000e-02 : f32
      %cst_142 = arith.constant 2.000000e-02 : f32
      %307 = vector.broadcast %cst_141 : f32 to vector<32x8xf32>
      %308 = arith.maximumf %307, %306 : vector<32x8xf32>
      %309 = vector.broadcast %cst_142 : f32 to vector<32x8xf32>
      %310 = arith.minimumf %309, %308 : vector<32x8xf32>
      %c0_143 = arith.constant 0 : index
      %c0_144 = arith.constant 0 : index
      %311 = vector.load %arg25[%c0_143, %c0_144] : memref<32x8xf32, #tpu.memory_space<vmem>>, vector<32x8xf32>
      tpu.vector_store %arg25[%c0_143, %c0_144], %310 {strides = array<i32>} : memref<32x8xf32, #tpu.memory_space<vmem>>, vector<32x8xf32>,
    } else {
    }
    return
  }
  func.func @transform_0(%arg0: i32, %arg1: i32) -> (i32, i32) {
    %c0_i32 = arith.constant 0 : i32
    %c0_i32_0 = arith.constant 0 : i32
    return %arg0, %c0_i32 : i32, i32
  }
  func.func @transform_1(%arg0: i32, %arg1: i32) -> (i32, i32) {
    %c0_i32 = arith.constant 0 : i32
    %c0_i32_0 = arith.constant 0 : i32
    %c0_i32_1 = arith.constant 0 : i32
    return %c0_i32, %c0_i32_0 : i32, i32
  }
  func.func @transform_2(%arg0: i32, %arg1: i32) -> (i32, i32) {
    %c0_i32 = arith.constant 0 : i32
    %c0_i32_0 = arith.constant 0 : i32
    %c0_i32_1 = arith.constant 0 : i32
    return %c0_i32, %c0_i32_0 : i32, i32
  }
  func.func @transform_3(%arg0: i32, %arg1: i32) -> (i32, i32, i32) {
    %c0_i32 = arith.constant 0 : i32
    %c0_i32_0 = arith.constant 0 : i32
    %c0_i32_1 = arith.constant 0 : i32
    return %arg1, %c0_i32, %c0_i32_0 : i32, i32, i32
  }
  func.func @transform_4(%arg0: i32, %arg1: i32) -> (i32, i32, i32) {
    %c0_i32 = arith.constant 0 : i32
    %c0_i32_0 = arith.constant 0 : i32
    %c0_i32_1 = arith.constant 0 : i32
    return %arg1, %c0_i32, %c0_i32_0 : i32, i32, i32
  }
  func.func @transform_5(%arg0: i32, %arg1: i32) -> (i32, i32, i32) {
    %c0_i32 = arith.constant 0 : i32
    %c0_i32_0 = arith.constant 0 : i32
    %c0_i32_1 = arith.constant 0 : i32
    return %arg1, %c0_i32, %c0_i32_0 : i32, i32, i32
  }
  func.func @transform_6(%arg0: i32, %arg1: i32) -> (i32, i32, i32) {
    %c0_i32 = arith.constant 0 : i32
    %c0_i32_0 = arith.constant 0 : i32
    %c0_i32_1 = arith.constant 0 : i32
    return %arg1, %c0_i32, %c0_i32_0 : i32, i32, i32
  }
  func.func @transform_7(%arg0: i32, %arg1: i32) -> (i32, i32, i32) {
    %c0_i32 = arith.constant 0 : i32
    %c0_i32_0 = arith.constant 0 : i32
    %c0_i32_1 = arith.constant 0 : i32
    return %arg1, %c0_i32, %c0_i32_0 : i32, i32, i32
  }
  func.func @transform_8(%arg0: i32, %arg1: i32) -> (i32, i32, i32) {
    %c0_i32 = arith.constant 0 : i32
    %c0_i32_0 = arith.constant 0 : i32
    %c0_i32_1 = arith.constant 0 : i32
    return %arg1, %c0_i32, %c0_i32_0 : i32, i32, i32
  }
  func.func @transform_9(%arg0: i32, %arg1: i32) -> (i32, i32, i32) {
    %c0_i32 = arith.constant 0 : i32
    %c0_i32_0 = arith.constant 0 : i32
    %c0_i32_1 = arith.constant 0 : i32
    return %arg1, %c0_i32, %c0_i32_0 : i32, i32, i32
  }
  func.func @transform_10(%arg0: i32, %arg1: i32) -> (i32, i32, i32) {
    %c0_i32 = arith.constant 0 : i32
    %c0_i32_0 = arith.constant 0 : i32
    %c0_i32_1 = arith.constant 0 : i32
    return %arg1, %c0_i32, %c0_i32_0 : i32, i32, i32
  }
  func.func @transform_11(%arg0: i32, %arg1: i32) -> (i32, i32, i32) {
    %c0_i32 = arith.constant 0 : i32
    %c0_i32_0 = arith.constant 0 : i32
    %c0_i32_1 = arith.constant 0 : i32
    return %arg1, %c0_i32, %c0_i32_0 : i32, i32, i32
  }
  func.func @transform_12(%arg0: i32, %arg1: i32) -> (i32, i32, i32) {
    %c0_i32 = arith.constant 0 : i32
    %c0_i32_0 = arith.constant 0 : i32
    %c0_i32_1 = arith.constant 0 : i32
    return %arg1, %c0_i32, %c0_i32_0 : i32, i32, i32
  }
  func.func @transform_13(%arg0: i32, %arg1: i32) -> (i32, i32, i32) {
    %c0_i32 = arith.constant 0 : i32
    %c0_i32_0 = arith.constant 0 : i32
    %c0_i32_1 = arith.constant 0 : i32
    return %arg1, %c0_i32, %c0_i32_0 : i32, i32, i32
  }
  func.func @transform_14(%arg0: i32, %arg1: i32) -> (i32, i32, i32) {
    %c0_i32 = arith.constant 0 : i32
    %c0_i32_0 = arith.constant 0 : i32
    %c0_i32_1 = arith.constant 0 : i32
    return %arg1, %c0_i32, %c0_i32_0 : i32, i32, i32
  }
  func.func @transform_15(%arg0: i32, %arg1: i32) -> (i32, i32, i32) {
    %c0_i32 = arith.constant 0 : i32
    %c0_i32_0 = arith.constant 0 : i32
    %c0_i32_1 = arith.constant 0 : i32
    return %arg1, %c0_i32, %c0_i32_0 : i32, i32, i32
  }
  func.func @transform_16(%arg0: i32, %arg1: i32) -> (i32, i32, i32) {
    %c0_i32 = arith.constant 0 : i32
    %c0_i32_0 = arith.constant 0 : i32
    %c0_i32_1 = arith.constant 0 : i32
    return %arg1, %c0_i32, %c0_i32_0 : i32, i32, i32
  }
  func.func @transform_17(%arg0: i32, %arg1: i32) -> (i32, i32, i32) {
    %c0_i32 = arith.constant 0 : i32
    %c0_i32_0 = arith.constant 0 : i32
    %c0_i32_1 = arith.constant 0 : i32
    return %arg1, %c0_i32, %c0_i32_0 : i32, i32, i32
  }
  func.func @transform_18(%arg0: i32, %arg1: i32) -> (i32, i32, i32) {
    %c0_i32 = arith.constant 0 : i32
    %c0_i32_0 = arith.constant 0 : i32
    %c0_i32_1 = arith.constant 0 : i32
    return %arg1, %c0_i32, %c0_i32_0 : i32, i32, i32
  }
  func.func @transform_19(%arg0: i32, %arg1: i32) -> (i32, i32) {
    %c0_i32 = arith.constant 0 : i32
    %c0_i32_0 = arith.constant 0 : i32
    %c0_i32_1 = arith.constant 0 : i32
    return %c0_i32, %c0_i32_0 : i32, i32
  }
  func.func @transform_20(%arg0: i32, %arg1: i32) -> (i32, i32) {
    %c0_i32 = arith.constant 0 : i32
    %c0_i32_0 = arith.constant 0 : i32
    %c0_i32_1 = arith.constant 0 : i32
    return %c0_i32, %c0_i32_0 : i32, i32
  }
  func.func @transform_21(%arg0: i32, %arg1: i32) -> (i32, i32) {
    %c0_i32 = arith.constant 0 : i32
    %c0_i32_0 = arith.constant 0 : i32
    %c0_i32_1 = arith.constant 0 : i32
    return %c0_i32, %c0_i32_0 : i32, i32
  }
  func.func @transform_22(%arg0: i32, %arg1: i32) -> (i32, i32) {
    %c0_i32 = arith.constant 0 : i32
    %c0_i32_0 = arith.constant 0 : i32
    %c0_i32_1 = arith.constant 0 : i32
    return %c0_i32, %c0_i32_0 : i32, i32
  }
  func.func @transform_23(%arg0: i32, %arg1: i32) -> (i32, i32) {
    %c0_i32 = arith.constant 0 : i32
    %c0_i32_0 = arith.constant 0 : i32
    return %arg0, %c0_i32 : i32, i32
  }
}

</mosaic_0001>

<llo_original>
// kernel: tpu_custom_call.1
$region0: #{tpu_custom_call.1}
  #allocation0 [shape = 'u32[]', space=smem, size = 0x4, offset = 0x4, fixed_abs, tag = 'smem constant byte address 0x4 - core index']
  #allocation1 [shape = 'u32[144,128]{1,0:T(1,128)}', space=vmem, size = 0x12000, scoped, tag = 'internal scratch']
  #allocation2 [shape = 'f32[32,32]{1,0:T(8,128)}', space=vmem, size = 0x4000, scoped, tag = 'scratch operand']
  #allocation3 [shape = 'f32[32,32]{1,0:T(8,128)}', space=vmem, size = 0x4000, scoped, tag = 'scratch operand']
  %s0 = inlined_call_operand.vmem [shape: bf16[32,24], index: 0, kind: input, shape index: {}]
  %s1 = inlined_call_operand.vmem [shape: f32[32,32], index: 1, kind: input, shape index: {}]
  %s2 = inlined_call_operand.hbm [shape: bf16[24,32], index: 2, kind: input, shape index: {}]
  %s3 = inlined_call_operand.vmem [shape: bf16[2,32,32], index: 3, kind: input, shape index: {}]
  %s4 = inlined_call_operand.vmem [shape: f32[2,1,32], index: 4, kind: input, shape index: {}]
  %s5 = inlined_call_operand.vmem [shape: bf16[2,32,32], index: 5, kind: input, shape index: {}]
  %s6 = inlined_call_operand.hbm [shape: f32[2,1,32], index: 6, kind: input, shape index: {}]
  %s7 = inlined_call_operand.vmem [shape: bf16[2,32,32], index: 7, kind: input, shape index: {}]
  %s8 = inlined_call_operand.vmem [shape: f32[2,1,32], index: 8, kind: input, shape index: {}]
  %s9 = inlined_call_operand.hbm [shape: bf16[2,32,32], index: 9, kind: input, shape index: {}]
  %s10 = inlined_call_operand.vmem [shape: f32[2,1,32], index: 10, kind: input, shape index: {}]
  %s11 = inlined_call_operand.hbm [shape: bf16[2,32,64], index: 11, kind: input, shape index: {}]
  %s12 = inlined_call_operand.vmem [shape: f32[2,1,64], index: 12, kind: input, shape index: {}]
  %s13 = inlined_call_operand.vmem [shape: bf16[2,64,32], index: 13, kind: input, shape index: {}]
  %s14 = inlined_call_operand.vmem [shape: f32[2,1,32], index: 14, kind: input, shape index: {}]
  %s15 = inlined_call_operand.vmem [shape: f32[2,1,32], index: 15, kind: input, shape index: {}]
  %s16 = inlined_call_operand.vmem [shape: f32[2,1,32], index: 16, kind: input, shape index: {}]
  %s17 = inlined_call_operand.vmem [shape: f32[2,1,32], index: 17, kind: input, shape index: {}]
  %s18 = inlined_call_operand.vmem [shape: f32[2,1,32], index: 18, kind: input, shape index: {}]
  %s19 = inlined_call_operand.vmem [shape: f32[1,32], index: 19, kind: input, shape index: {}]
  %s20 = inlined_call_operand.vmem [shape: f32[1,32], index: 20, kind: input, shape index: {}]
  %s21 = inlined_call_operand.vmem [shape: bf16[32,8], index: 21, kind: input, shape index: {}]
  %s22 = inlined_call_operand.vmem [shape: f32[1,8], index: 22, kind: input, shape index: {}]
  %s23 = inlined_call_operand.vmem [shape: f32[32,8], index: 23, kind: output, shape index: {}]
  %s24 = sld [smem:[#allocation0]]
  $region149: #{tpu_custom_call.1} parent=0
    _
  %s26 = ssub.s32 1, %s24
  %s27 = scalar_select 0, %s26, %s24
  $region1: #{tpu_custom_call.1} parent=0
    #allocation4 [shape = 'u8[6144]{0}', space=vmem, size = 0x1800, scoped, tag = 'input window, operand 2, single buffered']
    #allocation5 [shape = 's32[2]{0}', space=sflag, size = 0x8, scoped, tag = 'scoped memory for tpu_custom_call.1']
    #allocation6 [shape = 'u8[1024]{0}', space=vmem, size = 0x400, scoped, tag = 'input window, operand 6']
    #allocation7 [shape = 's32[2]{0}', space=sflag, size = 0x8, scoped, tag = 'scoped memory for tpu_custom_call.1']
    #allocation8 [shape = 'u8[16384]{0}', space=vmem, size = 0x4000, scoped, tag = 'input window, operand 9']
    #allocation9 [shape = 'u8[16384]{0}', space=vmem, size = 0x4000, scoped, tag = 'input window, operand 11']
    #allocation10 [shape = 's32[2]{0}', space=sflag, size = 0x8, scoped, tag = 'scoped memory for tpu_custom_call.1']
    %28 = vsyncpa [#allocation5], 0
    %29 = vsyncpa [#allocation7], 0
    %s30 = scalar_lea.sflag [#allocation7], 1
    %31 = vsyncpa %s30, 0
    %32 = vsyncpa [#allocation10], 0
    %s33 = scalar_lea.sflag [#allocation10], 1
    %34 = vsyncpa %s33, 0
    loop: start=0, step=1, limit=4
    $region2: #{tpu_custom_call.1} parent=1 // loop_pre_header
      _
    $region3: #{tpu_custom_call.1} parent=1 // loop_header
      %s36 = sphi 0, %s40
      %p37 = scmp.ge.s32.totalorder %s36, 4
      %s43 = sphi 0, %s55
      %s44 = sphi 0, %s51
      %s45 = sphi 0, %s43
      %s46 = sphi 0, %s44
      %s47 = sphi 0, %s45
      %s48 = sphi 0, %s46
      %s58 = sphi 0, %s60
      %s61 = sphi 0, %s58
      %s62 = sphi 0, %s61
      %s78 = sphi 0, %s62
      %s82 = sphi 0, %s82
      %s84 = sphi 0, %s82
      %s85 = sphi 0, %s84
      %s99 = sphi 0, %s85
      %s103 = sphi 0, %s103
      %s105 = sphi 0, %s103
      %s106 = sphi 0, %s105
      %s120 = sphi 0, %s106
      %s126 = sphi 0, %s128
      %s129 = sphi 0, %s126
      %s130 = sphi 0, %s129
      %s146 = sphi 0, %s130
      %s152 = sphi 0, %s154
      %s155 = sphi 0, %s152
      %s156 = sphi 0, %s155
      %s172 = sphi 0, %s156
      %s178 = sphi 0, %s180
      %s181 = sphi 0, %s178
      %s182 = sphi 0, %s181
      %s198 = sphi 0, %s182
      %s204 = sphi 0, %s206
      %s207 = sphi 0, %s204
      %s208 = sphi 0, %s207
      %s224 = sphi 0, %s208
      %s230 = sphi 0, %s232
      %s233 = sphi 0, %s230
      %s234 = sphi 0, %s233
      %s250 = sphi 0, %s234
      %s256 = sphi 0, %s258
      %s259 = sphi 0, %s256
      %s260 = sphi 0, %s259
      %s276 = sphi 0, %s260
      %s282 = sphi 0, %s284
      %s285 = sphi 0, %s282
      %s286 = sphi 0, %s285
      %s302 = sphi 0, %s286
      %s308 = sphi 0, %s310
      %s311 = sphi 0, %s308
      %s312 = sphi 0, %s311
      %s328 = sphi 0, %s312
      %s334 = sphi 0, %s336
      %s337 = sphi 0, %s334
      %s338 = sphi 0, %s337
      %s354 = sphi 0, %s338
      %s360 = sphi 0, %s362
      %s363 = sphi 0, %s360
      %s364 = sphi 0, %s363
      %s380 = sphi 0, %s364
      %s386 = sphi 0, %s388
      %s389 = sphi 0, %s386
      %s390 = sphi 0, %s389
      %s406 = sphi 0, %s390
      %s412 = sphi 0, %s414
      %s415 = sphi 0, %s412
      %s416 = sphi 0, %s415
      %s432 = sphi 0, %s416
      %s438 = sphi 0, %s440
      %s441 = sphi 0, %s438
      %s442 = sphi 0, %s441
      %s458 = sphi 0, %s442
      %s464 = sphi 0, %s466
      %s467 = sphi 0, %s464
      %s468 = sphi 0, %s467
      %s484 = sphi 0, %s468
      %s490 = sphi 0, %s492
      %s493 = sphi 0, %s490
      %s494 = sphi 0, %s493
      %s510 = sphi 0, %s494
      %s516 = sphi 0, %s518
      %s519 = sphi 0, %s516
      %s520 = sphi 0, %s519
      %s536 = sphi 0, %s520
      %s540 = sphi 0, %s540
      %s542 = sphi 0, %s540
      %s543 = sphi 0, %s542
      %s557 = sphi 0, %s543
      %s561 = sphi 0, %s561
      %s563 = sphi 0, %s561
      %s564 = sphi 0, %s563
      %s578 = sphi 0, %s564
      %s582 = sphi 0, %s582
      %s584 = sphi 0, %s582
      %s585 = sphi 0, %s584
      %s599 = sphi 0, %s585
      %s603 = sphi 0, %s603
      %s605 = sphi 0, %s603
      %s606 = sphi 0, %s605
      %s620 = sphi 0, %s606
      %s626 = sphi 0, %s628
      %s629 = sphi 0, %s626
      %s630 = sphi 0, %s629
      %s646 = sphi 0, %s630
    $region4: #{tpu_custom_call.1} parent=1 // loop_header_branch
      %39 = sbr.rel (%p37) target = $region8
    $region5: #{tpu_custom_call.1} parent=1 // loop_body
      %s41 = ssub.s32 %s36, 1
      %s42 = ssub.s32 %s36, 2
      %s49 = sadd.s32 1, %s44
      %p50 = scmp.ge.s32.totalorder %s49, 2
      %s51 = scalar_select %p50, 0, %s49
      %s52 = sadd.s32 1, %s43
      %s53 = scalar_select %p50, %s52, %s43
      %p54 = scmp.ge.s32.totalorder %s53, 1
      %s55 = scalar_select %p54, 0, %s53
      %s56 = ssub.s32 %s43, %s55
      %p57 = scmp.eq.s32.totalorder %s56, 0
      %s59 = sadd.s32 %s58, 1
      %s60 = scalar_select %p57, %s58, %s59
      %p63 = pneg %p57
      %p64 = scmp.eq.s32.totalorder %s36, 1
      %p65 = por %p63, %p64
      %p66 = scmp.ne.s32.totalorder %s58, %s61
      %p67 = scmp.eq.s32.totalorder %s36, 0
      %p68 = por %p66, %p67
      %p69 = scmp.ne.s32.totalorder %s58, %s61
      %p70 = scmp.eq.s32.totalorder %s41, 1
      %p71 = por %p69, %p70
      %p72 = scmp.ne.s32.totalorder %s61, %s62
      %p73 = scmp.eq.s32.totalorder %s41, 0
      %p74 = por %p72, %p73
      %p75 = scmp.ne.s32.totalorder %s61, %s62
      %p76 = scmp.eq.s32.totalorder %s42, 1
      %p77 = por %p75, %p76
      %p79 = scmp.ne.s32.totalorder %s62, %s78
      %p80 = scmp.eq.s32.totalorder %s42, 0
      %p81 = por %p79, %p80
      %s83 = sadd.s32 %s82, 1
      %p86 = scmp.eq.s32.totalorder %s36, 1
      %p87 = scmp.ne.s32.totalorder %s82, %s84
      %p88 = scmp.eq.s32.totalorder %s36, 0
      %p89 = por %p87, %p88
      %p90 = scmp.ne.s32.totalorder %s82, %s84
      %p91 = scmp.eq.s32.totalorder %s41, 1
      %p92 = por %p90, %p91
      %p93 = scmp.ne.s32.totalorder %s84, %s85
      %p94 = scmp.eq.s32.totalorder %s41, 0
      %p95 = por %p93, %p94
      %p96 = scmp.ne.s32.totalorder %s84, %s85
      %p97 = scmp.eq.s32.totalorder %s42, 1
      %p98 = por %p96, %p97
      %p100 = scmp.ne.s32.totalorder %s85, %s99
      %p101 = scmp.eq.s32.totalorder %s42, 0
      %p102 = por %p100, %p101
      %s104 = sadd.s32 %s103, 1
      %p107 = scmp.eq.s32.totalorder %s36, 1
      %p108 = scmp.ne.s32.totalorder %s103, %s105
      %p109 = scmp.eq.s32.totalorder %s36, 0
      %p110 = por %p108, %p109
      %p111 = scmp.ne.s32.totalorder %s103, %s105
      %p112 = scmp.eq.s32.totalorder %s41, 1
      %p113 = por %p111, %p112
      %p114 = scmp.ne.s32.totalorder %s105, %s106
      %p115 = scmp.eq.s32.totalorder %s41, 0
      %p116 = por %p114, %p115
      %p117 = scmp.ne.s32.totalorder %s105, %s106
      %p118 = scmp.eq.s32.totalorder %s42, 1
      %p119 = por %p117, %p118
      %p121 = scmp.ne.s32.totalorder %s106, %s120
      %p122 = scmp.eq.s32.totalorder %s42, 0
      %p123 = por %p121, %p122
      %s124 = ssub.s32 %s44, %s51
      %p125 = scmp.eq.s32.totalorder %s124, 0
      %s127 = sadd.s32 %s126, 1
      %s128 = scalar_select %p125, %s126, %s127
      %p131 = pneg %p125
      %p132 = scmp.eq.s32.totalorder %s36, 1
      %p133 = por %p131, %p132
      %p134 = scmp.ne.s32.totalorder %s126, %s129
      %p135 = scmp.eq.s32.totalorder %s36, 0
      %p136 = por %p134, %p135
      %p137 = scmp.ne.s32.totalorder %s126, %s129
      %p138 = scmp.eq.s32.totalorder %s41, 1
      %p139 = por %p137, %p138
      %p140 = scmp.ne.s32.totalorder %s129, %s130
      %p141 = scmp.eq.s32.totalorder %s41, 0
      %p142 = por %p140, %p141
      %p143 = scmp.ne.s32.totalorder %s129, %s130
      %p144 = scmp.eq.s32.totalorder %s42, 1
      %p145 = por %p143, %p144
      %p147 = scmp.ne.s32.totalorder %s130, %s146
      %p148 = scmp.eq.s32.totalorder %s42, 0
      %p149 = por %p147, %p148
      %s150 = ssub.s32 %s44, %s51
      %p151 = scmp.eq.s32.totalorder %s150, 0
      %s153 = sadd.s32 %s152, 1
      %s154 = scalar_select %p151, %s152, %s153
      %p157 = pneg %p151
      %p158 = scmp.eq.s32.totalorder %s36, 1
      %p159 = por %p157, %p158
      %p160 = scmp.ne.s32.totalorder %s152, %s155
      %p161 = scmp.eq.s32.totalorder %s36, 0
      %p162 = por %p160, %p161
      %p163 = scmp.ne.s32.totalorder %s152, %s155
      %p164 = scmp.eq.s32.totalorder %s41, 1
      %p165 = por %p163, %p164
      %p166 = scmp.ne.s32.totalorder %s155, %s156
      %p167 = scmp.eq.s32.totalorder %s41, 0
      %p168 = por %p166, %p167
      %p169 = scmp.ne.s32.totalorder %s155, %s156
      %p170 = scmp.eq.s32.totalorder %s42, 1
      %p171 = por %p169, %p170
      %p173 = scmp.ne.s32.totalorder %s156, %s172
      %p174 = scmp.eq.s32.totalorder %s42, 0
      %p175 = por %p173, %p174
      %s176 = ssub.s32 %s44, %s51
      %p177 = scmp.eq.s32.totalorder %s176, 0
      %s179 = sadd.s32 %s178, 1
      %s180 = scalar_select %p177, %s178, %s179
      %p183 = pneg %p177
      %p184 = scmp.eq.s32.totalorder %s36, 1
      %p185 = por %p183, %p184
      %p186 = scmp.ne.s32.totalorder %s178, %s181
      %p187 = scmp.eq.s32.totalorder %s36, 0
      %p188 = por %p186, %p187
      %p189 = scmp.ne.s32.totalorder %s178, %s181
      %p190 = scmp.eq.s32.totalorder %s41, 1
      %p191 = por %p189, %p190
      %p192 = scmp.ne.s32.totalorder %s181, %s182
      %p193 = scmp.eq.s32.totalorder %s41, 0
      %p194 = por %p192, %p193
      %p195 = scmp.ne.s32.totalorder %s181, %s182
      %p196 = scmp.eq.s32.totalorder %s42, 1
      %p197 = por %p195, %p196
      %p199 = scmp.ne.s32.totalorder %s182, %s198
      %p200 = scmp.eq.s32.totalorder %s42, 0
      %p201 = por %p199, %p200
      %s202 = ssub.s32 %s44, %s51
      %p203 = scmp.eq.s32.totalorder %s202, 0
      %s205 = sadd.s32 %s204, 1
      %s206 = scalar_select %p203, %s204, %s205
      %p209 = pneg %p203
      %p210 = scmp.eq.s32.totalorder %s36, 1
      %p211 = por %p209, %p210
      %p212 = scmp.ne.s32.totalorder %s204, %s207
      %p213 = scmp.eq.s32.totalorder %s36, 0
      %p214 = por %p212, %p213
      %p215 = scmp.ne.s32.totalorder %s204, %s207
      %p216 = scmp.eq.s32.totalorder %s41, 1
      %p217 = por %p215, %p216
      %p218 = scmp.ne.s32.totalorder %s207, %s208
      %p219 = scmp.eq.s32.totalorder %s41, 0
      %p220 = por %p218, %p219
      %p221 = scmp.ne.s32.totalorder %s207, %s208
      %p222 = scmp.eq.s32.totalorder %s42, 1
      %p223 = por %p221, %p222
      %p225 = scmp.ne.s32.totalorder %s208, %s224
      %p226 = scmp.eq.s32.totalorder %s42, 0
      %p227 = por %p225, %p226
      %s228 = ssub.s32 %s44, %s51
      %p229 = scmp.eq.s32.totalorder %s228, 0
      %s231 = sadd.s32 %s230, 1
      %s232 = scalar_select %p229, %s230, %s231
      %p235 = pneg %p229
      %p236 = scmp.eq.s32.totalorder %s36, 1
      %p237 = por %p235, %p236
      %p238 = scmp.ne.s32.totalorder %s230, %s233
      %p239 = scmp.eq.s32.totalorder %s36, 0
      %p240 = por %p238, %p239
      %p241 = scmp.ne.s32.totalorder %s230, %s233
      %p242 = scmp.eq.s32.totalorder %s41, 1
      %p243 = por %p241, %p242
      %p244 = scmp.ne.s32.totalorder %s233, %s234
      %p245 = scmp.eq.s32.totalorder %s41, 0
      %p246 = por %p244, %p245
      %p247 = scmp.ne.s32.totalorder %s233, %s234
      %p248 = scmp.eq.s32.totalorder %s42, 1
      %p249 = por %p247, %p248
      %p251 = scmp.ne.s32.totalorder %s234, %s250
      %p252 = scmp.eq.s32.totalorder %s42, 0
      %p253 = por %p251, %p252
      %s254 = ssub.s32 %s44, %s51
      %p255 = scmp.eq.s32.totalorder %s254, 0
      %s257 = sadd.s32 %s256, 1
      %s258 = scalar_select %p255, %s256, %s257
      %p261 = pneg %p255
      %p262 = scmp.eq.s32.totalorder %s36, 1
      %p263 = por %p261, %p262
      %p264 = scmp.ne.s32.totalorder %s256, %s259
      %p265 = scmp.eq.s32.totalorder %s36, 0
      %p266 = por %p264, %p265
      %p267 = scmp.ne.s32.totalorder %s256, %s259
      %p268 = scmp.eq.s32.totalorder %s41, 1
      %p269 = por %p267, %p268
      %p270 = scmp.ne.s32.totalorder %s259, %s260
      %p271 = scmp.eq.s32.totalorder %s41, 0
      %p272 = por %p270, %p271
      %p273 = scmp.ne.s32.totalorder %s259, %s260
      %p274 = scmp.eq.s32.totalorder %s42, 1
      %p275 = por %p273, %p274
      %p277 = scmp.ne.s32.totalorder %s260, %s276
      %p278 = scmp.eq.s32.totalorder %s42, 0
      %p279 = por %p277, %p278
      %s280 = ssub.s32 %s44, %s51
      %p281 = scmp.eq.s32.totalorder %s280, 0
      %s283 = sadd.s32 %s282, 1
      %s284 = scalar_select %p281, %s282, %s283
      %p287 = pneg %p281
      %p288 = scmp.eq.s32.totalorder %s36, 1
      %p289 = por %p287, %p288
      %p290 = scmp.ne.s32.totalorder %s282, %s285
      %p291 = scmp.eq.s32.totalorder %s36, 0
      %p292 = por %p290, %p291
      %p293 = scmp.ne.s32.totalorder %s282, %s285
      %p294 = scmp.eq.s32.totalorder %s41, 1
      %p295 = por %p293, %p294
      %p296 = scmp.ne.s32.totalorder %s285, %s286
      %p297 = scmp.eq.s32.totalorder %s41, 0
      %p298 = por %p296, %p297
      %p299 = scmp.ne.s32.totalorder %s285, %s286
      %p300 = scmp.eq.s32.totalorder %s42, 1
      %p301 = por %p299, %p300
      %p303 = scmp.ne.s32.totalorder %s286, %s302
      %p304 = scmp.eq.s32.totalorder %s42, 0
      %p305 = por %p303, %p304
      %s306 = ssub.s32 %s44, %s51
      %p307 = scmp.eq.s32.totalorder %s306, 0
      %s309 = sadd.s32 %s308, 1
      %s310 = scalar_select %p307, %s308, %s309
      %p313 = pneg %p307
      %p314 = scmp.eq.s32.totalorder %s36, 1
      %p315 = por %p313, %p314
      %p316 = scmp.ne.s32.totalorder %s308, %s311
      %p317 = scmp.eq.s32.totalorder %s36, 0
      %p318 = por %p316, %p317
      %p319 = scmp.ne.s32.totalorder %s308, %s311
      %p320 = scmp.eq.s32.totalorder %s41, 1
      %p321 = por %p319, %p320
      %p322 = scmp.ne.s32.totalorder %s311, %s312
      %p323 = scmp.eq.s32.totalorder %s41, 0
      %p324 = por %p322, %p323
      %p325 = scmp.ne.s32.totalorder %s311, %s312
      %p326 = scmp.eq.s32.totalorder %s42, 1
      %p327 = por %p325, %p326
      %p329 = scmp.ne.s32.totalorder %s312, %s328
      %p330 = scmp.eq.s32.totalorder %s42, 0
      %p331 = por %p329, %p330
      %s332 = ssub.s32 %s44, %s51
      %p333 = scmp.eq.s32.totalorder %s332, 0
      %s335 = sadd.s32 %s334, 1
      %s336 = scalar_select %p333, %s334, %s335
      %p339 = pneg %p333
      %p340 = scmp.eq.s32.totalorder %s36, 1
      %p341 = por %p339, %p340
      %p342 = scmp.ne.s32.totalorder %s334, %s337
      %p343 = scmp.eq.s32.totalorder %s36, 0
      %p344 = por %p342, %p343
      %p345 = scmp.ne.s32.totalorder %s334, %s337
      %p346 = scmp.eq.s32.totalorder %s41, 1
      %p347 = por %p345, %p346
      %p348 = scmp.ne.s32.totalorder %s337, %s338
      %p349 = scmp.eq.s32.totalorder %s41, 0
      %p350 = por %p348, %p349
      %p351 = scmp.ne.s32.totalorder %s337, %s338
      %p352 = scmp.eq.s32.totalorder %s42, 1
      %p353 = por %p351, %p352
      %p355 = scmp.ne.s32.totalorder %s338, %s354
      %p356 = scmp.eq.s32.totalorder %s42, 0
      %p357 = por %p355, %p356
      %s358 = ssub.s32 %s44, %s51
      %p359 = scmp.eq.s32.totalorder %s358, 0
      %s361 = sadd.s32 %s360, 1
      %s362 = scalar_select %p359, %s360, %s361
      %p365 = pneg %p359
      %p366 = scmp.eq.s32.totalorder %s36, 1
      %p367 = por %p365, %p366
      %p368 = scmp.ne.s32.totalorder %s360, %s363
      %p369 = scmp.eq.s32.totalorder %s36, 0
      %p370 = por %p368, %p369
      %p371 = scmp.ne.s32.totalorder %s360, %s363
      %p372 = scmp.eq.s32.totalorder %s41, 1
      %p373 = por %p371, %p372
      %p374 = scmp.ne.s32.totalorder %s363, %s364
      %p375 = scmp.eq.s32.totalorder %s41, 0
      %p376 = por %p374, %p375
      %p377 = scmp.ne.s32.totalorder %s363, %s364
      %p378 = scmp.eq.s32.totalorder %s42, 1
      %p379 = por %p377, %p378
      %p381 = scmp.ne.s32.totalorder %s364, %s380
      %p382 = scmp.eq.s32.totalorder %s42, 0
      %p383 = por %p381, %p382
      %s384 = ssub.s32 %s44, %s51
      %p385 = scmp.eq.s32.totalorder %s384, 0
      %s387 = sadd.s32 %s386, 1
      %s388 = scalar_select %p385, %s386, %s387
      %p391 = pneg %p385
      %p392 = scmp.eq.s32.totalorder %s36, 1
      %p393 = por %p391, %p392
      %p394 = scmp.ne.s32.totalorder %s386, %s389
      %p395 = scmp.eq.s32.totalorder %s36, 0
      %p396 = por %p394, %p395
      %p397 = scmp.ne.s32.totalorder %s386, %s389
      %p398 = scmp.eq.s32.totalorder %s41, 1
      %p399 = por %p397, %p398
      %p400 = scmp.ne.s32.totalorder %s389, %s390
      %p401 = scmp.eq.s32.totalorder %s41, 0
      %p402 = por %p400, %p401
      %p403 = scmp.ne.s32.totalorder %s389, %s390
      %p404 = scmp.eq.s32.totalorder %s42, 1
      %p405 = por %p403, %p404
      %p407 = scmp.ne.s32.totalorder %s390, %s406
      %p408 = scmp.eq.s32.totalorder %s42, 0
      %p409 = por %p407, %p408
      %s410 = ssub.s32 %s44, %s51
      %p411 = scmp.eq.s32.totalorder %s410, 0
      %s413 = sadd.s32 %s412, 1
      %s414 = scalar_select %p411, %s412, %s413
      %p417 = pneg %p411
      %p418 = scmp.eq.s32.totalorder %s36, 1
      %p419 = por %p417, %p418
      %p420 = scmp.ne.s32.totalorder %s412, %s415
      %p421 = scmp.eq.s32.totalorder %s36, 0
      %p422 = por %p420, %p421
      %p423 = scmp.ne.s32.totalorder %s412, %s415
      %p424 = scmp.eq.s32.totalorder %s41, 1
      %p425 = por %p423, %p424
      %p426 = scmp.ne.s32.totalorder %s415, %s416
      %p427 = scmp.eq.s32.totalorder %s41, 0
      %p428 = por %p426, %p427
      %p429 = scmp.ne.s32.totalorder %s415, %s416
      %p430 = scmp.eq.s32.totalorder %s42, 1
      %p431 = por %p429, %p430
      %p433 = scmp.ne.s32.totalorder %s416, %s432
      %p434 = scmp.eq.s32.totalorder %s42, 0
      %p435 = por %p433, %p434
      %s436 = ssub.s32 %s44, %s51
      %p437 = scmp.eq.s32.totalorder %s436, 0
      %s439 = sadd.s32 %s438, 1
      %s440 = scalar_select %p437, %s438, %s439
      %p443 = pneg %p437
      %p444 = scmp.eq.s32.totalorder %s36, 1
      %p445 = por %p443, %p444
      %p446 = scmp.ne.s32.totalorder %s438, %s441
      %p447 = scmp.eq.s32.totalorder %s36, 0
      %p448 = por %p446, %p447
      %p449 = scmp.ne.s32.totalorder %s438, %s441
      %p450 = scmp.eq.s32.totalorder %s41, 1
      %p451 = por %p449, %p450
      %p452 = scmp.ne.s32.totalorder %s441, %s442
      %p453 = scmp.eq.s32.totalorder %s41, 0
      %p454 = por %p452, %p453
      %p455 = scmp.ne.s32.totalorder %s441, %s442
      %p456 = scmp.eq.s32.totalorder %s42, 1
      %p457 = por %p455, %p456
      %p459 = scmp.ne.s32.totalorder %s442, %s458
      %p460 = scmp.eq.s32.totalorder %s42, 0
      %p461 = por %p459, %p460
      %s462 = ssub.s32 %s44, %s51
      %p463 = scmp.eq.s32.totalorder %s462, 0
      %s465 = sadd.s32 %s464, 1
      %s466 = scalar_select %p463, %s464, %s465
      %p469 = pneg %p463
      %p470 = scmp.eq.s32.totalorder %s36, 1
      %p471 = por %p469, %p470
      %p472 = scmp.ne.s32.totalorder %s464, %s467
      %p473 = scmp.eq.s32.totalorder %s36, 0
      %p474 = por %p472, %p473
      %p475 = scmp.ne.s32.totalorder %s464, %s467
      %p476 = scmp.eq.s32.totalorder %s41, 1
      %p477 = por %p475, %p476
      %p478 = scmp.ne.s32.totalorder %s467, %s468
      %p479 = scmp.eq.s32.totalorder %s41, 0
      %p480 = por %p478, %p479
      %p481 = scmp.ne.s32.totalorder %s467, %s468
      %p482 = scmp.eq.s32.totalorder %s42, 1
      %p483 = por %p481, %p482
      %p485 = scmp.ne.s32.totalorder %s468, %s484
      %p486 = scmp.eq.s32.totalorder %s42, 0
      %p487 = por %p485, %p486
      %s488 = ssub.s32 %s44, %s51
      %p489 = scmp.eq.s32.totalorder %s488, 0
      %s491 = sadd.s32 %s490, 1
      %s492 = scalar_select %p489, %s490, %s491
      %p495 = pneg %p489
      %p496 = scmp.eq.s32.totalorder %s36, 1
      %p497 = por %p495, %p496
      %p498 = scmp.ne.s32.totalorder %s490, %s493
      %p499 = scmp.eq.s32.totalorder %s36, 0
      %p500 = por %p498, %p499
      %p501 = scmp.ne.s32.totalorder %s490, %s493
      %p502 = scmp.eq.s32.totalorder %s41, 1
      %p503 = por %p501, %p502
      %p504 = scmp.ne.s32.totalorder %s493, %s494
      %p505 = scmp.eq.s32.totalorder %s41, 0
      %p506 = por %p504, %p505
      %p507 = scmp.ne.s32.totalorder %s493, %s494
      %p508 = scmp.eq.s32.totalorder %s42, 1
      %p509 = por %p507, %p508
      %p511 = scmp.ne.s32.totalorder %s494, %s510
      %p512 = scmp.eq.s32.totalorder %s42, 0
      %p513 = por %p511, %p512
      %s514 = ssub.s32 %s44, %s51
      %p515 = scmp.eq.s32.totalorder %s514, 0
      %s517 = sadd.s32 %s516, 1
      %s518 = scalar_select %p515, %s516, %s517
      %p521 = pneg %p515
      %p522 = scmp.eq.s32.totalorder %s36, 1
      %p523 = por %p521, %p522
      %p524 = scmp.ne.s32.totalorder %s516, %s519
      %p525 = scmp.eq.s32.totalorder %s36, 0
      %p526 = por %p524, %p525
      %p527 = scmp.ne.s32.totalorder %s516, %s519
      %p528 = scmp.eq.s32.totalorder %s41, 1
      %p529 = por %p527, %p528
      %p530 = scmp.ne.s32.totalorder %s519, %s520
      %p531 = scmp.eq.s32.totalorder %s41, 0
      %p532 = por %p530, %p531
      %p533 = scmp.ne.s32.totalorder %s519, %s520
      %p534 = scmp.eq.s32.totalorder %s42, 1
      %p535 = por %p533, %p534
      %p537 = scmp.ne.s32.totalorder %s520, %s536
      %p538 = scmp.eq.s32.totalorder %s42, 0
      %p539 = por %p537, %p538
      %s541 = sadd.s32 %s540, 1
      %p544 = scmp.eq.s32.totalorder %s36, 1
      %p545 = scmp.ne.s32.totalorder %s540, %s542
      %p546 = scmp.eq.s32.totalorder %s36, 0
      %p547 = por %p545, %p546
      %p548 = scmp.ne.s32.totalorder %s540, %s542
      %p549 = scmp.eq.s32.totalorder %s41, 1
      %p550 = por %p548, %p549
      %p551 = scmp.ne.s32.totalorder %s542, %s543
      %p552 = scmp.eq.s32.totalorder %s41, 0
      %p553 = por %p551, %p552
      %p554 = scmp.ne.s32.totalorder %s542, %s543
      %p555 = scmp.eq.s32.totalorder %s42, 1
      %p556 = por %p554, %p555
      %p558 = scmp.ne.s32.totalorder %s543, %s557
      %p559 = scmp.eq.s32.totalorder %s42, 0
      %p560 = por %p558, %p559
      %s562 = sadd.s32 %s561, 1
      %p565 = scmp.eq.s32.totalorder %s36, 1
      %p566 = scmp.ne.s32.totalorder %s561, %s563
      %p567 = scmp.eq.s32.totalorder %s36, 0
      %p568 = por %p566, %p567
      %p569 = scmp.ne.s32.totalorder %s561, %s563
      %p570 = scmp.eq.s32.totalorder %s41, 1
      %p571 = por %p569, %p570
      %p572 = scmp.ne.s32.totalorder %s563, %s564
      %p573 = scmp.eq.s32.totalorder %s41, 0
      %p574 = por %p572, %p573
      %p575 = scmp.ne.s32.totalorder %s563, %s564
      %p576 = scmp.eq.s32.totalorder %s42, 1
      %p577 = por %p575, %p576
      %p579 = scmp.ne.s32.totalorder %s564, %s578
      %p580 = scmp.eq.s32.totalorder %s42, 0
      %p581 = por %p579, %p580
      %s583 = sadd.s32 %s582, 1
      %p586 = scmp.eq.s32.totalorder %s36, 1
      %p587 = scmp.ne.s32.totalorder %s582, %s584
      %p588 = scmp.eq.s32.totalorder %s36, 0
      %p589 = por %p587, %p588
      %p590 = scmp.ne.s32.totalorder %s582, %s584
      %p591 = scmp.eq.s32.totalorder %s41, 1
      %p592 = por %p590, %p591
      %p593 = scmp.ne.s32.totalorder %s584, %s585
      %p594 = scmp.eq.s32.totalorder %s41, 0
      %p595 = por %p593, %p594
      %p596 = scmp.ne.s32.totalorder %s584, %s585
      %p597 = scmp.eq.s32.totalorder %s42, 1
      %p598 = por %p596, %p597
      %p600 = scmp.ne.s32.totalorder %s585, %s599
      %p601 = scmp.eq.s32.totalorder %s42, 0
      %p602 = por %p600, %p601
      %s604 = sadd.s32 %s603, 1
      %p607 = scmp.eq.s32.totalorder %s36, 1
      %p608 = scmp.ne.s32.totalorder %s603, %s605
      %p609 = scmp.eq.s32.totalorder %s36, 0
      %p610 = por %p608, %p609
      %p611 = scmp.ne.s32.totalorder %s603, %s605
      %p612 = scmp.eq.s32.totalorder %s41, 1
      %p613 = por %p611, %p612
      %p614 = scmp.ne.s32.totalorder %s605, %s606
      %p615 = scmp.eq.s32.totalorder %s41, 0
      %p616 = por %p614, %p615
      %p617 = scmp.ne.s32.totalorder %s605, %s606
      %p618 = scmp.eq.s32.totalorder %s42, 1
      %p619 = por %p617, %p618
      %p621 = scmp.ne.s32.totalorder %s606, %s620
      %p622 = scmp.eq.s32.totalorder %s42, 0
      %p623 = por %p621, %p622
      %s624 = ssub.s32 %s43, %s55
      %p625 = scmp.eq.s32.totalorder %s624, 0
      %s627 = sadd.s32 %s626, 1
      %s628 = scalar_select %p625, %s626, %s627
      %p631 = pneg %p625
      %p632 = scmp.eq.s32.totalorder %s36, 1
      %p633 = por %p631, %p632
      %p634 = scmp.ne.s32.totalorder %s626, %s629
      %p635 = scmp.eq.s32.totalorder %s36, 0
      %p636 = por %p634, %p635
      %p637 = scmp.ne.s32.totalorder %s626, %s629
      %p638 = scmp.eq.s32.totalorder %s41, 1
      %p639 = por %p637, %p638
      %p640 = scmp.ne.s32.totalorder %s629, %s630
      %p641 = scmp.eq.s32.totalorder %s41, 0
      %p642 = por %p640, %p641
      %p643 = scmp.ne.s32.totalorder %s629, %s630
      %p644 = scmp.eq.s32.totalorder %s42, 1
      %p645 = por %p643, %p644
      %p647 = scmp.ne.s32.totalorder %s630, %s646
      %p648 = scmp.eq.s32.totalorder %s42, 0
      %p649 = por %p647, %p648
      %p650 = scmp.le.s32.totalorder 1, %s36
      %p651 = scmp.lt.s32.totalorder %s36, 3
      %p652 = pnand %p650, %p651
      %p653 = pneg %p652
      // Predicated region
      $region9: #{tpu_custom_call.1} parent=5 // pred_check
        _
      $region10: #{tpu_custom_call.1} parent=5 // pred_check_branch
        %655 = sbr.rel (%p652) target = $region12
      $region11: #{tpu_custom_call.1} parent=5 // pred_region
        %s656 = ssub.s32 %s36, 1
        // Predicated region
        $region13: #{tpu_custom_call.1} parent=11 // pred_check
          %p657 = pneg %p74
        $region14: #{tpu_custom_call.1} parent=11 // pred_check_branch
          %659 = sbr.rel (%p657) target = $region16
        $region15: #{tpu_custom_call.1} parent=11 // pred_region
          %s660 = smul.u32 4, %s45
          %p661 = scmp.lt.s32.totalorder %s660, 3
          %s662 = scalar_select %p661, %s660, 3
          %s663 = smul.addr %s662, 4
          %s664 = scalar_lea.vmem %s0, %s663
          %s665 = smul.u32 4, %s45
        $region16: #{tpu_custom_call.1} parent=11 // pred_fallthru
          _
        // Predicated region
        $region17: #{tpu_custom_call.1} parent=11 // pred_check
          %p666 = pneg %p95
        $region18: #{tpu_custom_call.1} parent=11 // pred_check_branch
          %668 = sbr.rel (%p666) target = $region20
        $region19: #{tpu_custom_call.1} parent=11 // pred_region
          _
        $region20: #{tpu_custom_call.1} parent=11 // pred_fallthru
          _
        // Predicated region
        $region21: #{tpu_custom_call.1} parent=11 // pred_check
          %p669 = pneg %p116
        $region22: #{tpu_custom_call.1} parent=11 // pred_check_branch
          %671 = sbr.rel (%p669) target = $region24
        $region23: #{tpu_custom_call.1} parent=11 // pred_region
          %s673 = ssub.s32 192, 192
          %674 = vsyncadd [#allocation5], %s673
          %s675 = sshll.u32 [#allocation4], 4
          %s676 = int_to_ptr.vmem [resolvable:$true] %s675
          %681 = dma.hbm_to_vmem [thread:$0]  %s2, 192, %s676, [#allocation5], 64, 64, 4
        $region24: #{tpu_custom_call.1} parent=11 // pred_fallthru
          _
        // Predicated region
        $region25: #{tpu_custom_call.1} parent=11 // pred_check
          %p682 = pneg %p553
        $region26: #{tpu_custom_call.1} parent=11 // pred_check_branch
          %684 = sbr.rel (%p682) target = $region28
        $region27: #{tpu_custom_call.1} parent=11 // pred_region
          _
        $region28: #{tpu_custom_call.1} parent=11 // pred_fallthru
          _
        // Predicated region
        $region29: #{tpu_custom_call.1} parent=11 // pred_check
          %p685 = pneg %p574
        $region30: #{tpu_custom_call.1} parent=11 // pred_check_branch
          %687 = sbr.rel (%p685) target = $region32
        $region31: #{tpu_custom_call.1} parent=11 // pred_region
          _
        $region32: #{tpu_custom_call.1} parent=11 // pred_fallthru
          _
        // Predicated region
        $region33: #{tpu_custom_call.1} parent=11 // pred_check
          %p688 = pneg %p595
        $region34: #{tpu_custom_call.1} parent=11 // pred_check_branch
          %690 = sbr.rel (%p688) target = $region36
        $region35: #{tpu_custom_call.1} parent=11 // pred_region
          _
        $region36: #{tpu_custom_call.1} parent=11 // pred_fallthru
          _
        // Predicated region
        $region37: #{tpu_custom_call.1} parent=11 // pred_check
          %p691 = pneg %p616
        $region38: #{tpu_custom_call.1} parent=11 // pred_check_branch
          %693 = sbr.rel (%p691) target = $region40
        $region39: #{tpu_custom_call.1} parent=11 // pred_region
          _
        $region40: #{tpu_custom_call.1} parent=11 // pred_fallthru
          _
      $region12: #{tpu_custom_call.1} parent=5 // pred_fallthru
        _
      %p694 = scmp.lt.s32.totalorder %s36, 2
      // Predicated region
      $region41: #{tpu_custom_call.1} parent=5 // pred_check
        %p695 = pneg %p694
      $region42: #{tpu_custom_call.1} parent=5 // pred_check_branch
        %697 = sbr.rel (%p695) target = $region44
      $region43: #{tpu_custom_call.1} parent=5 // pred_region
        // Predicated region
        $region45: #{tpu_custom_call.1} parent=43 // pred_check
          %p698 = pneg %p136
        $region46: #{tpu_custom_call.1} parent=43 // pred_check_branch
          %700 = sbr.rel (%p698) target = $region48
        $region47: #{tpu_custom_call.1} parent=43 // pred_region
          %p701 = scmp.lt.s32.totalorder %s44, 1
          %s702 = scalar_select %p701, %s44, 1
          %s703 = smul.addr %s702, 4
          %s704 = smul.addr %s703, 4
          %s705 = scalar_lea.vmem %s3, %s704
        $region48: #{tpu_custom_call.1} parent=43 // pred_fallthru
          _
        // Predicated region
        $region49: #{tpu_custom_call.1} parent=43 // pred_check
          %p706 = pneg %p162
        $region50: #{tpu_custom_call.1} parent=43 // pred_check_branch
          %708 = sbr.rel (%p706) target = $region52
        $region51: #{tpu_custom_call.1} parent=43 // pred_region
          %p709 = scmp.lt.s32.totalorder %s44, 1
          %s710 = scalar_select %p709, %s44, 1
          %s711 = scalar_lea.vmem %s4, %s710
        $region52: #{tpu_custom_call.1} parent=43 // pred_fallthru
          _
        // Predicated region
        $region53: #{tpu_custom_call.1} parent=43 // pred_check
          %p712 = pneg %p188
        $region54: #{tpu_custom_call.1} parent=43 // pred_check_branch
          %714 = sbr.rel (%p712) target = $region56
        $region55: #{tpu_custom_call.1} parent=43 // pred_region
          %p715 = scmp.lt.s32.totalorder %s44, 1
          %s716 = scalar_select %p715, %s44, 1
          %s717 = smul.addr %s716, 4
          %s718 = smul.addr %s717, 4
          %s719 = scalar_lea.vmem %s5, %s718
        $region56: #{tpu_custom_call.1} parent=43 // pred_fallthru
          _
        // Predicated region
        $region57: #{tpu_custom_call.1} parent=43 // pred_check
          %p720 = pneg %p214
        $region58: #{tpu_custom_call.1} parent=43 // pred_check_branch
          %722 = sbr.rel (%p720) target = $region60
        $region59: #{tpu_custom_call.1} parent=43 // pred_region
          %s723 = sand.u32 %s36, 1
          %s724 = scalar_lea.sflag [#allocation7], %s723
          %s725 = sand.u32 %s204, 1
          %s726 = scalar_lea.vmem [#allocation6], %s725
          %s728 = ssub.s32 16, 16
          %729 = vsyncadd %s724, %s728
          %s730 = smul.addr %s44, 16
          %s731 = scalar_lea.hbm %s6, %s730
          %s733 = sshll.u32 %s726, 4
          %s734 = int_to_ptr.vmem [resolvable:$true] %s733
          %736 = dma.hbm_to_vmem [thread:$0]  %s731, 16, %s734, %s724
        $region60: #{tpu_custom_call.1} parent=43 // pred_fallthru
          _
        // Predicated region
        $region61: #{tpu_custom_call.1} parent=43 // pred_check
          %p737 = pneg %p240
        $region62: #{tpu_custom_call.1} parent=43 // pred_check_branch
          %739 = sbr.rel (%p737) target = $region64
        $region63: #{tpu_custom_call.1} parent=43 // pred_region
          %p740 = scmp.lt.s32.totalorder %s44, 1
          %s741 = scalar_select %p740, %s44, 1
          %s742 = smul.addr %s741, 4
          %s743 = smul.addr %s742, 4
          %s744 = scalar_lea.vmem %s7, %s743
        $region64: #{tpu_custom_call.1} parent=43 // pred_fallthru
          _
        // Predicated region
        $region65: #{tpu_custom_call.1} parent=43 // pred_check
          %p745 = pneg %p266
        $region66: #{tpu_custom_call.1} parent=43 // pred_check_branch
          %747 = sbr.rel (%p745) target = $region68
        $region67: #{tpu_custom_call.1} parent=43 // pred_region
          %p748 = scmp.lt.s32.totalorder %s44, 1
          %s749 = scalar_select %p748, %s44, 1
          %s750 = scalar_lea.vmem %s8, %s749
        $region68: #{tpu_custom_call.1} parent=43 // pred_fallthru
          _
        // Predicated region
        $region69: #{tpu_custom_call.1} parent=43 // pred_check
          %p751 = pneg %p292
        $region70: #{tpu_custom_call.1} parent=43 // pred_check_branch
          %753 = sbr.rel (%p751) target = $region72
        $region71: #{tpu_custom_call.1} parent=43 // pred_region
          %s754 = sand.u32 %s36, 1
          %s755 = scalar_lea.sflag [#allocation7], %s754
          %s756 = sand.u32 %s282, 1
          %s757 = smul.addr %s756, 16
          %s758 = scalar_lea.vmem [#allocation8], %s757
          %s760 = ssub.s32 256, 256
          %761 = vsyncadd %s755, %s760
          %s762 = smul.addr %s44, 4
          %s763 = smul.addr %s762, 64
          %s764 = scalar_lea.hbm %s9, %s763
          %s765 = sshll.u32 %s758, 4
          %s766 = int_to_ptr.vmem [resolvable:$true] %s765
          %771 = dma.hbm_to_vmem [thread:$0]  %s764, 256, %s766, %s755, 64, 64, 4
        $region72: #{tpu_custom_call.1} parent=43 // pred_fallthru
          _
        // Predicated region
        $region73: #{tpu_custom_call.1} parent=43 // pred_check
          %p772 = pneg %p318
        $region74: #{tpu_custom_call.1} parent=43 // pred_check_branch
          %774 = sbr.rel (%p772) target = $region76
        $region75: #{tpu_custom_call.1} parent=43 // pred_region
          %p775 = scmp.lt.s32.totalorder %s44, 1
          %s776 = scalar_select %p775, %s44, 1
          %s777 = scalar_lea.vmem %s10, %s776
        $region76: #{tpu_custom_call.1} parent=43 // pred_fallthru
          _
        // Predicated region
        $region77: #{tpu_custom_call.1} parent=43 // pred_check
          %p778 = pneg %p344
        $region78: #{tpu_custom_call.1} parent=43 // pred_check_branch
          %780 = sbr.rel (%p778) target = $region80
        $region79: #{tpu_custom_call.1} parent=43 // pred_region
          %s781 = sand.u32 %s334, 1
          %s782 = scalar_lea.sflag [#allocation10], %s781
          %s783 = sand.u32 %s334, 1
          %s784 = smul.addr %s783, 16
          %s785 = scalar_lea.vmem [#allocation9], %s784
          %s787 = ssub.s32 256, 256
          %788 = vsyncadd %s782, %s787
          %s789 = smul.addr %s44, 4
          %s790 = smul.addr %s789, 64
          %s791 = scalar_lea.hbm %s11, %s790
          %s792 = sshll.u32 %s785, 4
          %s793 = int_to_ptr.vmem [resolvable:$true] %s792
          %798 = dma.hbm_to_vmem [thread:$0]  %s791, 256, %s793, %s782, 64, 64, 4
        $region80: #{tpu_custom_call.1} parent=43 // pred_fallthru
          _
        // Predicated region
        $region81: #{tpu_custom_call.1} parent=43 // pred_check
          %p799 = pneg %p370
        $region82: #{tpu_custom_call.1} parent=43 // pred_check_branch
          %801 = sbr.rel (%p799) target = $region84
        $region83: #{tpu_custom_call.1} parent=43 // pred_region
          %p802 = scmp.lt.s32.totalorder %s44, 1
          %s803 = scalar_select %p802, %s44, 1
          %s804 = scalar_lea.vmem %s12, %s803
        $region84: #{tpu_custom_call.1} parent=43 // pred_fallthru
          _
        // Predicated region
        $region85: #{tpu_custom_call.1} parent=43 // pred_check
          %p805 = pneg %p396
        $region86: #{tpu_custom_call.1} parent=43 // pred_check_branch
          %807 = sbr.rel (%p805) target = $region88
        $region87: #{tpu_custom_call.1} parent=43 // pred_region
          %p808 = scmp.lt.s32.totalorder %s44, 1
          %s809 = scalar_select %p808, %s44, 1
          %s810 = smul.addr %s809, 8
          %s811 = smul.addr %s810, 4
          %s812 = scalar_lea.vmem %s13, %s811
        $region88: #{tpu_custom_call.1} parent=43 // pred_fallthru
          _
        // Predicated region
        $region89: #{tpu_custom_call.1} parent=43 // pred_check
          %p813 = pneg %p422
        $region90: #{tpu_custom_call.1} parent=43 // pred_check_branch
          %815 = sbr.rel (%p813) target = $region92
        $region91: #{tpu_custom_call.1} parent=43 // pred_region
          %p816 = scmp.lt.s32.totalorder %s44, 1
          %s817 = scalar_select %p816, %s44, 1
          %s818 = scalar_lea.vmem %s14, %s817
        $region92: #{tpu_custom_call.1} parent=43 // pred_fallthru
          _
        // Predicated region
        $region93: #{tpu_custom_call.1} parent=43 // pred_check
          %p819 = pneg %p448
        $region94: #{tpu_custom_call.1} parent=43 // pred_check_branch
          %821 = sbr.rel (%p819) target = $region96
        $region95: #{tpu_custom_call.1} parent=43 // pred_region
          %p822 = scmp.lt.s32.totalorder %s44, 1
          %s823 = scalar_select %p822, %s44, 1
          %s824 = scalar_lea.vmem %s15, %s823
        $region96: #{tpu_custom_call.1} parent=43 // pred_fallthru
          _
        // Predicated region
        $region97: #{tpu_custom_call.1} parent=43 // pred_check
          %p825 = pneg %p474
        $region98: #{tpu_custom_call.1} parent=43 // pred_check_branch
          %827 = sbr.rel (%p825) target = $region100
        $region99: #{tpu_custom_call.1} parent=43 // pred_region
          %p828 = scmp.lt.s32.totalorder %s44, 1
          %s829 = scalar_select %p828, %s44, 1
          %s830 = scalar_lea.vmem %s16, %s829
        $region100: #{tpu_custom_call.1} parent=43 // pred_fallthru
          _
        // Predicated region
        $region101: #{tpu_custom_call.1} parent=43 // pred_check
          %p831 = pneg %p500
        $region102: #{tpu_custom_call.1} parent=43 // pred_check_branch
          %833 = sbr.rel (%p831) target = $region104
        $region103: #{tpu_custom_call.1} parent=43 // pred_region
          %p834 = scmp.lt.s32.totalorder %s44, 1
          %s835 = scalar_select %p834, %s44, 1
          %s836 = scalar_lea.vmem %s17, %s835
        $region104: #{tpu_custom_call.1} parent=43 // pred_fallthru
          _
        // Predicated region
        $region105: #{tpu_custom_call.1} parent=43 // pred_check
          %p837 = pneg %p526
        $region106: #{tpu_custom_call.1} parent=43 // pred_check_branch
          %839 = sbr.rel (%p837) target = $region108
        $region107: #{tpu_custom_call.1} parent=43 // pred_region
          %p840 = scmp.lt.s32.totalorder %s44, 1
          %s841 = scalar_select %p840, %s44, 1
          %s842 = scalar_lea.vmem %s18, %s841
        $region108: #{tpu_custom_call.1} parent=43 // pred_fallthru
          _
      $region44: #{tpu_custom_call.1} parent=5 // pred_fallthru
        _
      %p843 = scmp.le.s32.totalorder 1, %s36
      %p844 = scmp.lt.s32.totalorder %s36, 3
      %p845 = pnand %p843, %p844
      %p846 = pneg %p845
      // Predicated region
      $region109: #{tpu_custom_call.1} parent=5 // pred_check
        _
      $region110: #{tpu_custom_call.1} parent=5 // pred_check_branch
        %848 = sbr.rel (%p845) target = $region112
      $region111: #{tpu_custom_call.1} parent=5 // pred_region
        %s849 = ssub.s32 %s36, 1
        // Predicated region
        $region113: #{tpu_custom_call.1} parent=111 // pred_check
          %p850 = pneg %p116
        $region114: #{tpu_custom_call.1} parent=111 // pred_check_branch
          %852 = sbr.rel (%p850) target = $region116
        $region115: #{tpu_custom_call.1} parent=111 // pred_region
          %853 = dma.done [#allocation5], 192
        $region116: #{tpu_custom_call.1} parent=111 // pred_fallthru
          _
        %s854 = sand.u32 %s41, 1
        %s855 = scalar_lea.sflag [#allocation7], %s854
        %s856 = sand.u32 %s207, 1
        %s857 = scalar_lea.vmem [#allocation6], %s856
        // Predicated region
        $region117: #{tpu_custom_call.1} parent=111 // pred_check
          %p858 = pneg %p220
        $region118: #{tpu_custom_call.1} parent=111 // pred_check_branch
          %860 = sbr.rel (%p858) target = $region120
        $region119: #{tpu_custom_call.1} parent=111 // pred_region
          %861 = dma.done %s855, 16
        $region120: #{tpu_custom_call.1} parent=111 // pred_fallthru
          _
        %s862 = sand.u32 %s41, 1
        %s863 = scalar_lea.sflag [#allocation7], %s862
        %s864 = sand.u32 %s285, 1
        %s865 = smul.addr %s864, 16
        %s866 = scalar_lea.vmem [#allocation8], %s865
        // Predicated region
        $region121: #{tpu_custom_call.1} parent=111 // pred_check
          %p867 = pneg %p298
        $region122: #{tpu_custom_call.1} parent=111 // pred_check_branch
          %869 = sbr.rel (%p867) target = $region124
        $region123: #{tpu_custom_call.1} parent=111 // pred_region
          %870 = dma.done %s863, 256
        $region124: #{tpu_custom_call.1} parent=111 // pred_fallthru
          _
        %s871 = sand.u32 %s337, 1
        %s872 = scalar_lea.sflag [#allocation10], %s871
        %s873 = sand.u32 %s337, 1
        %s874 = smul.addr %s873, 16
        %s875 = scalar_lea.vmem [#allocation9], %s874
        // Predicated region
        $region125: #{tpu_custom_call.1} parent=111 // pred_check
          %p876 = pneg %p350
        $region126: #{tpu_custom_call.1} parent=111 // pred_check_branch
          %878 = sbr.rel (%p876) target = $region128
        $region127: #{tpu_custom_call.1} parent=111 // pred_region
          %879 = dma.done %s872, 256
        $region128: #{tpu_custom_call.1} parent=111 // pred_fallthru
          _
        %s880 = smul.u32 4, %s45
        %p881 = scmp.lt.s32.totalorder %s880, 3
        %s882 = scalar_select %p881, %s880, 3
        %s883 = smul.addr %s882, 4
        %s884 = scalar_lea.vmem %s0, %s883
        %p885 = pneg %p74
        %p886 = pneg %p71
        %p887 = pneg %p95
        %p888 = pneg %p92
        %p889 = pneg %p116
        %p890 = pneg %p113
        %p891 = scmp.lt.s32.totalorder %s46, 1
        %s892 = scalar_select %p891, %s46, 1
        %s893 = smul.addr %s892, 4
        %s894 = smul.addr %s893, 4
        %s895 = scalar_lea.vmem %s3, %s894
        %p896 = pneg %p142
        %p897 = pneg %p139
        %p898 = scmp.lt.s32.totalorder %s46, 1
        %s899 = scalar_select %p898, %s46, 1
        %s900 = scalar_lea.vmem %s4, %s899
        %p901 = pneg %p168
        %p902 = pneg %p165
        %p903 = scmp.lt.s32.totalorder %s46, 1
        %s904 = scalar_select %p903, %s46, 1
        %s905 = smul.addr %s904, 4
        %s906 = smul.addr %s905, 4
        %s907 = scalar_lea.vmem %s5, %s906
        %p908 = pneg %p194
        %p909 = pneg %p191
        %s910 = sand.u32 %s41, 1
        %s911 = scalar_lea.sflag [#allocation7], %s910
        %s912 = sand.u32 %s207, 1
        %s913 = scalar_lea.vmem [#allocation6], %s912
        %p914 = pneg %p220
        %p915 = pneg %p217
        %p916 = scmp.lt.s32.totalorder %s46, 1
        %s917 = scalar_select %p916, %s46, 1
        %s918 = smul.addr %s917, 4
        %s919 = smul.addr %s918, 4
        %s920 = scalar_lea.vmem %s7, %s919
        %p921 = pneg %p246
        %p922 = pneg %p243
        %p923 = scmp.lt.s32.totalorder %s46, 1
        %s924 = scalar_select %p923, %s46, 1
        %s925 = scalar_lea.vmem %s8, %s924
        %p926 = pneg %p272
        %p927 = pneg %p269
        %s928 = sand.u32 %s41, 1
        %s929 = scalar_lea.sflag [#allocation7], %s928
        %s930 = sand.u32 %s285, 1
        %s931 = smul.addr %s930, 16
        %s932 = scalar_lea.vmem [#allocation8], %s931
        %p933 = pneg %p298
        %p934 = pneg %p295
        %p935 = scmp.lt.s32.totalorder %s46, 1
        %s936 = scalar_select %p935, %s46, 1
        %s937 = scalar_lea.vmem %s10, %s936
        %p938 = pneg %p324
        %p939 = pneg %p321
        %s940 = sand.u32 %s337, 1
        %s941 = scalar_lea.sflag [#allocation10], %s940
        %s942 = sand.u32 %s337, 1
        %s943 = smul.addr %s942, 16
        %s944 = scalar_lea.vmem [#allocation9], %s943
        %p945 = pneg %p350
        %p946 = pneg %p347
        %p947 = scmp.lt.s32.totalorder %s46, 1
        %s948 = scalar_select %p947, %s46, 1
        %s949 = scalar_lea.vmem %s12, %s948
        %p950 = pneg %p376
        %p951 = pneg %p373
        %p952 = scmp.lt.s32.totalorder %s46, 1
        %s953 = scalar_select %p952, %s46, 1
        %s954 = smul.addr %s953, 8
        %s955 = smul.addr %s954, 4
        %s956 = scalar_lea.vmem %s13, %s955
        %p957 = pneg %p402
        %p958 = pneg %p399
        %p959 = scmp.lt.s32.totalorder %s46, 1
        %s960 = scalar_select %p959, %s46, 1
        %s961 = scalar_lea.vmem %s14, %s960
        %p962 = pneg %p428
        %p963 = pneg %p425
        %p964 = scmp.lt.s32.totalorder %s46, 1
        %s965 = scalar_select %p964, %s46, 1
        %s966 = scalar_lea.vmem %s15, %s965
        %p967 = pneg %p454
        %p968 = pneg %p451
        %p969 = scmp.lt.s32.totalorder %s46, 1
        %s970 = scalar_select %p969, %s46, 1
        %s971 = scalar_lea.vmem %s16, %s970
        %p972 = pneg %p480
        %p973 = pneg %p477
        %p974 = scmp.lt.s32.totalorder %s46, 1
        %s975 = scalar_select %p974, %s46, 1
        %s976 = scalar_lea.vmem %s17, %s975
        %p977 = pneg %p506
        %p978 = pneg %p503
        %p979 = scmp.lt.s32.totalorder %s46, 1
        %s980 = scalar_select %p979, %s46, 1
        %s981 = scalar_lea.vmem %s18, %s980
        %p982 = pneg %p532
        %p983 = pneg %p529
        %p984 = pneg %p553
        %p985 = pneg %p550
        %p986 = pneg %p574
        %p987 = pneg %p571
        %p988 = pneg %p595
        %p989 = pneg %p592
        %p990 = pneg %p616
        %p991 = pneg %p613
        %p992 = pneg %p642
        %p993 = pneg %p639
        %s994 = smul.u32 4, %s45
        %p995 = scmp.lt.s32.totalorder %s994, 3
        %s996 = scalar_select %p995, %s994, 3
        %s997 = smul.addr %s996, 8
        %s998 = scalar_lea.vmem %s23, %s997
        %s999 = smul.u32 4, %s45
        %p1000 = scmp.lt.s32.totalorder %s999, 3
        %s1001 = scalar_select %p1000, %s999, 3
        %s1002 = smul.addr %s1001, 4
        %s1003 = scalar_lea.vmem %s0, %s1002
        %s1004 = smul.u32 4, %s45
        %p1005 = scmp.lt.s32.totalorder %s46, 1
        %s1006 = scalar_select %p1005, %s46, 1
        %s1007 = smul.addr %s1006, 4
        %s1008 = smul.addr %s1007, 4
        %s1009 = scalar_lea.vmem %s3, %s1008
        %p1010 = scmp.lt.s32.totalorder %s46, 1
        %s1011 = scalar_select %p1010, %s46, 1
        %s1012 = scalar_lea.vmem %s4, %s1011
        %p1013 = scmp.lt.s32.totalorder %s46, 1
        %s1014 = scalar_select %p1013, %s46, 1
        %s1015 = smul.addr %s1014, 4
        %s1016 = smul.addr %s1015, 4
        %s1017 = scalar_lea.vmem %s5, %s1016
        %p1018 = scmp.lt.s32.totalorder %s46, 1
        %s1019 = scalar_select %p1018, %s46, 1
        %s1020 = smul.addr %s1019, 4
        %s1021 = smul.addr %s1020, 4
        %s1022 = scalar_lea.vmem %s7, %s1021
        %p1023 = scmp.lt.s32.totalorder %s46, 1
        %s1024 = scalar_select %p1023, %s46, 1
        %s1025 = scalar_lea.vmem %s8, %s1024
        %p1026 = scmp.lt.s32.totalorder %s46, 1
        %s1027 = scalar_select %p1026, %s46, 1
        %s1028 = scalar_lea.vmem %s10, %s1027
        %p1029 = scmp.lt.s32.totalorder %s46, 1
        %s1030 = scalar_select %p1029, %s46, 1
        %s1031 = scalar_lea.vmem %s12, %s1030
        %p1032 = scmp.lt.s32.totalorder %s46, 1
        %s1033 = scalar_select %p1032, %s46, 1
        %s1034 = smul.addr %s1033, 8
        %s1035 = smul.addr %s1034, 4
        %s1036 = scalar_lea.vmem %s13, %s1035
        %p1037 = scmp.lt.s32.totalorder %s46, 1
        %s1038 = scalar_select %p1037, %s46, 1
        %s1039 = scalar_lea.vmem %s14, %s1038
        %p1040 = scmp.lt.s32.totalorder %s46, 1
        %s1041 = scalar_select %p1040, %s46, 1
        %s1042 = scalar_lea.vmem %s15, %s1041
        %p1043 = scmp.lt.s32.totalorder %s46, 1
        %s1044 = scalar_select %p1043, %s46, 1
        %s1045 = scalar_lea.vmem %s16, %s1044
        %p1046 = scmp.lt.s32.totalorder %s46, 1
        %s1047 = scalar_select %p1046, %s46, 1
        %s1048 = scalar_lea.vmem %s17, %s1047
        %p1049 = scmp.lt.s32.totalorder %s46, 1
        %s1050 = scalar_select %p1049, %s46, 1
        %s1051 = scalar_lea.vmem %s18, %s1050
        %s1052 = smul.u32 4, %s45
        %p1053 = scmp.lt.s32.totalorder %s1052, 3
        %s1054 = scalar_select %p1053, %s1052, 3
        %s1055 = smul.addr %s1054, 8
        %s1056 = scalar_lea.vmem %s23, %s1055
        %s1057 = smul.u32 4, %s45
        %p1059 = scmp.eq.s32.totalorder %s46, 0
        // Predicated region
        $region129: #{tpu_custom_call.1} parent=111 // pred_check
          %p1060 = pneg %p1059
        $region130: #{tpu_custom_call.1} parent=111 // pred_check_branch
          %1062 = sbr.rel (%p1060) target = $region132
        $region131: #{tpu_custom_call.1} parent=111 // pred_region
          %v1063 = vld [vmem:[%s1003] sm:$0xf]
          %v1064 = vld [vmem:[%s1003 + $0x4] sm:$0xf]
          %v1065 = vld [vmem:[%s1003 + $0x8] sm:$0xf]
          %v1066 = vld [vmem:[%s1003 + $0xc] sm:$0xf]
          %v1067 = vld [vmem:[#allocation4] sm:$0xf]
          %v1068 = vld [vmem:[#allocation4 + $0x4] sm:$0xf]
          %v1069 = vld [vmem:[#allocation4 + $0x8] sm:$0xf]
          %v1070 = vld [vmem:[%s1] sm:$0xff]
          %v1071 = vld [vmem:[%s1 + $0x8] sm:$0xff]
          %v1072 = vld [vmem:[%s1 + $0x10] sm:$0xff]
          %v1073 = vld [vmem:[%s1 + $0x18] sm:$0xff]
          %v1078 = vunpack.c.l.b16 %v1063
          %v1079 = vunpack.c.l.b16 %v1064
          %v1080 = vunpack.c.l.b16 %v1065
          %v1081 = vunpack.c.l.b16 %v1066
          %v1082 = vpack.c.b16 %v1079, %v1078
          %v1083 = vpack.c.b16 %v1081, %v1080
          %v1087 = vunpack.c.l.b16 %v1067
          %v1088 = vunpack.c.l.b16 %v1068
          %v1089 = vunpack.c.l.b16 %v1069
          %v1090 = vpack.c.b16 %v1088, %v1087
          %v1091 = vpack.c.b16 %v1089, %v1089
          %vm1093 = vcmask 195584
          %v1095 = vsel %vm1093, %v1082, 0
          %v1098 = vsel %vm1093, %v1083, 0
          %vm1100 = vcmask 1043456
          %v1102 = vsel %vm1100, %v1091, 0
          %1104 = vmatprep.subr.bf16.mxu0 0
          %1105 = vmatpush1.bf16.msra.mxu0 %v1090
          %1106 = vmatprep.subr.bf16.mxu0 0
          %1107 = vmatpush1.bf16.msra.mxu0 %v1102
          %1108 = vmatprep.subr.bf16.mxu0 0
          %1109 = vmatpush1.bf16.msra.mxu0 0
          %1110 = vmatprep.subr.bf16.mxu0 0
          %1111 = vmatpush1.bf16.msra.mxu0 0
          %1112 = vmatprep.subr.bf16.mxu0 0
          %1113 = vmatpush1.bf16.msra.mxu0 0
          %1114 = vmatprep.subr.bf16.mxu0 0
          %1115 = vmatpush1.bf16.msra.mxu0 0
          %1116 = vmatprep.subr.bf16.mxu0 0
          %1117 = vmatpush1.bf16.msra.mxu0 0
          %1118 = vmatprep.subr.bf16.mxu0 0
          %1119 = vmatpush1.bf16.msra.mxu0 0
          %1120 = vmatprep.subr.bf16.mxu0 0
          %1121 = vmatpush1.bf16.msra.mxu0 0
          %1122 = vmatprep.subr.bf16.mxu0 0
          %1123 = vmatpush1.bf16.msra.mxu0 0
          %1124 = vmatprep.subr.bf16.mxu0 0
          %1125 = vmatpush1.bf16.msra.mxu0 0
          %1126 = vmatprep.subr.bf16.mxu0 0
          %1127 = vmatpush1.bf16.msra.mxu0 0
          %1128 = vmatprep.subr.bf16.mxu0 0
          %1129 = vmatpush1.bf16.msra.mxu0 0
          %1130 = vmatprep.subr.bf16.mxu0 0
          %1131 = vmatpush1.bf16.msra.mxu0 0
          %1132 = vmatprep.subr.bf16.mxu0 0
          %1133 = vmatpush1.bf16.msra.mxu0 0
          %1134 = vmatprep.subr.bf16.mxu0 0
          %1135 = vmatpush1.bf16.msra.mxu0 0
          %1136 = vmatprep.mubr.bf16.mxu0 0
          %1137 = vmatmul.mubr.bf16.gmra.mrb[0].mxu0 %v1095
          %v1138 = vpop.f32.mrb[0].mxu0
          %v1139 = vadd.f32 %v1070, %v1138
          %v1140 = vpop.f32.mrb[0].mxu0
          %v1141 = vpop.f32.mrb[0].mxu0
          %v1142 = vadd.f32 %v1071, %v1141
          %v1143 = vpop.f32.mrb[0].mxu0
          %1144 = vmatprep.mubr.bf16.mxu0 0
          %1145 = vmatmul.mubr.bf16.gmra.mrb[0].mxu0 %v1098
          %v1146 = vpop.f32.mrb[0].mxu0
          %v1147 = vadd.f32 %v1072, %v1146
          %v1148 = vpop.f32.mrb[0].mxu0
          %v1149 = vpop.f32.mrb[0].mxu0
          %v1150 = vadd.f32 %v1073, %v1149
          %v1151 = vpop.f32.mrb[0].mxu0
          %1152 = vdwg.mxu0
          %vm1153 = vcmask 261120
          %1154 = vst.msk [vmem:[#allocation2] sm:$0xff] %vm1153, %v1139
          %1155 = vst.msk [vmem:[#allocation2 + $0x8] sm:$0xff] %vm1153, %v1142
          %1156 = vst.msk [vmem:[#allocation2 + $0x10] sm:$0xff] %vm1153, %v1147
          %1157 = vst.msk [vmem:[#allocation2 + $0x18] sm:$0xff] %vm1153, %v1150
        $region132: #{tpu_custom_call.1} parent=111 // pred_fallthru
          _
        %v1158 = vld [vmem:[#allocation2] sm:$0xff]
        %v1159 = vld [vmem:[#allocation2 + $0x8] sm:$0xff]
        %v1160 = vld [vmem:[#allocation2 + $0x10] sm:$0xff]
        %v1161 = vld [vmem:[#allocation2 + $0x18] sm:$0xff]
        %v1162 = vpack.c.bf16 %v1159, %v1158
        %v1163 = vpack.c.bf16 %v1161, %v1160
        %v1164 = vld [vmem:[%s1009] sm:$0xf]
        %v1165 = vld [vmem:[%s1009 + $0x4] sm:$0xf]
        %v1166 = vld [vmem:[%s1009 + $0x8] sm:$0xf]
        %v1167 = vld [vmem:[%s1009 + $0xc] sm:$0xf]
        %v1168 = vld [vmem:[%s1012] sm:$0x1]
        %v1170 = vlaneseq
        %v1171 = vshrl.u32 %v1170, 7
        %v1172 = vsub.s32 0, %v1171
        %v1173 = vrot.slane %v1168, %v1172
        %v1179 = vunpack.c.l.b16 %v1164
        %v1180 = vunpack.c.l.b16 %v1165
        %v1181 = vunpack.c.l.b16 %v1166
        %v1182 = vunpack.c.l.b16 %v1167
        %v1183 = vpack.c.b16 %v1180, %v1179
        %v1184 = vpack.c.b16 %v1182, %v1181
        %vm1187 = vcmask 261120
        %v1189 = vsel %vm1187, %v1162, 0
        %v1192 = vsel %vm1187, %v1163, 0
        %1194 = vmatprep.subr.bf16.mxu0 0
        %1195 = vmatpush1.bf16.msra.mxu0 %v1183
        %1196 = vmatprep.subr.bf16.mxu0 0
        %1197 = vmatpush1.bf16.msra.mxu0 %v1184
        %1198 = vmatprep.subr.bf16.mxu0 0
        %1199 = vmatpush1.bf16.msra.mxu0 0
        %1200 = vmatprep.subr.bf16.mxu0 0
        %1201 = vmatpush1.bf16.msra.mxu0 0
        %1202 = vmatprep.subr.bf16.mxu0 0
        %1203 = vmatpush1.bf16.msra.mxu0 0
        %1204 = vmatprep.subr.bf16.mxu0 0
        %1205 = vmatpush1.bf16.msra.mxu0 0
        %1206 = vmatprep.subr.bf16.mxu0 0
        %1207 = vmatpush1.bf16.msra.mxu0 0
        %1208 = vmatprep.subr.bf16.mxu0 0
        %1209 = vmatpush1.bf16.msra.mxu0 0
        %1210 = vmatprep.subr.bf16.mxu0 0
        %1211 = vmatpush1.bf16.msra.mxu0 0
        %1212 = vmatprep.subr.bf16.mxu0 0
        %1213 = vmatpush1.bf16.msra.mxu0 0
        %1214 = vmatprep.subr.bf16.mxu0 0
        %1215 = vmatpush1.bf16.msra.mxu0 0
        %1216 = vmatprep.subr.bf16.mxu0 0
        %1217 = vmatpush1.bf16.msra.mxu0 0
        %1218 = vmatprep.subr.bf16.mxu0 0
        %1219 = vmatpush1.bf16.msra.mxu0 0
        %1220 = vmatprep.subr.bf16.mxu0 0
        %1221 = vmatpush1.bf16.msra.mxu0 0
        %1222 = vmatprep.subr.bf16.mxu0 0
        %1223 = vmatpush1.bf16.msra.mxu0 0
        %1224 = vmatprep.subr.bf16.mxu0 0
        %1225 = vmatpush1.bf16.msra.mxu0 0
        %1226 = vmatprep.mubr.bf16.mxu0 0
        %1227 = vmatmul.mubr.bf16.gmra.mrb[0].mxu0 %v1189
        %v1228 = vpop.f32.mrb[0].mxu0
        %v1229 = vadd.f32 %v1173, %v1228
        %v1230 = vpop.f32.mrb[0].mxu0
        %v1231 = vpop.f32.mrb[0].mxu0
        %v1232 = vadd.f32 %v1173, %v1231
        %v1233 = vpop.f32.mrb[0].mxu0
        %1234 = vmatprep.mubr.bf16.mxu0 0
        %1235 = vmatmul.mubr.bf16.gmra.mrb[0].mxu0 %v1192
        %v1236 = vpop.f32.mrb[0].mxu0
        %v1237 = vadd.f32 %v1173, %v1236
        %v1238 = vpop.f32.mrb[0].mxu0
        %v1239 = vpop.f32.mrb[0].mxu0
        %v1240 = vadd.f32 %v1173, %v1239
        %v1241 = vpop.f32.mrb[0].mxu0
        %1242 = vdwg.mxu0
        %v1243 = vld [vmem:[%s1017] sm:$0xf]
        %v1244 = vld [vmem:[%s1017 + $0x4] sm:$0xf]
        %v1245 = vld [vmem:[%s1017 + $0x8] sm:$0xf]
        %v1246 = vld [vmem:[%s1017 + $0xc] sm:$0xf]
        %v1247 = vld [vmem:[%s857] sm:$0x1]
        %v1249 = vlaneseq
        %v1250 = vshrl.u32 %v1249, 7
        %v1251 = vsub.s32 0, %v1250
        %v1252 = vrot.slane %v1247, %v1251
        %v1258 = vunpack.c.l.b16 %v1243
        %v1259 = vunpack.c.l.b16 %v1244
        %v1260 = vunpack.c.l.b16 %v1245
        %v1261 = vunpack.c.l.b16 %v1246
        %v1262 = vpack.c.b16 %v1259, %v1258
        %v1263 = vpack.c.b16 %v1261, %v1260
        %1266 = vmatprep.subr.bf16.mxu0 0
        %1267 = vmatpush1.bf16.msra.mxu0 %v1262
        %1268 = vmatprep.subr.bf16.mxu0 0
        %1269 = vmatpush1.bf16.msra.mxu0 %v1263
        %1270 = vmatprep.subr.bf16.mxu0 0
        %1271 = vmatpush1.bf16.msra.mxu0 0
        %1272 = vmatprep.subr.bf16.mxu0 0
        %1273 = vmatpush1.bf16.msra.mxu0 0
        %1274 = vmatprep.subr.bf16.mxu0 0
        %1275 = vmatpush1.bf16.msra.mxu0 0
        %1276 = vmatprep.subr.bf16.mxu0 0
        %1277 = vmatpush1.bf16.msra.mxu0 0
        %1278 = vmatprep.subr.bf16.mxu0 0
        %1279 = vmatpush1.bf16.msra.mxu0 0
        %1280 = vmatprep.subr.bf16.mxu0 0
        %1281 = vmatpush1.bf16.msra.mxu0 0
        %1282 = vmatprep.subr.bf16.mxu0 0
        %1283 = vmatpush1.bf16.msra.mxu0 0
        %1284 = vmatprep.subr.bf16.mxu0 0
        %1285 = vmatpush1.bf16.msra.mxu0 0
        %1286 = vmatprep.subr.bf16.mxu0 0
        %1287 = vmatpush1.bf16.msra.mxu0 0
        %1288 = vmatprep.subr.bf16.mxu0 0
        %1289 = vmatpush1.bf16.msra.mxu0 0
        %1290 = vmatprep.subr.bf16.mxu0 0
        %1291 = vmatpush1.bf16.msra.mxu0 0
        %1292 = vmatprep.subr.bf16.mxu0 0
        %1293 = vmatpush1.bf16.msra.mxu0 0
        %1294 = vmatprep.subr.bf16.mxu0 0
        %1295 = vmatpush1.bf16.msra.mxu0 0
        %1296 = vmatprep.subr.bf16.mxu0 0
        %1297 = vmatpush1.bf16.msra.mxu0 0
        %1298 = vmatprep.mubr.bf16.mxu0 0
        %1299 = vmatmul.mubr.bf16.gmra.mrb[0].mxu0 %v1189
        %v1300 = vpop.f32.mrb[0].mxu0
        %v1301 = vadd.f32 %v1252, %v1300
        %v1302 = vpop.f32.mrb[0].mxu0
        %v1303 = vpop.f32.mrb[0].mxu0
        %v1304 = vadd.f32 %v1252, %v1303
        %v1305 = vpop.f32.mrb[0].mxu0
        %1306 = vmatprep.mubr.bf16.mxu0 0
        %1307 = vmatmul.mubr.bf16.gmra.mrb[0].mxu0 %v1192
        %v1308 = vpop.f32.mrb[0].mxu0
        %v1309 = vadd.f32 %v1252, %v1308
        %v1310 = vpop.f32.mrb[0].mxu0
        %v1311 = vpop.f32.mrb[0].mxu0
        %v1312 = vadd.f32 %v1252, %v1311
        %v1313 = vpop.f32.mrb[0].mxu0
        %1314 = vdwg.mxu0
        %v1315 = vld [vmem:[%s1022] sm:$0xf]
        %v1316 = vld [vmem:[%s1022 + $0x4] sm:$0xf]
        %v1317 = vld [vmem:[%s1022 + $0x8] sm:$0xf]
        %v1318 = vld [vmem:[%s1022 + $0xc] sm:$0xf]
        %v1319 = vld [vmem:[%s1025] sm:$0x1]
        %v1321 = vlaneseq
        %v1322 = vshrl.u32 %v1321, 7
        %v1323 = vsub.s32 0, %v1322
        %v1324 = vrot.slane %v1319, %v1323
        %v1330 = vunpack.c.l.b16 %v1315
        %v1331 = vunpack.c.l.b16 %v1316
        %v1332 = vunpack.c.l.b16 %v1317
        %v1333 = vunpack.c.l.b16 %v1318
        %v1334 = vpack.c.b16 %v1331, %v1330
        %v1335 = vpack.c.b16 %v1333, %v1332
        %1338 = vmatprep.subr.bf16.mxu0 0
        %1339 = vmatpush1.bf16.msra.mxu0 %v1334
        %1340 = vmatprep.subr.bf16.mxu0 0
        %1341 = vmatpush1.bf16.msra.mxu0 %v1335
        %1342 = vmatprep.subr.bf16.mxu0 0
        %1343 = vmatpush1.bf16.msra.mxu0 0
        %1344 = vmatprep.subr.bf16.mxu0 0
        %1345 = vmatpush1.bf16.msra.mxu0 0
        %1346 = vmatprep.subr.bf16.mxu0 0
        %1347 = vmatpush1.bf16.msra.mxu0 0
        %1348 = vmatprep.subr.bf16.mxu0 0
        %1349 = vmatpush1.bf16.msra.mxu0 0
        %1350 = vmatprep.subr.bf16.mxu0 0
        %1351 = vmatpush1.bf16.msra.mxu0 0
        %1352 = vmatprep.subr.bf16.mxu0 0
        %1353 = vmatpush1.bf16.msra.mxu0 0
        %1354 = vmatprep.subr.bf16.mxu0 0
        %1355 = vmatpush1.bf16.msra.mxu0 0
        %1356 = vmatprep.subr.bf16.mxu0 0
        %1357 = vmatpush1.bf16.msra.mxu0 0
        %1358 = vmatprep.subr.bf16.mxu0 0
        %1359 = vmatpush1.bf16.msra.mxu0 0
        %1360 = vmatprep.subr.bf16.mxu0 0
        %1361 = vmatpush1.bf16.msra.mxu0 0
        %1362 = vmatprep.subr.bf16.mxu0 0
        %1363 = vmatpush1.bf16.msra.mxu0 0
        %1364 = vmatprep.subr.bf16.mxu0 0
        %1365 = vmatpush1.bf16.msra.mxu0 0
        %1366 = vmatprep.subr.bf16.mxu0 0
        %1367 = vmatpush1.bf16.msra.mxu0 0
        %1368 = vmatprep.subr.bf16.mxu0 0
        %1369 = vmatpush1.bf16.msra.mxu0 0
        %1370 = vmatprep.mubr.bf16.mxu0 0
        %1371 = vmatmul.mubr.bf16.gmra.mrb[0].mxu0 %v1189
        %v1372 = vpop.f32.mrb[0].mxu0
        %v1373 = vadd.f32 %v1324, %v1372
        %v1374 = vpop.f32.mrb[0].mxu0
        %v1375 = vpop.f32.mrb[0].mxu0
        %v1376 = vadd.f32 %v1324, %v1375
        %v1377 = vpop.f32.mrb[0].mxu0
        %1378 = vmatprep.mubr.bf16.mxu0 0
        %1379 = vmatmul.mubr.bf16.gmra.mrb[0].mxu0 %v1192
        %v1380 = vpop.f32.mrb[0].mxu0
        %v1381 = vadd.f32 %v1324, %v1380
        %v1382 = vpop.f32.mrb[0].mxu0
        %v1383 = vpop.f32.mrb[0].mxu0
        %v1384 = vadd.f32 %v1324, %v1383
        %v1385 = vpop.f32.mrb[0].mxu0
        %1386 = vdwg.mxu0
        %v1387 = vpack.c.bf16 %v1232, %v1229
        %v1388 = vpack.c.bf16 %v1240, %v1237
        %v1389 = vpack.c.bf16 %v1304, %v1301
        %v1390 = vpack.c.bf16 %v1312, %v1309
        %v1391 = vpack.c.bf16 %v1376, %v1373
        %v1392 = vpack.c.bf16 %v1384, %v1381
        %vm1393 = vcmask 64512
        %v1395 = vsel %vm1393, %v1387, 0
        %v1398 = vsel %vm1393, %v1389, 0
        %1400 = vmatprep.subr.bf16.mxu0 0
        %1401 = vmatpush1.bf16.xpose.msra.mxu0 %v1398
        %1402 = vmatprep.subr.bf16.mxu0 0
        %1403 = vmatpush1.bf16.xpose.msra.mxu0 0
        %1404 = vmatprep.subr.bf16.mxu0 0
        %1405 = vmatpush1.bf16.xpose.msra.mxu0 0
        %1406 = vmatprep.subr.bf16.mxu0 0
        %1407 = vmatpush1.bf16.xpose.msra.mxu0 0
        %1408 = vmatprep.subr.bf16.mxu0 0
        %1409 = vmatpush1.bf16.xpose.msra.mxu0 0
        %1410 = vmatprep.subr.bf16.mxu0 0
        %1411 = vmatpush1.bf16.xpose.msra.mxu0 0
        %1412 = vmatprep.subr.bf16.mxu0 0
        %1413 = vmatpush1.bf16.xpose.msra.mxu0 0
        %1414 = vmatprep.subr.bf16.mxu0 0
        %1415 = vmatpush1.bf16.xpose.msra.mxu0 0
        %1416 = vmatprep.subr.bf16.mxu0 0
        %1417 = vmatpush1.bf16.xpose.msra.mxu0 0
        %1418 = vmatprep.subr.bf16.mxu0 0
        %1419 = vmatpush1.bf16.xpose.msra.mxu0 0
        %1420 = vmatprep.subr.bf16.mxu0 0
        %1421 = vmatpush1.bf16.xpose.msra.mxu0 0
        %1422 = vmatprep.subr.bf16.mxu0 0
        %1423 = vmatpush1.bf16.xpose.msra.mxu0 0
        %1424 = vmatprep.subr.bf16.mxu0 0
        %1425 = vmatpush1.bf16.xpose.msra.mxu0 0
        %1426 = vmatprep.subr.bf16.mxu0 0
        %1427 = vmatpush1.bf16.xpose.msra.mxu0 0
        %1428 = vmatprep.subr.bf16.mxu0 0
        %1429 = vmatpush1.bf16.xpose.msra.mxu0 0
        %1430 = vmatprep.subr.bf16.mxu0 0
        %1431 = vmatpush1.bf16.xpose.msra.mxu0 0
        %1432 = vmatprep.mubr.bf16.mxu0 0
        %1433 = vmatmul.mubr.bf16.gmra.mrb[0].mxu0 %v1395
        %v1434 = vpop.f32.mrb[0].mxu0
        %v1435 = vadd.f32 0.0, %v1434
        %v1436 = vpop.f32.mrb[0].mxu0
        %v1437 = vpop.f32.mrb[0].mxu0
        %v1438 = vadd.f32 0.0, %v1437
        %v1439 = vpop.f32.mrb[0].mxu0
        %1440 = vdwg.mxu0
        %v1441 = vmul.f32 %v1435, 0.35355338
        %v1442 = vmul.f32 %v1438, 0.35355338
        %vm1443 = vcmask 130048
        %v1444 = vsel %vm1443, %v1441, -inf
        %1445 = vmax.xlane.f32.xlu0 %v1444
        %v1446 = vpop.xlane.xlu0 %1445
        %v1447 = vsel %vm1443, %v1442, -inf
        %1448 = vmax.xlane.f32.xlu0 %v1447
        %v1449 = vpop.xlane.xlu0 %1448
        %v1450 = vsub.f32 %v1441, %v1446
        %v1451 = vsub.f32 %v1442, %v1449
        %v1452 = vmul.f32 %v1450, 1.442695
        %v1453 = vpow.pop %v1452
        %v1454 = vmul.f32 %v1451, 1.442695
        %v1455 = vpow.pop %v1454
        %v1456 = vsel %vm1443, %v1453, 0.0
        %1457 = vadd.xlane.f32.xlu0 %v1456
        %v1458 = vpop.xlane.xlu0 %1457
        %v1459 = vsel %vm1443, %v1455, 0.0
        %1460 = vadd.xlane.f32.xlu0 %v1459
        %v1461 = vpop.xlane.xlu0 %1460
        %v1462 = vrcp.pop %v1458
        %v1463 = vrcp.pop %v1461
        %v1464 = vmul.f32 %v1453, %v1462
        %v1465 = vmul.f32 %v1455, %v1463
        %v1466 = vpack.c.bf16 %v1465, %v1464
        %v1468 = vsel %vm1443, %v1466, 0
        %1470 = vmatprep.subr.bf16.mxu0 0
        %1471 = vmatpush1.bf16.msra.mxu0 %v1391
        %1472 = vmatprep.subr.bf16.mxu0 0
        %1473 = vmatpush1.bf16.msra.mxu0 0
        %1474 = vmatprep.subr.bf16.mxu0 0
        %1475 = vmatpush1.bf16.msra.mxu0 0
        %1476 = vmatprep.subr.bf16.mxu0 0
        %1477 = vmatpush1.bf16.msra.mxu0 0
        %1478 = vmatprep.subr.bf16.mxu0 0
        %1479 = vmatpush1.bf16.msra.mxu0 0
        %1480 = vmatprep.subr.bf16.mxu0 0
        %1481 = vmatpush1.bf16.msra.mxu0 0
        %1482 = vmatprep.subr.bf16.mxu0 0
        %1483 = vmatpush1.bf16.msra.mxu0 0
        %1484 = vmatprep.subr.bf16.mxu0 0
        %1485 = vmatpush1.bf16.msra.mxu0 0
        %1486 = vmatprep.subr.bf16.mxu0 0
        %1487 = vmatpush1.bf16.msra.mxu0 0
        %1488 = vmatprep.subr.bf16.mxu0 0
        %1489 = vmatpush1.bf16.msra.mxu0 0
        %1490 = vmatprep.subr.bf16.mxu0 0
        %1491 = vmatpush1.bf16.msra.mxu0 0
        %1492 = vmatprep.subr.bf16.mxu0 0
        %1493 = vmatpush1.bf16.msra.mxu0 0
        %1494 = vmatprep.subr.bf16.mxu0 0
        %1495 = vmatpush1.bf16.msra.mxu0 0
        %1496 = vmatprep.subr.bf16.mxu0 0
        %1497 = vmatpush1.bf16.msra.mxu0 0
        %1498 = vmatprep.subr.bf16.mxu0 0
        %1499 = vmatpush1.bf16.msra.mxu0 0
        %1500 = vmatprep.subr.bf16.mxu0 0
        %1501 = vmatpush1.bf16.msra.mxu0 0
        %1502 = vmatprep.mubr.bf16.mxu0 0
        %1503 = vmatmul.mubr.bf16.gmra.mrb[0].mxu0 %v1468
        %v1504 = vpop.f32.mrb[0].mxu0
        %v1505 = vadd.f32 0.0, %v1504
        %v1506 = vpop.f32.mrb[0].mxu0
        %v1507 = vpop.f32.mrb[0].mxu0
        %v1508 = vadd.f32 0.0, %v1507
        %v1509 = vpop.f32.mrb[0].mxu0
        %1510 = vdwg.mxu0
        %1511 = vst.msk [vmem:[#allocation3] sm:$0xff] %vm1393, %v1505
        %1512 = vst.msk [vmem:[#allocation3 + $0x8] sm:$0xff] %vm1393, %v1508
        %1514 = vrot.lane.b32.xlu0 %v1387, 120
        %v1515 = vpop.permute.xlu0 %1514
        %1517 = vrot.lane.b32.xlu0 %v1389, 120
        %v1518 = vpop.permute.xlu0 %1517
        %v1520 = vsel %vm1393, %v1515, 0
        %v1523 = vsel %vm1393, %v1518, 0
        %1525 = vmatprep.subr.bf16.mxu0 0
        %1526 = vmatpush1.bf16.xpose.msra.mxu0 %v1523
        %1527 = vmatprep.subr.bf16.mxu0 0
        %1528 = vmatpush1.bf16.xpose.msra.mxu0 0
        %1529 = vmatprep.subr.bf16.mxu0 0
        %1530 = vmatpush1.bf16.xpose.msra.mxu0 0
        %1531 = vmatprep.subr.bf16.mxu0 0
        %1532 = vmatpush1.bf16.xpose.msra.mxu0 0
        %1533 = vmatprep.subr.bf16.mxu0 0
        %1534 = vmatpush1.bf16.xpose.msra.mxu0 0
        %1535 = vmatprep.subr.bf16.mxu0 0
        %1536 = vmatpush1.bf16.xpose.msra.mxu0 0
        %1537 = vmatprep.subr.bf16.mxu0 0
        %1538 = vmatpush1.bf16.xpose.msra.mxu0 0
        %1539 = vmatprep.subr.bf16.mxu0 0
        %1540 = vmatpush1.bf16.xpose.msra.mxu0 0
        %1541 = vmatprep.subr.bf16.mxu0 0
        %1542 = vmatpush1.bf16.xpose.msra.mxu0 0
        %1543 = vmatprep.subr.bf16.mxu0 0
        %1544 = vmatpush1.bf16.xpose.msra.mxu0 0
        %1545 = vmatprep.subr.bf16.mxu0 0
        %1546 = vmatpush1.bf16.xpose.msra.mxu0 0
        %1547 = vmatprep.subr.bf16.mxu0 0
        %1548 = vmatpush1.bf16.xpose.msra.mxu0 0
        %1549 = vmatprep.subr.bf16.mxu0 0
        %1550 = vmatpush1.bf16.xpose.msra.mxu0 0
        %1551 = vmatprep.subr.bf16.mxu0 0
        %1552 = vmatpush1.bf16.xpose.msra.mxu0 0
        %1553 = vmatprep.subr.bf16.mxu0 0
        %1554 = vmatpush1.bf16.xpose.msra.mxu0 0
        %1555 = vmatprep.subr.bf16.mxu0 0
        %1556 = vmatpush1.bf16.xpose.msra.mxu0 0
        %1557 = vmatprep.mubr.bf16.mxu0 0
        %1558 = vmatmul.mubr.bf16.gmra.mrb[0].mxu0 %v1520
        %v1559 = vpop.f32.mrb[0].mxu0
        %v1560 = vadd.f32 0.0, %v1559
        %v1561 = vpop.f32.mrb[0].mxu0
        %v1562 = vpop.f32.mrb[0].mxu0
        %v1563 = vadd.f32 0.0, %v1562
        %v1564 = vpop.f32.mrb[0].mxu0
        %1565 = vdwg.mxu0
        %v1566 = vmul.f32 %v1560, 0.35355338
        %v1567 = vmul.f32 %v1563, 0.35355338
        %v1568 = vsel %vm1443, %v1566, -inf
        %1569 = vmax.xlane.f32.xlu0 %v1568
        %v1570 = vpop.xlane.xlu0 %1569
        %v1571 = vsel %vm1443, %v1567, -inf
        %1572 = vmax.xlane.f32.xlu0 %v1571
        %v1573 = vpop.xlane.xlu0 %1572
        %v1574 = vsub.f32 %v1566, %v1570
        %v1575 = vsub.f32 %v1567, %v1573
        %v1576 = vmul.f32 %v1574, 1.442695
        %v1577 = vpow.pop %v1576
        %v1578 = vmul.f32 %v1575, 1.442695
        %v1579 = vpow.pop %v1578
        %v1580 = vsel %vm1443, %v1577, 0.0
        %1581 = vadd.xlane.f32.xlu0 %v1580
        %v1582 = vpop.xlane.xlu0 %1581
        %v1583 = vsel %vm1443, %v1579, 0.0
        %1584 = vadd.xlane.f32.xlu0 %v1583
        %v1585 = vpop.xlane.xlu0 %1584
        %v1586 = vrcp.pop %v1582
        %v1587 = vrcp.pop %v1585
        %v1588 = vmul.f32 %v1577, %v1586
        %v1589 = vmul.f32 %v1579, %v1587
        %v1590 = vpack.c.bf16 %v1589, %v1588
        %1592 = vrot.lane.b32.xlu0 %v1391, 120
        %v1593 = vpop.permute.xlu0 %1592
        %v1596 = vsel %vm1443, %v1590, 0
        %1598 = vmatprep.subr.bf16.mxu0 0
        %1599 = vmatpush1.bf16.msra.mxu0 %v1593
        %1600 = vmatprep.subr.bf16.mxu0 0
        %1601 = vmatpush1.bf16.msra.mxu0 0
        %1602 = vmatprep.subr.bf16.mxu0 0
        %1603 = vmatpush1.bf16.msra.mxu0 0
        %1604 = vmatprep.subr.bf16.mxu0 0
        %1605 = vmatpush1.bf16.msra.mxu0 0
        %1606 = vmatprep.subr.bf16.mxu0 0
        %1607 = vmatpush1.bf16.msra.mxu0 0
        %1608 = vmatprep.subr.bf16.mxu0 0
        %1609 = vmatpush1.bf16.msra.mxu0 0
        %1610 = vmatprep.subr.bf16.mxu0 0
        %1611 = vmatpush1.bf16.msra.mxu0 0
        %1612 = vmatprep.subr.bf16.mxu0 0
        %1613 = vmatpush1.bf16.msra.mxu0 0
        %1614 = vmatprep.subr.bf16.mxu0 0
        %1615 = vmatpush1.bf16.msra.mxu0 0
        %1616 = vmatprep.subr.bf16.mxu0 0
        %1617 = vmatpush1.bf16.msra.mxu0 0
        %1618 = vmatprep.subr.bf16.mxu0 0
        %1619 = vmatpush1.bf16.msra.mxu0 0
        %1620 = vmatprep.subr.bf16.mxu0 0
        %1621 = vmatpush1.bf16.msra.mxu0 0
        %1622 = vmatprep.subr.bf16.mxu0 0
        %1623 = vmatpush1.bf16.msra.mxu0 0
        %1624 = vmatprep.subr.bf16.mxu0 0
        %1625 = vmatpush1.bf16.msra.mxu0 0
        %1626 = vmatprep.subr.bf16.mxu0 0
        %1627 = vmatpush1.bf16.msra.mxu0 0
        %1628 = vmatprep.subr.bf16.mxu0 0
        %1629 = vmatpush1.bf16.msra.mxu0 0
        %1630 = vmatprep.mubr.bf16.mxu0 0
        %1631 = vmatmul.mubr.bf16.gmra.mrb[0].mxu0 %v1596
        %v1632 = vpop.f32.mrb[0].mxu0
        %v1633 = vadd.f32 0.0, %v1632
        %v1634 = vpop.f32.mrb[0].mxu0
        %v1635 = vpop.f32.mrb[0].mxu0
        %v1636 = vadd.f32 0.0, %v1635
        %v1637 = vpop.f32.mrb[0].mxu0
        %1638 = vdwg.mxu0
        %1641 = vrot.lane.b32.xlu0 %v1633, 8
        %v1642 = vpop.permute.xlu0 %1641
        %1643 = vrot.lane.b32.xlu0 %v1636, 8
        %v1644 = vpop.permute.xlu0 %1643
        %vm1647 = vcmask 130112
        %1648 = vst.msk [vmem:[#allocation3] sm:$0xff] %vm1647, %v1642
        %1649 = vst.msk [vmem:[#allocation3 + $0x8] sm:$0xff] %vm1647, %v1644
        %1650 = vrot.lane.b32.xlu0 %v1387, 112
        %v1651 = vpop.permute.xlu0 %1650
        %1652 = vrot.lane.b32.xlu0 %v1389, 112
        %v1653 = vpop.permute.xlu0 %1652
        %v1655 = vsel %vm1393, %v1651, 0
        %v1658 = vsel %vm1393, %v1653, 0
        %1660 = vmatprep.subr.bf16.mxu0 0
        %1661 = vmatpush1.bf16.xpose.msra.mxu0 %v1658
        %1662 = vmatprep.subr.bf16.mxu0 0
        %1663 = vmatpush1.bf16.xpose.msra.mxu0 0
        %1664 = vmatprep.subr.bf16.mxu0 0
        %1665 = vmatpush1.bf16.xpose.msra.mxu0 0
        %1666 = vmatprep.subr.bf16.mxu0 0
        %1667 = vmatpush1.bf16.xpose.msra.mxu0 0
        %1668 = vmatprep.subr.bf16.mxu0 0
        %1669 = vmatpush1.bf16.xpose.msra.mxu0 0
        %1670 = vmatprep.subr.bf16.mxu0 0
        %1671 = vmatpush1.bf16.xpose.msra.mxu0 0
        %1672 = vmatprep.subr.bf16.mxu0 0
        %1673 = vmatpush1.bf16.xpose.msra.mxu0 0
        %1674 = vmatprep.subr.bf16.mxu0 0
        %1675 = vmatpush1.bf16.xpose.msra.mxu0 0
        %1676 = vmatprep.subr.bf16.mxu0 0
        %1677 = vmatpush1.bf16.xpose.msra.mxu0 0
        %1678 = vmatprep.subr.bf16.mxu0 0
        %1679 = vmatpush1.bf16.xpose.msra.mxu0 0
        %1680 = vmatprep.subr.bf16.mxu0 0
        %1681 = vmatpush1.bf16.xpose.msra.mxu0 0
        %1682 = vmatprep.subr.bf16.mxu0 0
        %1683 = vmatpush1.bf16.xpose.msra.mxu0 0
        %1684 = vmatprep.subr.bf16.mxu0 0
        %1685 = vmatpush1.bf16.xpose.msra.mxu0 0
        %1686 = vmatprep.subr.bf16.mxu0 0
        %1687 = vmatpush1.bf16.xpose.msra.mxu0 0
        %1688 = vmatprep.subr.bf16.mxu0 0
        %1689 = vmatpush1.bf16.xpose.msra.mxu0 0
        %1690 = vmatprep.subr.bf16.mxu0 0
        %1691 = vmatpush1.bf16.xpose.msra.mxu0 0
        %1692 = vmatprep.mubr.bf16.mxu0 0
        %1693 = vmatmul.mubr.bf16.gmra.mrb[0].mxu0 %v1655
        %v1694 = vpop.f32.mrb[0].mxu0
        %v1695 = vadd.f32 0.0, %v1694
        %v1696 = vpop.f32.mrb[0].mxu0
        %v1697 = vpop.f32.mrb[0].mxu0
        %v1698 = vadd.f32 0.0, %v1697
        %v1699 = vpop.f32.mrb[0].mxu0
        %1700 = vdwg.mxu0
        %v1701 = vmul.f32 %v1695, 0.35355338
        %v1702 = vmul.f32 %v1698, 0.35355338
        %v1703 = vsel %vm1443, %v1701, -inf
        %1704 = vmax.xlane.f32.xlu0 %v1703
        %v1705 = vpop.xlane.xlu0 %1704
        %v1706 = vsel %vm1443, %v1702, -inf
        %1707 = vmax.xlane.f32.xlu0 %v1706
        %v1708 = vpop.xlane.xlu0 %1707
        %v1709 = vsub.f32 %v1701, %v1705
        %v1710 = vsub.f32 %v1702, %v1708
        %v1711 = vmul.f32 %v1709, 1.442695
        %v1712 = vpow.pop %v1711
        %v1713 = vmul.f32 %v1710, 1.442695
        %v1714 = vpow.pop %v1713
        %v1715 = vsel %vm1443, %v1712, 0.0
        %1716 = vadd.xlane.f32.xlu0 %v1715
        %v1717 = vpop.xlane.xlu0 %1716
        %v1718 = vsel %vm1443, %v1714, 0.0
        %1719 = vadd.xlane.f32.xlu0 %v1718
        %v1720 = vpop.xlane.xlu0 %1719
        %v1721 = vrcp.pop %v1717
        %v1722 = vrcp.pop %v1720
        %v1723 = vmul.f32 %v1712, %v1721
        %v1724 = vmul.f32 %v1714, %v1722
        %v1725 = vpack.c.bf16 %v1724, %v1723
        %1726 = vrot.lane.b32.xlu0 %v1391, 112
        %v1727 = vpop.permute.xlu0 %1726
        %v1730 = vsel %vm1443, %v1725, 0
        %1732 = vmatprep.subr.bf16.mxu0 0
        %1733 = vmatpush1.bf16.msra.mxu0 %v1727
        %1734 = vmatprep.subr.bf16.mxu0 0
        %1735 = vmatpush1.bf16.msra.mxu0 0
        %1736 = vmatprep.subr.bf16.mxu0 0
        %1737 = vmatpush1.bf16.msra.mxu0 0
        %1738 = vmatprep.subr.bf16.mxu0 0
        %1739 = vmatpush1.bf16.msra.mxu0 0
        %1740 = vmatprep.subr.bf16.mxu0 0
        %1741 = vmatpush1.bf16.msra.mxu0 0
        %1742 = vmatprep.subr.bf16.mxu0 0
        %1743 = vmatpush1.bf16.msra.mxu0 0
        %1744 = vmatprep.subr.bf16.mxu0 0
        %1745 = vmatpush1.bf16.msra.mxu0 0
        %1746 = vmatprep.subr.bf16.mxu0 0
        %1747 = vmatpush1.bf16.msra.mxu0 0
        %1748 = vmatprep.subr.bf16.mxu0 0
        %1749 = vmatpush1.bf16.msra.mxu0 0
        %1750 = vmatprep.subr.bf16.mxu0 0
        %1751 = vmatpush1.bf16.msra.mxu0 0
        %1752 = vmatprep.subr.bf16.mxu0 0
        %1753 = vmatpush1.bf16.msra.mxu0 0
        %1754 = vmatprep.subr.bf16.mxu0 0
        %1755 = vmatpush1.bf16.msra.mxu0 0
        %1756 = vmatprep.subr.bf16.mxu0 0
        %1757 = vmatpush1.bf16.msra.mxu0 0
        %1758 = vmatprep.subr.bf16.mxu0 0
        %1759 = vmatpush1.bf16.msra.mxu0 0
        %1760 = vmatprep.subr.bf16.mxu0 0
        %1761 = vmatpush1.bf16.msra.mxu0 0
        %1762 = vmatprep.subr.bf16.mxu0 0
        %1763 = vmatpush1.bf16.msra.mxu0 0
        %1764 = vmatprep.mubr.bf16.mxu0 0
        %1765 = vmatmul.mubr.bf16.gmra.mrb[0].mxu0 %v1730
        %v1766 = vpop.f32.mrb[0].mxu0
        %v1767 = vadd.f32 0.0, %v1766
        %v1768 = vpop.f32.mrb[0].mxu0
        %v1769 = vpop.f32.mrb[0].mxu0
        %v1770 = vadd.f32 0.0, %v1769
        %v1771 = vpop.f32.mrb[0].mxu0
        %1772 = vdwg.mxu0
        %1775 = vrot.lane.b32.xlu0 %v1767, 16
        %v1776 = vpop.permute.xlu0 %1775
        %1777 = vrot.lane.b32.xlu0 %v1770, 16
        %v1778 = vpop.permute.xlu0 %1777
        %vm1781 = vcmask 195712
        %1782 = vst.msk [vmem:[#allocation3] sm:$0xff] %vm1781, %v1776
        %1783 = vst.msk [vmem:[#allocation3 + $0x8] sm:$0xff] %vm1781, %v1778
        %1784 = vrot.lane.b32.xlu0 %v1387, 104
        %v1785 = vpop.permute.xlu0 %1784
        %1786 = vrot.lane.b32.xlu0 %v1389, 104
        %v1787 = vpop.permute.xlu0 %1786
        %v1789 = vsel %vm1393, %v1785, 0
        %v1792 = vsel %vm1393, %v1787, 0
        %1794 = vmatprep.subr.bf16.mxu0 0
        %1795 = vmatpush1.bf16.xpose.msra.mxu0 %v1792
        %1796 = vmatprep.subr.bf16.mxu0 0
        %1797 = vmatpush1.bf16.xpose.msra.mxu0 0
        %1798 = vmatprep.subr.bf16.mxu0 0
        %1799 = vmatpush1.bf16.xpose.msra.mxu0 0
        %1800 = vmatprep.subr.bf16.mxu0 0
        %1801 = vmatpush1.bf16.xpose.msra.mxu0 0
        %1802 = vmatprep.subr.bf16.mxu0 0
        %1803 = vmatpush1.bf16.xpose.msra.mxu0 0
        %1804 = vmatprep.subr.bf16.mxu0 0
        %1805 = vmatpush1.bf16.xpose.msra.mxu0 0
        %1806 = vmatprep.subr.bf16.mxu0 0
        %1807 = vmatpush1.bf16.xpose.msra.mxu0 0
        %1808 = vmatprep.subr.bf16.mxu0 0
        %1809 = vmatpush1.bf16.xpose.msra.mxu0 0
        %1810 = vmatprep.subr.bf16.mxu0 0
        %1811 = vmatpush1.bf16.xpose.msra.mxu0 0
        %1812 = vmatprep.subr.bf16.mxu0 0
        %1813 = vmatpush1.bf16.xpose.msra.mxu0 0
        %1814 = vmatprep.subr.bf16.mxu0 0
        %1815 = vmatpush1.bf16.xpose.msra.mxu0 0
        %1816 = vmatprep.subr.bf16.mxu0 0
        %1817 = vmatpush1.bf16.xpose.msra.mxu0 0
        %1818 = vmatprep.subr.bf16.mxu0 0
        %1819 = vmatpush1.bf16.xpose.msra.mxu0 0
        %1820 = vmatprep.subr.bf16.mxu0 0
        %1821 = vmatpush1.bf16.xpose.msra.mxu0 0
        %1822 = vmatprep.subr.bf16.mxu0 0
        %1823 = vmatpush1.bf16.xpose.msra.mxu0 0
        %1824 = vmatprep.subr.bf16.mxu0 0
        %1825 = vmatpush1.bf16.xpose.msra.mxu0 0
        %1826 = vmatprep.mubr.bf16.mxu0 0
        %1827 = vmatmul.mubr.bf16.gmra.mrb[0].mxu0 %v1789
        %v1828 = vpop.f32.mrb[0].mxu0
        %v1829 = vadd.f32 0.0, %v1828
        %v1830 = vpop.f32.mrb[0].mxu0
        %v1831 = vpop.f32.mrb[0].mxu0
        %v1832 = vadd.f32 0.0, %v1831
        %v1833 = vpop.f32.mrb[0].mxu0
        %1834 = vdwg.mxu0
        %v1835 = vmul.f32 %v1829, 0.35355338
        %v1836 = vmul.f32 %v1832, 0.35355338
        %v1837 = vsel %vm1443, %v1835, -inf
        %1838 = vmax.xlane.f32.xlu0 %v1837
        %v1839 = vpop.xlane.xlu0 %1838
        %v1840 = vsel %vm1443, %v1836, -inf
        %1841 = vmax.xlane.f32.xlu0 %v1840
        %v1842 = vpop.xlane.xlu0 %1841
        %v1843 = vsub.f32 %v1835, %v1839
        %v1844 = vsub.f32 %v1836, %v1842
        %v1845 = vmul.f32 %v1843, 1.442695
        %v1846 = vpow.pop %v1845
        %v1847 = vmul.f32 %v1844, 1.442695
        %v1848 = vpow.pop %v1847
        %v1849 = vsel %vm1443, %v1846, 0.0
        %1850 = vadd.xlane.f32.xlu0 %v1849
        %v1851 = vpop.xlane.xlu0 %1850
        %v1852 = vsel %vm1443, %v1848, 0.0
        %1853 = vadd.xlane.f32.xlu0 %v1852
        %v1854 = vpop.xlane.xlu0 %1853
        %v1855 = vrcp.pop %v1851
        %v1856 = vrcp.pop %v1854
        %v1857 = vmul.f32 %v1846, %v1855
        %v1858 = vmul.f32 %v1848, %v1856
        %v1859 = vpack.c.bf16 %v1858, %v1857
        %1860 = vrot.lane.b32.xlu0 %v1391, 104
        %v1861 = vpop.permute.xlu0 %1860
        %v1864 = vsel %vm1443, %v1859, 0
        %1866 = vmatprep.subr.bf16.mxu0 0
        %1867 = vmatpush1.bf16.msra.mxu0 %v1861
        %1868 = vmatprep.subr.bf16.mxu0 0
        %1869 = vmatpush1.bf16.msra.mxu0 0
        %1870 = vmatprep.subr.bf16.mxu0 0
        %1871 = vmatpush1.bf16.msra.mxu0 0
        %1872 = vmatprep.subr.bf16.mxu0 0
        %1873 = vmatpush1.bf16.msra.mxu0 0
        %1874 = vmatprep.subr.bf16.mxu0 0
        %1875 = vmatpush1.bf16.msra.mxu0 0
        %1876 = vmatprep.subr.bf16.mxu0 0
        %1877 = vmatpush1.bf16.msra.mxu0 0
        %1878 = vmatprep.subr.bf16.mxu0 0
        %1879 = vmatpush1.bf16.msra.mxu0 0
        %1880 = vmatprep.subr.bf16.mxu0 0
        %1881 = vmatpush1.bf16.msra.mxu0 0
        %1882 = vmatprep.subr.bf16.mxu0 0
        %1883 = vmatpush1.bf16.msra.mxu0 0
        %1884 = vmatprep.subr.bf16.mxu0 0
        %1885 = vmatpush1.bf16.msra.mxu0 0
        %1886 = vmatprep.subr.bf16.mxu0 0
        %1887 = vmatpush1.bf16.msra.mxu0 0
        %1888 = vmatprep.subr.bf16.mxu0 0
        %1889 = vmatpush1.bf16.msra.mxu0 0
        %1890 = vmatprep.subr.bf16.mxu0 0
        %1891 = vmatpush1.bf16.msra.mxu0 0
        %1892 = vmatprep.subr.bf16.mxu0 0
        %1893 = vmatpush1.bf16.msra.mxu0 0
        %1894 = vmatprep.subr.bf16.mxu0 0
        %1895 = vmatpush1.bf16.msra.mxu0 0
        %1896 = vmatprep.subr.bf16.mxu0 0
        %1897 = vmatpush1.bf16.msra.mxu0 0
        %1898 = vmatprep.mubr.bf16.mxu0 0
        %1899 = vmatmul.mubr.bf16.gmra.mrb[0].mxu0 %v1864
        %v1900 = vpop.f32.mrb[0].mxu0
        %v1901 = vadd.f32 0.0, %v1900
        %v1902 = vpop.f32.mrb[0].mxu0
        %v1903 = vpop.f32.mrb[0].mxu0
        %v1904 = vadd.f32 0.0, %v1903
        %v1905 = vpop.f32.mrb[0].mxu0
        %1906 = vdwg.mxu0
        %1909 = vrot.lane.b32.xlu0 %v1901, 24
        %v1910 = vpop.permute.xlu0 %1909
        %1911 = vrot.lane.b32.xlu0 %v1904, 24
        %v1912 = vpop.permute.xlu0 %1911
        %vm1915 = vcmask 261312
        %1916 = vst.msk [vmem:[#allocation3] sm:$0xff] %vm1915, %v1910
        %1917 = vst.msk [vmem:[#allocation3 + $0x8] sm:$0xff] %vm1915, %v1912
        %v1919 = vsel %vm1393, %v1388, 0
        %v1922 = vsel %vm1393, %v1390, 0
        %1924 = vmatprep.subr.bf16.mxu0 0
        %1925 = vmatpush1.bf16.xpose.msra.mxu0 %v1922
        %1926 = vmatprep.subr.bf16.mxu0 0
        %1927 = vmatpush1.bf16.xpose.msra.mxu0 0
        %1928 = vmatprep.subr.bf16.mxu0 0
        %1929 = vmatpush1.bf16.xpose.msra.mxu0 0
        %1930 = vmatprep.subr.bf16.mxu0 0
        %1931 = vmatpush1.bf16.xpose.msra.mxu0 0
        %1932 = vmatprep.subr.bf16.mxu0 0
        %1933 = vmatpush1.bf16.xpose.msra.mxu0 0
        %1934 = vmatprep.subr.bf16.mxu0 0
        %1935 = vmatpush1.bf16.xpose.msra.mxu0 0
        %1936 = vmatprep.subr.bf16.mxu0 0
        %1937 = vmatpush1.bf16.xpose.msra.mxu0 0
        %1938 = vmatprep.subr.bf16.mxu0 0
        %1939 = vmatpush1.bf16.xpose.msra.mxu0 0
        %1940 = vmatprep.subr.bf16.mxu0 0
        %1941 = vmatpush1.bf16.xpose.msra.mxu0 0
        %1942 = vmatprep.subr.bf16.mxu0 0
        %1943 = vmatpush1.bf16.xpose.msra.mxu0 0
        %1944 = vmatprep.subr.bf16.mxu0 0
        %1945 = vmatpush1.bf16.xpose.msra.mxu0 0
        %1946 = vmatprep.subr.bf16.mxu0 0
        %1947 = vmatpush1.bf16.xpose.msra.mxu0 0
        %1948 = vmatprep.subr.bf16.mxu0 0
        %1949 = vmatpush1.bf16.xpose.msra.mxu0 0
        %1950 = vmatprep.subr.bf16.mxu0 0
        %1951 = vmatpush1.bf16.xpose.msra.mxu0 0
        %1952 = vmatprep.subr.bf16.mxu0 0
        %1953 = vmatpush1.bf16.xpose.msra.mxu0 0
        %1954 = vmatprep.subr.bf16.mxu0 0
        %1955 = vmatpush1.bf16.xpose.msra.mxu0 0
        %1956 = vmatprep.mubr.bf16.mxu0 0
        %1957 = vmatmul.mubr.bf16.gmra.mrb[0].mxu0 %v1919
        %v1958 = vpop.f32.mrb[0].mxu0
        %v1959 = vadd.f32 0.0, %v1958
        %v1960 = vpop.f32.mrb[0].mxu0
        %v1961 = vpop.f32.mrb[0].mxu0
        %v1962 = vadd.f32 0.0, %v1961
        %v1963 = vpop.f32.mrb[0].mxu0
        %1964 = vdwg.mxu0
        %v1965 = vmul.f32 %v1959, 0.35355338
        %v1966 = vmul.f32 %v1962, 0.35355338
        %v1967 = vsel %vm1443, %v1965, -inf
        %1968 = vmax.xlane.f32.xlu0 %v1967
        %v1969 = vpop.xlane.xlu0 %1968
        %v1970 = vsel %vm1443, %v1966, -inf
        %1971 = vmax.xlane.f32.xlu0 %v1970
        %v1972 = vpop.xlane.xlu0 %1971
        %v1973 = vsub.f32 %v1965, %v1969
        %v1974 = vsub.f32 %v1966, %v1972
        %v1975 = vmul.f32 %v1973, 1.442695
        %v1976 = vpow.pop %v1975
        %v1977 = vmul.f32 %v1974, 1.442695
        %v1978 = vpow.pop %v1977
        %v1979 = vsel %vm1443, %v1976, 0.0
        %1980 = vadd.xlane.f32.xlu0 %v1979
        %v1981 = vpop.xlane.xlu0 %1980
        %v1982 = vsel %vm1443, %v1978, 0.0
        %1983 = vadd.xlane.f32.xlu0 %v1982
        %v1984 = vpop.xlane.xlu0 %1983
        %v1985 = vrcp.pop %v1981
        %v1986 = vrcp.pop %v1984
        %v1987 = vmul.f32 %v1976, %v1985
        %v1988 = vmul.f32 %v1978, %v1986
        %v1989 = vpack.c.bf16 %v1988, %v1987
        %v1991 = vsel %vm1443, %v1989, 0
        %1993 = vmatprep.subr.bf16.mxu0 0
        %1994 = vmatpush1.bf16.msra.mxu0 %v1392
        %1995 = vmatprep.subr.bf16.mxu0 0
        %1996 = vmatpush1.bf16.msra.mxu0 0
        %1997 = vmatprep.subr.bf16.mxu0 0
        %1998 = vmatpush1.bf16.msra.mxu0 0
        %1999 = vmatprep.subr.bf16.mxu0 0
        %2000 = vmatpush1.bf16.msra.mxu0 0
        %2001 = vmatprep.subr.bf16.mxu0 0
        %2002 = vmatpush1.bf16.msra.mxu0 0
        %2003 = vmatprep.subr.bf16.mxu0 0
        %2004 = vmatpush1.bf16.msra.mxu0 0
        %2005 = vmatprep.subr.bf16.mxu0 0
        %2006 = vmatpush1.bf16.msra.mxu0 0
        %2007 = vmatprep.subr.bf16.mxu0 0
        %2008 = vmatpush1.bf16.msra.mxu0 0
        %2009 = vmatprep.subr.bf16.mxu0 0
        %2010 = vmatpush1.bf16.msra.mxu0 0
        %2011 = vmatprep.subr.bf16.mxu0 0
        %2012 = vmatpush1.bf16.msra.mxu0 0
        %2013 = vmatprep.subr.bf16.mxu0 0
        %2014 = vmatpush1.bf16.msra.mxu0 0
        %2015 = vmatprep.subr.bf16.mxu0 0
        %2016 = vmatpush1.bf16.msra.mxu0 0
        %2017 = vmatprep.subr.bf16.mxu0 0
        %2018 = vmatpush1.bf16.msra.mxu0 0
        %2019 = vmatprep.subr.bf16.mxu0 0
        %2020 = vmatpush1.bf16.msra.mxu0 0
        %2021 = vmatprep.subr.bf16.mxu0 0
        %2022 = vmatpush1.bf16.msra.mxu0 0
        %2023 = vmatprep.subr.bf16.mxu0 0
        %2024 = vmatpush1.bf16.msra.mxu0 0
        %2025 = vmatprep.mubr.bf16.mxu0 0
        %2026 = vmatmul.mubr.bf16.gmra.mrb[0].mxu0 %v1991
        %v2027 = vpop.f32.mrb[0].mxu0
        %v2028 = vadd.f32 0.0, %v2027
        %v2029 = vpop.f32.mrb[0].mxu0
        %v2030 = vpop.f32.mrb[0].mxu0
        %v2031 = vadd.f32 0.0, %v2030
        %v2032 = vpop.f32.mrb[0].mxu0
        %2033 = vdwg.mxu0
        %2034 = vst.msk [vmem:[#allocation3 + $0x10] sm:$0xff] %vm1393, %v2028
        %2035 = vst.msk [vmem:[#allocation3 + $0x18] sm:$0xff] %vm1393, %v2031
        %2037 = vrot.lane.b32.xlu0 %v1388, 120
        %v2038 = vpop.permute.xlu0 %2037
        %2040 = vrot.lane.b32.xlu0 %v1390, 120
        %v2041 = vpop.permute.xlu0 %2040
        %v2043 = vsel %vm1393, %v2038, 0
        %v2046 = vsel %vm1393, %v2041, 0
        %2048 = vmatprep.subr.bf16.mxu0 0
        %2049 = vmatpush1.bf16.xpose.msra.mxu0 %v2046
        %2050 = vmatprep.subr.bf16.mxu0 0
        %2051 = vmatpush1.bf16.xpose.msra.mxu0 0
        %2052 = vmatprep.subr.bf16.mxu0 0
        %2053 = vmatpush1.bf16.xpose.msra.mxu0 0
        %2054 = vmatprep.subr.bf16.mxu0 0
        %2055 = vmatpush1.bf16.xpose.msra.mxu0 0
        %2056 = vmatprep.subr.bf16.mxu0 0
        %2057 = vmatpush1.bf16.xpose.msra.mxu0 0
        %2058 = vmatprep.subr.bf16.mxu0 0
        %2059 = vmatpush1.bf16.xpose.msra.mxu0 0
        %2060 = vmatprep.subr.bf16.mxu0 0
        %2061 = vmatpush1.bf16.xpose.msra.mxu0 0
        %2062 = vmatprep.subr.bf16.mxu0 0
        %2063 = vmatpush1.bf16.xpose.msra.mxu0 0
        %2064 = vmatprep.subr.bf16.mxu0 0
        %2065 = vmatpush1.bf16.xpose.msra.mxu0 0
        %2066 = vmatprep.subr.bf16.mxu0 0
        %2067 = vmatpush1.bf16.xpose.msra.mxu0 0
        %2068 = vmatprep.subr.bf16.mxu0 0
        %2069 = vmatpush1.bf16.xpose.msra.mxu0 0
        %2070 = vmatprep.subr.bf16.mxu0 0
        %2071 = vmatpush1.bf16.xpose.msra.mxu0 0
        %2072 = vmatprep.subr.bf16.mxu0 0
        %2073 = vmatpush1.bf16.xpose.msra.mxu0 0
        %2074 = vmatprep.subr.bf16.mxu0 0
        %2075 = vmatpush1.bf16.xpose.msra.mxu0 0
        %2076 = vmatprep.subr.bf16.mxu0 0
        %2077 = vmatpush1.bf16.xpose.msra.mxu0 0
        %2078 = vmatprep.subr.bf16.mxu0 0
        %2079 = vmatpush1.bf16.xpose.msra.mxu0 0
        %2080 = vmatprep.mubr.bf16.mxu0 0
        %2081 = vmatmul.mubr.bf16.gmra.mrb[0].mxu0 %v2043
        %v2082 = vpop.f32.mrb[0].mxu0
        %v2083 = vadd.f32 0.0, %v2082
        %v2084 = vpop.f32.mrb[0].mxu0
        %v2085 = vpop.f32.mrb[0].mxu0
        %v2086 = vadd.f32 0.0, %v2085
        %v2087 = vpop.f32.mrb[0].mxu0
        %2088 = vdwg.mxu0
        %v2089 = vmul.f32 %v2083, 0.35355338
        %v2090 = vmul.f32 %v2086, 0.35355338
        %v2091 = vsel %vm1443, %v2089, -inf
        %2092 = vmax.xlane.f32.xlu0 %v2091
        %v2093 = vpop.xlane.xlu0 %2092
        %v2094 = vsel %vm1443, %v2090, -inf
        %2095 = vmax.xlane.f32.xlu0 %v2094
        %v2096 = vpop.xlane.xlu0 %2095
        %v2097 = vsub.f32 %v2089, %v2093
        %v2098 = vsub.f32 %v2090, %v2096
        %v2099 = vmul.f32 %v2097, 1.442695
        %v2100 = vpow.pop %v2099
        %v2101 = vmul.f32 %v2098, 1.442695
        %v2102 = vpow.pop %v2101
        %v2103 = vsel %vm1443, %v2100, 0.0
        %2104 = vadd.xlane.f32.xlu0 %v2103
        %v2105 = vpop.xlane.xlu0 %2104
        %v2106 = vsel %vm1443, %v2102, 0.0
        %2107 = vadd.xlane.f32.xlu0 %v2106
        %v2108 = vpop.xlane.xlu0 %2107
        %v2109 = vrcp.pop %v2105
        %v2110 = vrcp.pop %v2108
        %v2111 = vmul.f32 %v2100, %v2109
        %v2112 = vmul.f32 %v2102, %v2110
        %v2113 = vpack.c.bf16 %v2112, %v2111
        %2115 = vrot.lane.b32.xlu0 %v1392, 120
        %v2116 = vpop.permute.xlu0 %2115
        %v2119 = vsel %vm1443, %v2113, 0
        %2121 = vmatprep.subr.bf16.mxu0 0
        %2122 = vmatpush1.bf16.msra.mxu0 %v2116
        %2123 = vmatprep.subr.bf16.mxu0 0
        %2124 = vmatpush1.bf16.msra.mxu0 0
        %2125 = vmatprep.subr.bf16.mxu0 0
        %2126 = vmatpush1.bf16.msra.mxu0 0
        %2127 = vmatprep.subr.bf16.mxu0 0
        %2128 = vmatpush1.bf16.msra.mxu0 0
        %2129 = vmatprep.subr.bf16.mxu0 0
        %2130 = vmatpush1.bf16.msra.mxu0 0
        %2131 = vmatprep.subr.bf16.mxu0 0
        %2132 = vmatpush1.bf16.msra.mxu0 0
        %2133 = vmatprep.subr.bf16.mxu0 0
        %2134 = vmatpush1.bf16.msra.mxu0 0
        %2135 = vmatprep.subr.bf16.mxu0 0
        %2136 = vmatpush1.bf16.msra.mxu0 0
        %2137 = vmatprep.subr.bf16.mxu0 0
        %2138 = vmatpush1.bf16.msra.mxu0 0
        %2139 = vmatprep.subr.bf16.mxu0 0
        %2140 = vmatpush1.bf16.msra.mxu0 0
        %2141 = vmatprep.subr.bf16.mxu0 0
        %2142 = vmatpush1.bf16.msra.mxu0 0
        %2143 = vmatprep.subr.bf16.mxu0 0
        %2144 = vmatpush1.bf16.msra.mxu0 0
        %2145 = vmatprep.subr.bf16.mxu0 0
        %2146 = vmatpush1.bf16.msra.mxu0 0
        %2147 = vmatprep.subr.bf16.mxu0 0
        %2148 = vmatpush1.bf16.msra.mxu0 0
        %2149 = vmatprep.subr.bf16.mxu0 0
        %2150 = vmatpush1.bf16.msra.mxu0 0
        %2151 = vmatprep.subr.bf16.mxu0 0
        %2152 = vmatpush1.bf16.msra.mxu0 0
        %2153 = vmatprep.mubr.bf16.mxu0 0
        %2154 = vmatmul.mubr.bf16.gmra.mrb[0].mxu0 %v2119
        %v2155 = vpop.f32.mrb[0].mxu0
        %v2156 = vadd.f32 0.0, %v2155
        %v2157 = vpop.f32.mrb[0].mxu0
        %v2158 = vpop.f32.mrb[0].mxu0
        %v2159 = vadd.f32 0.0, %v2158
        %v2160 = vpop.f32.mrb[0].mxu0
        %2161 = vdwg.mxu0
        %2164 = vrot.lane.b32.xlu0 %v2156, 8
        %v2165 = vpop.permute.xlu0 %2164
        %2166 = vrot.lane.b32.xlu0 %v2159, 8
        %v2167 = vpop.permute.xlu0 %2166
        %2170 = vst.msk [vmem:[#allocation3 + $0x10] sm:$0xff] %vm1647, %v2165
        %2171 = vst.msk [vmem:[#allocation3 + $0x18] sm:$0xff] %vm1647, %v2167
        %2172 = vrot.lane.b32.xlu0 %v1388, 112
        %v2173 = vpop.permute.xlu0 %2172
        %2174 = vrot.lane.b32.xlu0 %v1390, 112
        %v2175 = vpop.permute.xlu0 %2174
        %v2177 = vsel %vm1393, %v2173, 0
        %v2180 = vsel %vm1393, %v2175, 0
        %2182 = vmatprep.subr.bf16.mxu0 0
        %2183 = vmatpush1.bf16.xpose.msra.mxu0 %v2180
        %2184 = vmatprep.subr.bf16.mxu0 0
        %2185 = vmatpush1.bf16.xpose.msra.mxu0 0
        %2186 = vmatprep.subr.bf16.mxu0 0
        %2187 = vmatpush1.bf16.xpose.msra.mxu0 0
        %2188 = vmatprep.subr.bf16.mxu0 0
        %2189 = vmatpush1.bf16.xpose.msra.mxu0 0
        %2190 = vmatprep.subr.bf16.mxu0 0
        %2191 = vmatpush1.bf16.xpose.msra.mxu0 0
        %2192 = vmatprep.subr.bf16.mxu0 0
        %2193 = vmatpush1.bf16.xpose.msra.mxu0 0
        %2194 = vmatprep.subr.bf16.mxu0 0
        %2195 = vmatpush1.bf16.xpose.msra.mxu0 0
        %2196 = vmatprep.subr.bf16.mxu0 0
        %2197 = vmatpush1.bf16.xpose.msra.mxu0 0
        %2198 = vmatprep.subr.bf16.mxu0 0
        %2199 = vmatpush1.bf16.xpose.msra.mxu0 0
        %2200 = vmatprep.subr.bf16.mxu0 0
        %2201 = vmatpush1.bf16.xpose.msra.mxu0 0
        %2202 = vmatprep.subr.bf16.mxu0 0
        %2203 = vmatpush1.bf16.xpose.msra.mxu0 0
        %2204 = vmatprep.subr.bf16.mxu0 0
        %2205 = vmatpush1.bf16.xpose.msra.mxu0 0
        %2206 = vmatprep.subr.bf16.mxu0 0
        %2207 = vmatpush1.bf16.xpose.msra.mxu0 0
        %2208 = vmatprep.subr.bf16.mxu0 0
        %2209 = vmatpush1.bf16.xpose.msra.mxu0 0
        %2210 = vmatprep.subr.bf16.mxu0 0
        %2211 = vmatpush1.bf16.xpose.msra.mxu0 0
        %2212 = vmatprep.subr.bf16.mxu0 0
        %2213 = vmatpush1.bf16.xpose.msra.mxu0 0
        %2214 = vmatprep.mubr.bf16.mxu0 0
        %2215 = vmatmul.mubr.bf16.gmra.mrb[0].mxu0 %v2177
        %v2216 = vpop.f32.mrb[0].mxu0
        %v2217 = vadd.f32 0.0, %v2216
        %v2218 = vpop.f32.mrb[0].mxu0
        %v2219 = vpop.f32.mrb[0].mxu0
        %v2220 = vadd.f32 0.0, %v2219
        %v2221 = vpop.f32.mrb[0].mxu0
        %2222 = vdwg.mxu0
        %v2223 = vmul.f32 %v2217, 0.35355338
        %v2224 = vmul.f32 %v2220, 0.35355338
        %v2225 = vsel %vm1443, %v2223, -inf
        %2226 = vmax.xlane.f32.xlu0 %v2225
        %v2227 = vpop.xlane.xlu0 %2226
        %v2228 = vsel %vm1443, %v2224, -inf
        %2229 = vmax.xlane.f32.xlu0 %v2228
        %v2230 = vpop.xlane.xlu0 %2229
        %v2231 = vsub.f32 %v2223, %v2227
        %v2232 = vsub.f32 %v2224, %v2230
        %v2233 = vmul.f32 %v2231, 1.442695
        %v2234 = vpow.pop %v2233
        %v2235 = vmul.f32 %v2232, 1.442695
        %v2236 = vpow.pop %v2235
        %v2237 = vsel %vm1443, %v2234, 0.0
        %2238 = vadd.xlane.f32.xlu0 %v2237
        %v2239 = vpop.xlane.xlu0 %2238
        %v2240 = vsel %vm1443, %v2236, 0.0
        %2241 = vadd.xlane.f32.xlu0 %v2240
        %v2242 = vpop.xlane.xlu0 %2241
        %v2243 = vrcp.pop %v2239
        %v2244 = vrcp.pop %v2242
        %v2245 = vmul.f32 %v2234, %v2243
        %v2246 = vmul.f32 %v2236, %v2244
        %v2247 = vpack.c.bf16 %v2246, %v2245
        %2248 = vrot.lane.b32.xlu0 %v1392, 112
        %v2249 = vpop.permute.xlu0 %2248
        %v2252 = vsel %vm1443, %v2247, 0
        %2254 = vmatprep.subr.bf16.mxu0 0
        %2255 = vmatpush1.bf16.msra.mxu0 %v2249
        %2256 = vmatprep.subr.bf16.mxu0 0
        %2257 = vmatpush1.bf16.msra.mxu0 0
        %2258 = vmatprep.subr.bf16.mxu0 0
        %2259 = vmatpush1.bf16.msra.mxu0 0
        %2260 = vmatprep.subr.bf16.mxu0 0
        %2261 = vmatpush1.bf16.msra.mxu0 0
        %2262 = vmatprep.subr.bf16.mxu0 0
        %2263 = vmatpush1.bf16.msra.mxu0 0
        %2264 = vmatprep.subr.bf16.mxu0 0
        %2265 = vmatpush1.bf16.msra.mxu0 0
        %2266 = vmatprep.subr.bf16.mxu0 0
        %2267 = vmatpush1.bf16.msra.mxu0 0
        %2268 = vmatprep.subr.bf16.mxu0 0
        %2269 = vmatpush1.bf16.msra.mxu0 0
        %2270 = vmatprep.subr.bf16.mxu0 0
        %2271 = vmatpush1.bf16.msra.mxu0 0
        %2272 = vmatprep.subr.bf16.mxu0 0
        %2273 = vmatpush1.bf16.msra.mxu0 0
        %2274 = vmatprep.subr.bf16.mxu0 0
        %2275 = vmatpush1.bf16.msra.mxu0 0
        %2276 = vmatprep.subr.bf16.mxu0 0
        %2277 = vmatpush1.bf16.msra.mxu0 0
        %2278 = vmatprep.subr.bf16.mxu0 0
        %2279 = vmatpush1.bf16.msra.mxu0 0
        %2280 = vmatprep.subr.bf16.mxu0 0
        %2281 = vmatpush1.bf16.msra.mxu0 0
        %2282 = vmatprep.subr.bf16.mxu0 0
        %2283 = vmatpush1.bf16.msra.mxu0 0
        %2284 = vmatprep.subr.bf16.mxu0 0
        %2285 = vmatpush1.bf16.msra.mxu0 0
        %2286 = vmatprep.mubr.bf16.mxu0 0
        %2287 = vmatmul.mubr.bf16.gmra.mrb[0].mxu0 %v2252
        %v2288 = vpop.f32.mrb[0].mxu0
        %v2289 = vadd.f32 0.0, %v2288
        %v2290 = vpop.f32.mrb[0].mxu0
        %v2291 = vpop.f32.mrb[0].mxu0
        %v2292 = vadd.f32 0.0, %v2291
        %v2293 = vpop.f32.mrb[0].mxu0
        %2294 = vdwg.mxu0
        %2297 = vrot.lane.b32.xlu0 %v2289, 16
        %v2298 = vpop.permute.xlu0 %2297
        %2299 = vrot.lane.b32.xlu0 %v2292, 16
        %v2300 = vpop.permute.xlu0 %2299
        %2303 = vst.msk [vmem:[#allocation3 + $0x10] sm:$0xff] %vm1781, %v2298
        %2304 = vst.msk [vmem:[#allocation3 + $0x18] sm:$0xff] %vm1781, %v2300
        %2305 = vrot.lane.b32.xlu0 %v1388, 104
        %v2306 = vpop.permute.xlu0 %2305
        %2307 = vrot.lane.b32.xlu0 %v1390, 104
        %v2308 = vpop.permute.xlu0 %2307
        %v2310 = vsel %vm1393, %v2306, 0
        %v2313 = vsel %vm1393, %v2308, 0
        %2315 = vmatprep.subr.bf16.mxu0 0
        %2316 = vmatpush1.bf16.xpose.msra.mxu0 %v2313
        %2317 = vmatprep.subr.bf16.mxu0 0
        %2318 = vmatpush1.bf16.xpose.msra.mxu0 0
        %2319 = vmatprep.subr.bf16.mxu0 0
        %2320 = vmatpush1.bf16.xpose.msra.mxu0 0
        %2321 = vmatprep.subr.bf16.mxu0 0
        %2322 = vmatpush1.bf16.xpose.msra.mxu0 0
        %2323 = vmatprep.subr.bf16.mxu0 0
        %2324 = vmatpush1.bf16.xpose.msra.mxu0 0
        %2325 = vmatprep.subr.bf16.mxu0 0
        %2326 = vmatpush1.bf16.xpose.msra.mxu0 0
        %2327 = vmatprep.subr.bf16.mxu0 0
        %2328 = vmatpush1.bf16.xpose.msra.mxu0 0
        %2329 = vmatprep.subr.bf16.mxu0 0
        %2330 = vmatpush1.bf16.xpose.msra.mxu0 0
        %2331 = vmatprep.subr.bf16.mxu0 0
        %2332 = vmatpush1.bf16.xpose.msra.mxu0 0
        %2333 = vmatprep.subr.bf16.mxu0 0
        %2334 = vmatpush1.bf16.xpose.msra.mxu0 0
        %2335 = vmatprep.subr.bf16.mxu0 0
        %2336 = vmatpush1.bf16.xpose.msra.mxu0 0
        %2337 = vmatprep.subr.bf16.mxu0 0
        %2338 = vmatpush1.bf16.xpose.msra.mxu0 0
        %2339 = vmatprep.subr.bf16.mxu0 0
        %2340 = vmatpush1.bf16.xpose.msra.mxu0 0
        %2341 = vmatprep.subr.bf16.mxu0 0
        %2342 = vmatpush1.bf16.xpose.msra.mxu0 0
        %2343 = vmatprep.subr.bf16.mxu0 0
        %2344 = vmatpush1.bf16.xpose.msra.mxu0 0
        %2345 = vmatprep.subr.bf16.mxu0 0
        %2346 = vmatpush1.bf16.xpose.msra.mxu0 0
        %2347 = vmatprep.mubr.bf16.mxu0 0
        %2348 = vmatmul.mubr.bf16.gmra.mrb[0].mxu0 %v2310
        %v2349 = vpop.f32.mrb[0].mxu0
        %v2350 = vadd.f32 0.0, %v2349
        %v2351 = vpop.f32.mrb[0].mxu0
        %v2352 = vpop.f32.mrb[0].mxu0
        %v2353 = vadd.f32 0.0, %v2352
        %v2354 = vpop.f32.mrb[0].mxu0
        %2355 = vdwg.mxu0
        %v2356 = vmul.f32 %v2350, 0.35355338
        %v2357 = vmul.f32 %v2353, 0.35355338
        %v2358 = vsel %vm1443, %v2356, -inf
        %2359 = vmax.xlane.f32.xlu0 %v2358
        %v2360 = vpop.xlane.xlu0 %2359
        %v2361 = vsel %vm1443, %v2357, -inf
        %2362 = vmax.xlane.f32.xlu0 %v2361
        %v2363 = vpop.xlane.xlu0 %2362
        %v2364 = vsub.f32 %v2356, %v2360
        %v2365 = vsub.f32 %v2357, %v2363
        %v2366 = vmul.f32 %v2364, 1.442695
        %v2367 = vpow.pop %v2366
        %v2368 = vmul.f32 %v2365, 1.442695
        %v2369 = vpow.pop %v2368
        %v2370 = vsel %vm1443, %v2367, 0.0
        %2371 = vadd.xlane.f32.xlu0 %v2370
        %v2372 = vpop.xlane.xlu0 %2371
        %v2373 = vsel %vm1443, %v2369, 0.0
        %2374 = vadd.xlane.f32.xlu0 %v2373
        %v2375 = vpop.xlane.xlu0 %2374
        %v2376 = vrcp.pop %v2372
        %v2377 = vrcp.pop %v2375
        %v2378 = vmul.f32 %v2367, %v2376
        %v2379 = vmul.f32 %v2369, %v2377
        %v2380 = vpack.c.bf16 %v2379, %v2378
        %2381 = vrot.lane.b32.xlu0 %v1392, 104
        %v2382 = vpop.permute.xlu0 %2381
        %v2385 = vsel %vm1443, %v2380, 0
        %2387 = vmatprep.subr.bf16.mxu0 0
        %2388 = vmatpush1.bf16.msra.mxu0 %v2382
        %2389 = vmatprep.subr.bf16.mxu0 0
        %2390 = vmatpush1.bf16.msra.mxu0 0
        %2391 = vmatprep.subr.bf16.mxu0 0
        %2392 = vmatpush1.bf16.msra.mxu0 0
        %2393 = vmatprep.subr.bf16.mxu0 0
        %2394 = vmatpush1.bf16.msra.mxu0 0
        %2395 = vmatprep.subr.bf16.mxu0 0
        %2396 = vmatpush1.bf16.msra.mxu0 0
        %2397 = vmatprep.subr.bf16.mxu0 0
        %2398 = vmatpush1.bf16.msra.mxu0 0
        %2399 = vmatprep.subr.bf16.mxu0 0
        %2400 = vmatpush1.bf16.msra.mxu0 0
        %2401 = vmatprep.subr.bf16.mxu0 0
        %2402 = vmatpush1.bf16.msra.mxu0 0
        %2403 = vmatprep.subr.bf16.mxu0 0
        %2404 = vmatpush1.bf16.msra.mxu0 0
        %2405 = vmatprep.subr.bf16.mxu0 0
        %2406 = vmatpush1.bf16.msra.mxu0 0
        %2407 = vmatprep.subr.bf16.mxu0 0
        %2408 = vmatpush1.bf16.msra.mxu0 0
        %2409 = vmatprep.subr.bf16.mxu0 0
        %2410 = vmatpush1.bf16.msra.mxu0 0
        %2411 = vmatprep.subr.bf16.mxu0 0
        %2412 = vmatpush1.bf16.msra.mxu0 0
        %2413 = vmatprep.subr.bf16.mxu0 0
        %2414 = vmatpush1.bf16.msra.mxu0 0
        %2415 = vmatprep.subr.bf16.mxu0 0
        %2416 = vmatpush1.bf16.msra.mxu0 0
        %2417 = vmatprep.subr.bf16.mxu0 0
        %2418 = vmatpush1.bf16.msra.mxu0 0
        %2419 = vmatprep.mubr.bf16.mxu0 0
        %2420 = vmatmul.mubr.bf16.gmra.mrb[0].mxu0 %v2385
        %v2421 = vpop.f32.mrb[0].mxu0
        %v2422 = vadd.f32 0.0, %v2421
        %v2423 = vpop.f32.mrb[0].mxu0
        %v2424 = vpop.f32.mrb[0].mxu0
        %v2425 = vadd.f32 0.0, %v2424
        %v2426 = vpop.f32.mrb[0].mxu0
        %2427 = vdwg.mxu0
        %2430 = vrot.lane.b32.xlu0 %v2422, 24
        %v2431 = vpop.permute.xlu0 %2430
        %2432 = vrot.lane.b32.xlu0 %v2425, 24
        %v2433 = vpop.permute.xlu0 %2432
        %2436 = vst.msk [vmem:[#allocation3 + $0x10] sm:$0xff] %vm1915, %v2431
        %2437 = vst.msk [vmem:[#allocation3 + $0x18] sm:$0xff] %vm1915, %v2433
        %v2438 = vld [vmem:[#allocation3] sm:$0xff]
        %v2439 = vld [vmem:[#allocation3 + $0x8] sm:$0xff]
        %v2440 = vld [vmem:[#allocation3 + $0x10] sm:$0xff]
        %v2441 = vld [vmem:[#allocation3 + $0x18] sm:$0xff]
        %v2442 = vpack.c.bf16 %v2439, %v2438
        %v2443 = vpack.c.bf16 %v2441, %v2440
        %v2444 = vld [vmem:[%s866] sm:$0xf]
        %v2445 = vld [vmem:[%s866 + $0x4] sm:$0xf]
        %v2446 = vld [vmem:[%s866 + $0x8] sm:$0xf]
        %v2447 = vld [vmem:[%s866 + $0xc] sm:$0xf]
        %v2448 = vld [vmem:[%s1028] sm:$0x1]
        %v2450 = vlaneseq
        %v2451 = vshrl.u32 %v2450, 7
        %v2452 = vsub.s32 0, %v2451
        %v2453 = vrot.slane %v2448, %v2452
        %v2459 = vunpack.c.l.b16 %v2444
        %v2460 = vunpack.c.l.b16 %v2445
        %v2461 = vunpack.c.l.b16 %v2446
        %v2462 = vunpack.c.l.b16 %v2447
        %v2463 = vpack.c.b16 %v2460, %v2459
        %v2464 = vpack.c.b16 %v2462, %v2461
        %v2468 = vsel %vm1187, %v2442, 0
        %v2471 = vsel %vm1187, %v2443, 0
        %2473 = vmatprep.subr.bf16.mxu0 0
        %2474 = vmatpush1.bf16.msra.mxu0 %v2463
        %2475 = vmatprep.subr.bf16.mxu0 0
        %2476 = vmatpush1.bf16.msra.mxu0 %v2464
        %2477 = vmatprep.subr.bf16.mxu0 0
        %2478 = vmatpush1.bf16.msra.mxu0 0
        %2479 = vmatprep.subr.bf16.mxu0 0
        %2480 = vmatpush1.bf16.msra.mxu0 0
        %2481 = vmatprep.subr.bf16.mxu0 0
        %2482 = vmatpush1.bf16.msra.mxu0 0
        %2483 = vmatprep.subr.bf16.mxu0 0
        %2484 = vmatpush1.bf16.msra.mxu0 0
        %2485 = vmatprep.subr.bf16.mxu0 0
        %2486 = vmatpush1.bf16.msra.mxu0 0
        %2487 = vmatprep.subr.bf16.mxu0 0
        %2488 = vmatpush1.bf16.msra.mxu0 0
        %2489 = vmatprep.subr.bf16.mxu0 0
        %2490 = vmatpush1.bf16.msra.mxu0 0
        %2491 = vmatprep.subr.bf16.mxu0 0
        %2492 = vmatpush1.bf16.msra.mxu0 0
        %2493 = vmatprep.subr.bf16.mxu0 0
        %2494 = vmatpush1.bf16.msra.mxu0 0
        %2495 = vmatprep.subr.bf16.mxu0 0
        %2496 = vmatpush1.bf16.msra.mxu0 0
        %2497 = vmatprep.subr.bf16.mxu0 0
        %2498 = vmatpush1.bf16.msra.mxu0 0
        %2499 = vmatprep.subr.bf16.mxu0 0
        %2500 = vmatpush1.bf16.msra.mxu0 0
        %2501 = vmatprep.subr.bf16.mxu0 0
        %2502 = vmatpush1.bf16.msra.mxu0 0
        %2503 = vmatprep.subr.bf16.mxu0 0
        %2504 = vmatpush1.bf16.msra.mxu0 0
        %2505 = vmatprep.mubr.bf16.mxu0 0
        %2506 = vmatmul.mubr.bf16.gmra.mrb[0].mxu0 %v2468
        %v2507 = vpop.f32.mrb[0].mxu0
        %v2508 = vadd.f32 %v2453, %v2507
        %v2509 = vpop.f32.mrb[0].mxu0
        %v2510 = vpop.f32.mrb[0].mxu0
        %v2511 = vadd.f32 %v2453, %v2510
        %v2512 = vpop.f32.mrb[0].mxu0
        %2513 = vmatprep.mubr.bf16.mxu0 0
        %2514 = vmatmul.mubr.bf16.gmra.mrb[0].mxu0 %v2471
        %v2515 = vpop.f32.mrb[0].mxu0
        %v2516 = vadd.f32 %v2453, %v2515
        %v2517 = vpop.f32.mrb[0].mxu0
        %v2518 = vpop.f32.mrb[0].mxu0
        %v2519 = vadd.f32 %v2453, %v2518
        %v2520 = vpop.f32.mrb[0].mxu0
        %2521 = vdwg.mxu0
        %v2522 = vadd.f32 %v1158, %v2508
        %v2523 = vadd.f32 %v1159, %v2511
        %v2524 = vadd.f32 %v1160, %v2516
        %v2525 = vadd.f32 %v1161, %v2519
        %v2526 = vld [vmem:[%s1042] sm:$0x1]
        %v2527 = vld [vmem:[%s1045] sm:$0x1]
        %v2528 = vsel %vm1187, %v2522, 0.0
        %2529 = vadd.xlane.f32.xlu0 %v2528
        %v2530 = vpop.xlane.xlu0 %2529
        %v2531 = vsel %vm1187, %v2523, 0.0
        %2532 = vadd.xlane.f32.xlu0 %v2531
        %v2533 = vpop.xlane.xlu0 %2532
        %v2534 = vsel %vm1187, %v2524, 0.0
        %2535 = vadd.xlane.f32.xlu0 %v2534
        %v2536 = vpop.xlane.xlu0 %2535
        %v2537 = vsel %vm1187, %v2525, 0.0
        %2538 = vadd.xlane.f32.xlu0 %v2537
        %v2539 = vpop.xlane.xlu0 %2538
        %v2540 = vrcp.pop 32.0
        %v2541 = vmul.f32 %v2530, %v2540
        %v2542 = vmul.f32 %v2533, %v2540
        %v2543 = vmul.f32 %v2536, %v2540
        %v2544 = vmul.f32 %v2539, %v2540
        %v2545 = vsub.f32 %v2522, %v2541
        %v2546 = vsub.f32 %v2523, %v2542
        %v2547 = vsub.f32 %v2524, %v2543
        %v2548 = vsub.f32 %v2525, %v2544
        %v2549 = vmul.f32 %v2545, %v2545
        %v2550 = vmul.f32 %v2546, %v2546
        %v2551 = vmul.f32 %v2547, %v2547
        %v2552 = vmul.f32 %v2548, %v2548
        %v2553 = vsel %vm1187, %v2549, 0.0
        %2554 = vadd.xlane.f32.xlu0 %v2553
        %v2555 = vpop.xlane.xlu0 %2554
        %v2556 = vsel %vm1187, %v2550, 0.0
        %2557 = vadd.xlane.f32.xlu0 %v2556
        %v2558 = vpop.xlane.xlu0 %2557
        %v2559 = vsel %vm1187, %v2551, 0.0
        %2560 = vadd.xlane.f32.xlu0 %v2559
        %v2561 = vpop.xlane.xlu0 %2560
        %v2562 = vsel %vm1187, %v2552, 0.0
        %2563 = vadd.xlane.f32.xlu0 %v2562
        %v2564 = vpop.xlane.xlu0 %2563
        %v2565 = vmul.f32 %v2555, %v2540
        %v2566 = vmul.f32 %v2558, %v2540
        %v2567 = vmul.f32 %v2561, %v2540
        %v2568 = vmul.f32 %v2564, %v2540
        %v2569 = vadd.f32 %v2565, 1e-05
        %v2570 = vadd.f32 %v2566, 1e-05
        %v2571 = vadd.f32 %v2567, 1e-05
        %v2572 = vadd.f32 %v2568, 1e-05
        %v2573 = vrsqrt.pop %v2569
        %v2574 = vrsqrt.pop %v2570
        %v2575 = vrsqrt.pop %v2571
        %v2576 = vrsqrt.pop %v2572
        %v2577 = vmul.f32 %v2545, %v2573
        %v2578 = vmul.f32 %v2546, %v2574
        %v2579 = vmul.f32 %v2547, %v2575
        %v2580 = vmul.f32 %v2548, %v2576
        %v2582 = vlaneseq
        %v2583 = vshrl.u32 %v2582, 7
        %v2584 = vsub.s32 0, %v2583
        %v2585 = vrot.slane %v2526, %v2584
        %v2587 = vmul.f32 %v2577, %v2585
        %v2588 = vmul.f32 %v2578, %v2585
        %v2589 = vmul.f32 %v2579, %v2585
        %v2590 = vmul.f32 %v2580, %v2585
        %v2592 = vlaneseq
        %v2593 = vshrl.u32 %v2592, 7
        %v2594 = vsub.s32 0, %v2593
        %v2595 = vrot.slane %v2527, %v2594
        %v2597 = vadd.f32 %v2587, %v2595
        %v2598 = vadd.f32 %v2588, %v2595
        %v2599 = vadd.f32 %v2589, %v2595
        %v2600 = vadd.f32 %v2590, %v2595
        %v2601 = vpack.c.bf16 %v2598, %v2597
        %v2602 = vpack.c.bf16 %v2600, %v2599
        %v2603 = vld [vmem:[%s875] sm:$0xf]
        %v2604 = vld [vmem:[%s875 + $0x4] sm:$0xf]
        %v2605 = vld [vmem:[%s875 + $0x8] sm:$0xf]
        %v2606 = vld [vmem:[%s875 + $0xc] sm:$0xf]
        %v2607 = vld [vmem:[%s1031] sm:$0x1]
        %v2609 = vlaneseq
        %v2610 = vshrl.u32 %v2609, 7
        %v2611 = vsub.s32 0, %v2610
        %v2612 = vrot.slane %v2607, %v2611
        %v2618 = vunpack.c.l.b16 %v2603
        %v2619 = vunpack.c.l.b16 %v2604
        %v2620 = vunpack.c.l.b16 %v2605
        %v2621 = vunpack.c.l.b16 %v2606
        %v2622 = vpack.c.b16 %v2619, %v2618
        %v2623 = vpack.c.b16 %v2621, %v2620
        %v2627 = vsel %vm1187, %v2601, 0
        %v2630 = vsel %vm1187, %v2602, 0
        %2632 = vmatprep.subr.bf16.mxu0 0
        %2633 = vmatpush1.bf16.msra.mxu0 %v2622
        %2634 = vmatprep.subr.bf16.mxu0 0
        %2635 = vmatpush1.bf16.msra.mxu0 %v2623
        %2636 = vmatprep.subr.bf16.mxu0 0
        %2637 = vmatpush1.bf16.msra.mxu0 0
        %2638 = vmatprep.subr.bf16.mxu0 0
        %2639 = vmatpush1.bf16.msra.mxu0 0
        %2640 = vmatprep.subr.bf16.mxu0 0
        %2641 = vmatpush1.bf16.msra.mxu0 0
        %2642 = vmatprep.subr.bf16.mxu0 0
        %2643 = vmatpush1.bf16.msra.mxu0 0
        %2644 = vmatprep.subr.bf16.mxu0 0
        %2645 = vmatpush1.bf16.msra.mxu0 0
        %2646 = vmatprep.subr.bf16.mxu0 0
        %2647 = vmatpush1.bf16.msra.mxu0 0
        %2648 = vmatprep.subr.bf16.mxu0 0
        %2649 = vmatpush1.bf16.msra.mxu0 0
        %2650 = vmatprep.subr.bf16.mxu0 0
        %2651 = vmatpush1.bf16.msra.mxu0 0
        %2652 = vmatprep.subr.bf16.mxu0 0
        %2653 = vmatpush1.bf16.msra.mxu0 0
        %2654 = vmatprep.subr.bf16.mxu0 0
        %2655 = vmatpush1.bf16.msra.mxu0 0
        %2656 = vmatprep.subr.bf16.mxu0 0
        %2657 = vmatpush1.bf16.msra.mxu0 0
        %2658 = vmatprep.subr.bf16.mxu0 0
        %2659 = vmatpush1.bf16.msra.mxu0 0
        %2660 = vmatprep.subr.bf16.mxu0 0
        %2661 = vmatpush1.bf16.msra.mxu0 0
        %2662 = vmatprep.subr.bf16.mxu0 0
        %2663 = vmatpush1.bf16.msra.mxu0 0
        %2664 = vmatprep.mubr.bf16.mxu0 0
        %2665 = vmatmul.mubr.bf16.gmra.mrb[0].mxu0 %v2627
        %v2666 = vpop.f32.mrb[0].mxu0
        %v2667 = vadd.f32 %v2612, %v2666
        %v2668 = vpop.f32.mrb[0].mxu0
        %v2669 = vpop.f32.mrb[0].mxu0
        %v2670 = vadd.f32 %v2612, %v2669
        %v2671 = vpop.f32.mrb[0].mxu0
        %2672 = vmatprep.mubr.bf16.mxu0 0
        %2673 = vmatmul.mubr.bf16.gmra.mrb[0].mxu0 %v2630
        %v2674 = vpop.f32.mrb[0].mxu0
        %v2675 = vadd.f32 %v2612, %v2674
        %v2676 = vpop.f32.mrb[0].mxu0
        %v2677 = vpop.f32.mrb[0].mxu0
        %v2678 = vadd.f32 %v2612, %v2677
        %v2679 = vpop.f32.mrb[0].mxu0
        %2680 = vdwg.mxu0
        %v2681 = vmul.f32 %v2667, 0.5
        %v2682 = vmul.f32 %v2670, 0.5
        %v2683 = vmul.f32 %v2675, 0.5
        %v2684 = vmul.f32 %v2678, 0.5
        %v2685 = vmul.f32 %v2667, 0.044715
        %v2686 = vmul.f32 %v2670, 0.044715
        %v2687 = vmul.f32 %v2675, 0.044715
        %v2688 = vmul.f32 %v2678, 0.044715
        %v2689 = vmul.f32 %v2685, %v2667
        %v2690 = vmul.f32 %v2686, %v2670
        %v2691 = vmul.f32 %v2687, %v2675
        %v2692 = vmul.f32 %v2688, %v2678
        %v2693 = vmul.f32 %v2689, %v2667
        %v2694 = vmul.f32 %v2690, %v2670
        %v2695 = vmul.f32 %v2691, %v2675
        %v2696 = vmul.f32 %v2692, %v2678
        %v2697 = vadd.f32 %v2667, %v2693
        %v2698 = vadd.f32 %v2670, %v2694
        %v2699 = vadd.f32 %v2675, %v2695
        %v2700 = vadd.f32 %v2678, %v2696
        %v2701 = vmul.f32 %v2697, 0.7978846
        %v2702 = vmul.f32 %v2698, 0.7978846
        %v2703 = vmul.f32 %v2699, 0.7978846
        %v2704 = vmul.f32 %v2700, 0.7978846
        %v2705 = vtanh.pop %v2701
        %v2706 = vtanh.pop %v2702
        %v2707 = vtanh.pop %v2703
        %v2708 = vtanh.pop %v2704
        %v2709 = vadd.f32 %v2705, 1.0
        %v2710 = vadd.f32 %v2706, 1.0
        %v2711 = vadd.f32 %v2707, 1.0
        %v2712 = vadd.f32 %v2708, 1.0
        %v2713 = vmul.f32 %v2681, %v2709
        %v2714 = vmul.f32 %v2682, %v2710
        %v2715 = vmul.f32 %v2683, %v2711
        %v2716 = vmul.f32 %v2684, %v2712
        %v2717 = vpack.c.bf16 %v2714, %v2713
        %v2718 = vpack.c.bf16 %v2716, %v2715
        %v2719 = vld [vmem:[%s1036] sm:$0xf]
        %v2720 = vld [vmem:[%s1036 + $0x4] sm:$0xf]
        %v2721 = vld [vmem:[%s1036 + $0x8] sm:$0xf]
        %v2722 = vld [vmem:[%s1036 + $0xc] sm:$0xf]
        %v2723 = vld [vmem:[%s1036 + $0x10] sm:$0xf]
        %v2724 = vld [vmem:[%s1036 + $0x14] sm:$0xf]
        %v2725 = vld [vmem:[%s1036 + $0x18] sm:$0xf]
        %v2726 = vld [vmem:[%s1036 + $0x1c] sm:$0xf]
        %v2727 = vld [vmem:[%s1039] sm:$0x1]
        %v2729 = vlaneseq
        %v2730 = vshrl.u32 %v2729, 7
        %v2731 = vsub.s32 0, %v2730
        %v2732 = vrot.slane %v2727, %v2731
        %v2742 = vunpack.c.l.b16 %v2719
        %v2743 = vunpack.c.l.b16 %v2720
        %v2744 = vunpack.c.l.b16 %v2721
        %v2745 = vunpack.c.l.b16 %v2722
        %v2746 = vunpack.c.l.b16 %v2723
        %v2747 = vunpack.c.l.b16 %v2724
        %v2748 = vunpack.c.l.b16 %v2725
        %v2749 = vunpack.c.l.b16 %v2726
        %v2750 = vpack.c.b16 %v2743, %v2742
        %v2751 = vpack.c.b16 %v2745, %v2744
        %v2752 = vpack.c.b16 %v2747, %v2746
        %v2753 = vpack.c.b16 %v2749, %v2748
        %vm2758 = vcmask 523264
        %v2760 = vsel %vm2758, %v2717, 0
        %v2763 = vsel %vm2758, %v2718, 0
        %2765 = vmatprep.subr.bf16.mxu0 0
        %2766 = vmatpush1.bf16.msra.mxu0 %v2750
        %2767 = vmatprep.subr.bf16.mxu0 0
        %2768 = vmatpush1.bf16.msra.mxu0 %v2751
        %2769 = vmatprep.subr.bf16.mxu0 0
        %2770 = vmatpush1.bf16.msra.mxu0 %v2752
        %2771 = vmatprep.subr.bf16.mxu0 0
        %2772 = vmatpush1.bf16.msra.mxu0 %v2753
        %2773 = vmatprep.subr.bf16.mxu0 0
        %2774 = vmatpush1.bf16.msra.mxu0 0
        %2775 = vmatprep.subr.bf16.mxu0 0
        %2776 = vmatpush1.bf16.msra.mxu0 0
        %2777 = vmatprep.subr.bf16.mxu0 0
        %2778 = vmatpush1.bf16.msra.mxu0 0
        %2779 = vmatprep.subr.bf16.mxu0 0
        %2780 = vmatpush1.bf16.msra.mxu0 0
        %2781 = vmatprep.subr.bf16.mxu0 0
        %2782 = vmatpush1.bf16.msra.mxu0 0
        %2783 = vmatprep.subr.bf16.mxu0 0
        %2784 = vmatpush1.bf16.msra.mxu0 0
        %2785 = vmatprep.subr.bf16.mxu0 0
        %2786 = vmatpush1.bf16.msra.mxu0 0
        %2787 = vmatprep.subr.bf16.mxu0 0
        %2788 = vmatpush1.bf16.msra.mxu0 0
        %2789 = vmatprep.subr.bf16.mxu0 0
        %2790 = vmatpush1.bf16.msra.mxu0 0
        %2791 = vmatprep.subr.bf16.mxu0 0
        %2792 = vmatpush1.bf16.msra.mxu0 0
        %2793 = vmatprep.subr.bf16.mxu0 0
        %2794 = vmatpush1.bf16.msra.mxu0 0
        %2795 = vmatprep.subr.bf16.mxu0 0
        %2796 = vmatpush1.bf16.msra.mxu0 0
        %2797 = vmatprep.mubr.bf16.mxu0 0
        %2798 = vmatmul.mubr.bf16.gmra.mrb[0].mxu0 %v2760
        %v2799 = vpop.f32.mrb[0].mxu0
        %v2800 = vadd.f32 %v2732, %v2799
        %v2801 = vpop.f32.mrb[0].mxu0
        %v2802 = vpop.f32.mrb[0].mxu0
        %v2803 = vadd.f32 %v2732, %v2802
        %v2804 = vpop.f32.mrb[0].mxu0
        %2805 = vmatprep.mubr.bf16.mxu0 0
        %2806 = vmatmul.mubr.bf16.gmra.mrb[0].mxu0 %v2763
        %v2807 = vpop.f32.mrb[0].mxu0
        %v2808 = vadd.f32 %v2732, %v2807
        %v2809 = vpop.f32.mrb[0].mxu0
        %v2810 = vpop.f32.mrb[0].mxu0
        %v2811 = vadd.f32 %v2732, %v2810
        %v2812 = vpop.f32.mrb[0].mxu0
        %2813 = vdwg.mxu0
        %v2814 = vadd.f32 %v2597, %v2800
        %v2815 = vadd.f32 %v2598, %v2803
        %v2816 = vadd.f32 %v2599, %v2808
        %v2817 = vadd.f32 %v2600, %v2811
        %v2818 = vld [vmem:[%s1048] sm:$0x1]
        %v2819 = vld [vmem:[%s1051] sm:$0x1]
        %v2820 = vsel %vm1187, %v2814, 0.0
        %2821 = vadd.xlane.f32.xlu0 %v2820
        %v2822 = vpop.xlane.xlu0 %2821
        %v2823 = vsel %vm1187, %v2815, 0.0
        %2824 = vadd.xlane.f32.xlu0 %v2823
        %v2825 = vpop.xlane.xlu0 %2824
        %v2826 = vsel %vm1187, %v2816, 0.0
        %2827 = vadd.xlane.f32.xlu0 %v2826
        %v2828 = vpop.xlane.xlu0 %2827
        %v2829 = vsel %vm1187, %v2817, 0.0
        %2830 = vadd.xlane.f32.xlu0 %v2829
        %v2831 = vpop.xlane.xlu0 %2830
        %v2832 = vmul.f32 %v2822, %v2540
        %v2833 = vmul.f32 %v2825, %v2540
        %v2834 = vmul.f32 %v2828, %v2540
        %v2835 = vmul.f32 %v2831, %v2540
        %v2836 = vsub.f32 %v2814, %v2832
        %v2837 = vsub.f32 %v2815, %v2833
        %v2838 = vsub.f32 %v2816, %v2834
        %v2839 = vsub.f32 %v2817, %v2835
        %v2840 = vmul.f32 %v2836, %v2836
        %v2841 = vmul.f32 %v2837, %v2837
        %v2842 = vmul.f32 %v2838, %v2838
        %v2843 = vmul.f32 %v2839, %v2839
        %v2844 = vsel %vm1187, %v2840, 0.0
        %2845 = vadd.xlane.f32.xlu0 %v2844
        %v2846 = vpop.xlane.xlu0 %2845
        %v2847 = vsel %vm1187, %v2841, 0.0
        %2848 = vadd.xlane.f32.xlu0 %v2847
        %v2849 = vpop.xlane.xlu0 %2848
        %v2850 = vsel %vm1187, %v2842, 0.0
        %2851 = vadd.xlane.f32.xlu0 %v2850
        %v2852 = vpop.xlane.xlu0 %2851
        %v2853 = vsel %vm1187, %v2843, 0.0
        %2854 = vadd.xlane.f32.xlu0 %v2853
        %v2855 = vpop.xlane.xlu0 %2854
        %v2856 = vmul.f32 %v2846, %v2540
        %v2857 = vmul.f32 %v2849, %v2540
        %v2858 = vmul.f32 %v2852, %v2540
        %v2859 = vmul.f32 %v2855, %v2540
        %v2860 = vadd.f32 %v2856, 1e-05
        %v2861 = vadd.f32 %v2857, 1e-05
        %v2862 = vadd.f32 %v2858, 1e-05
        %v2863 = vadd.f32 %v2859, 1e-05
        %v2864 = vrsqrt.pop %v2860
        %v2865 = vrsqrt.pop %v2861
        %v2866 = vrsqrt.pop %v2862
        %v2867 = vrsqrt.pop %v2863
        %v2868 = vmul.f32 %v2836, %v2864
        %v2869 = vmul.f32 %v2837, %v2865
        %v2870 = vmul.f32 %v2838, %v2866
        %v2871 = vmul.f32 %v2839, %v2867
        %v2873 = vlaneseq
        %v2874 = vshrl.u32 %v2873, 7
        %v2875 = vsub.s32 0, %v2874
        %v2876 = vrot.slane %v2818, %v2875
        %v2878 = vmul.f32 %v2868, %v2876
        %v2879 = vmul.f32 %v2869, %v2876
        %v2880 = vmul.f32 %v2870, %v2876
        %v2881 = vmul.f32 %v2871, %v2876
        %v2883 = vlaneseq
        %v2884 = vshrl.u32 %v2883, 7
        %v2885 = vsub.s32 0, %v2884
        %v2886 = vrot.slane %v2819, %v2885
        %v2888 = vadd.f32 %v2878, %v2886
        %v2889 = vadd.f32 %v2879, %v2886
        %v2890 = vadd.f32 %v2880, %v2886
        %v2891 = vadd.f32 %v2881, %v2886
        %2892 = vst.msk [vmem:[#allocation2] sm:$0xff] %vm1187, %v2888
        %2893 = vst.msk [vmem:[#allocation2 + $0x8] sm:$0xff] %vm1187, %v2889
        %2894 = vst.msk [vmem:[#allocation2 + $0x10] sm:$0xff] %vm1187, %v2890
        %2895 = vst.msk [vmem:[#allocation2 + $0x18] sm:$0xff] %vm1187, %v2891
        %p2896 = scmp.eq.s32.totalorder %s46, 1
        // Predicated region
        $region133: #{tpu_custom_call.1} parent=111 // pred_check
          %p2897 = pneg %p2896
        $region134: #{tpu_custom_call.1} parent=111 // pred_check_branch
          %2899 = sbr.rel (%p2897) target = $region136
        $region135: #{tpu_custom_call.1} parent=111 // pred_region
          %v2900 = vld [vmem:[%s19] sm:$0x1]
          %v2901 = vld [vmem:[%s20] sm:$0x1]
          %v2902 = vsel %vm1187, %v2888, 0.0
          %2903 = vadd.xlane.f32.xlu0 %v2902
          %v2904 = vpop.xlane.xlu0 %2903
          %v2905 = vsel %vm1187, %v2889, 0.0
          %2906 = vadd.xlane.f32.xlu0 %v2905
          %v2907 = vpop.xlane.xlu0 %2906
          %v2908 = vsel %vm1187, %v2890, 0.0
          %2909 = vadd.xlane.f32.xlu0 %v2908
          %v2910 = vpop.xlane.xlu0 %2909
          %v2911 = vsel %vm1187, %v2891, 0.0
          %2912 = vadd.xlane.f32.xlu0 %v2911
          %v2913 = vpop.xlane.xlu0 %2912
          %v2914 = vmul.f32 %v2904, %v2540
          %v2915 = vmul.f32 %v2907, %v2540
          %v2916 = vmul.f32 %v2910, %v2540
          %v2917 = vmul.f32 %v2913, %v2540
          %v2918 = vsub.f32 %v2888, %v2914
          %v2919 = vsub.f32 %v2889, %v2915
          %v2920 = vsub.f32 %v2890, %v2916
          %v2921 = vsub.f32 %v2891, %v2917
          %v2922 = vmul.f32 %v2918, %v2918
          %v2923 = vmul.f32 %v2919, %v2919
          %v2924 = vmul.f32 %v2920, %v2920
          %v2925 = vmul.f32 %v2921, %v2921
          %v2926 = vsel %vm1187, %v2922, 0.0
          %2927 = vadd.xlane.f32.xlu0 %v2926
          %v2928 = vpop.xlane.xlu0 %2927
          %v2929 = vsel %vm1187, %v2923, 0.0
          %2930 = vadd.xlane.f32.xlu0 %v2929
          %v2931 = vpop.xlane.xlu0 %2930
          %v2932 = vsel %vm1187, %v2924, 0.0
          %2933 = vadd.xlane.f32.xlu0 %v2932
          %v2934 = vpop.xlane.xlu0 %2933
          %v2935 = vsel %vm1187, %v2925, 0.0
          %2936 = vadd.xlane.f32.xlu0 %v2935
          %v2937 = vpop.xlane.xlu0 %2936
          %v2938 = vmul.f32 %v2928, %v2540
          %v2939 = vmul.f32 %v2931, %v2540
          %v2940 = vmul.f32 %v2934, %v2540
          %v2941 = vmul.f32 %v2937, %v2540
          %v2942 = vadd.f32 %v2938, 1e-05
          %v2943 = vadd.f32 %v2939, 1e-05
          %v2944 = vadd.f32 %v2940, 1e-05
          %v2945 = vadd.f32 %v2941, 1e-05
          %v2946 = vrsqrt.pop %v2942
          %v2947 = vrsqrt.pop %v2943
          %v2948 = vrsqrt.pop %v2944
          %v2949 = vrsqrt.pop %v2945
          %v2950 = vmul.f32 %v2918, %v2946
          %v2951 = vmul.f32 %v2919, %v2947
          %v2952 = vmul.f32 %v2920, %v2948
          %v2953 = vmul.f32 %v2921, %v2949
          %v2955 = vlaneseq
          %v2956 = vshrl.u32 %v2955, 7
          %v2957 = vsub.s32 0, %v2956
          %v2958 = vrot.slane %v2900, %v2957
          %v2960 = vmul.f32 %v2950, %v2958
          %v2961 = vmul.f32 %v2951, %v2958
          %v2962 = vmul.f32 %v2952, %v2958
          %v2963 = vmul.f32 %v2953, %v2958
          %v2965 = vlaneseq
          %v2966 = vshrl.u32 %v2965, 7
          %v2967 = vsub.s32 0, %v2966
          %v2968 = vrot.slane %v2901, %v2967
          %v2970 = vadd.f32 %v2960, %v2968
          %v2971 = vadd.f32 %v2961, %v2968
          %v2972 = vadd.f32 %v2962, %v2968
          %v2973 = vadd.f32 %v2963, %v2968
          %v2974 = vpack.c.bf16 %v2971, %v2970
          %v2975 = vpack.c.bf16 %v2973, %v2972
          %v2976 = vld [vmem:[%s21] sm:$0xf]
          %v2977 = vld [vmem:[%s21 + $0x4] sm:$0xf]
          %v2978 = vld [vmem:[%s21 + $0x8] sm:$0xf]
          %v2979 = vld [vmem:[%s21 + $0xc] sm:$0xf]
          %v2980 = vld [vmem:[%s22] sm:$0x1]
          %v2982 = vlaneseq
          %v2983 = vshrl.u32 %v2982, 7
          %v2984 = vsub.s32 0, %v2983
          %v2985 = vrot.slane %v2980, %v2984
          %v2991 = vunpack.c.l.b16 %v2976
          %v2992 = vunpack.c.l.b16 %v2977
          %v2993 = vunpack.c.l.b16 %v2978
          %v2994 = vunpack.c.l.b16 %v2979
          %v2995 = vpack.c.b16 %v2992, %v2991
          %v2996 = vpack.c.b16 %v2994, %v2993
          %v3000 = vsel %vm1187, %v2974, 0
          %v3003 = vsel %vm1187, %v2975, 0
          %3005 = vmatprep.subr.bf16.mxu0 0
          %3006 = vmatpush1.bf16.msra.mxu0 %v2995
          %3007 = vmatprep.subr.bf16.mxu0 0
          %3008 = vmatpush1.bf16.msra.mxu0 %v2996
          %3009 = vmatprep.subr.bf16.mxu0 0
          %3010 = vmatpush1.bf16.msra.mxu0 0
          %3011 = vmatprep.subr.bf16.mxu0 0
          %3012 = vmatpush1.bf16.msra.mxu0 0
          %3013 = vmatprep.subr.bf16.mxu0 0
          %3014 = vmatpush1.bf16.msra.mxu0 0
          %3015 = vmatprep.subr.bf16.mxu0 0
          %3016 = vmatpush1.bf16.msra.mxu0 0
          %3017 = vmatprep.subr.bf16.mxu0 0
          %3018 = vmatpush1.bf16.msra.mxu0 0
          %3019 = vmatprep.subr.bf16.mxu0 0
          %3020 = vmatpush1.bf16.msra.mxu0 0
          %3021 = vmatprep.subr.bf16.mxu0 0
          %3022 = vmatpush1.bf16.msra.mxu0 0
          %3023 = vmatprep.subr.bf16.mxu0 0
          %3024 = vmatpush1.bf16.msra.mxu0 0
          %3025 = vmatprep.subr.bf16.mxu0 0
          %3026 = vmatpush1.bf16.msra.mxu0 0
          %3027 = vmatprep.subr.bf16.mxu0 0
          %3028 = vmatpush1.bf16.msra.mxu0 0
          %3029 = vmatprep.subr.bf16.mxu0 0
          %3030 = vmatpush1.bf16.msra.mxu0 0
          %3031 = vmatprep.subr.bf16.mxu0 0
          %3032 = vmatpush1.bf16.msra.mxu0 0
          %3033 = vmatprep.subr.bf16.mxu0 0
          %3034 = vmatpush1.bf16.msra.mxu0 0
          %3035 = vmatprep.subr.bf16.mxu0 0
          %3036 = vmatpush1.bf16.msra.mxu0 0
          %3037 = vmatprep.mubr.bf16.mxu0 0
          %3038 = vmatmul.mubr.bf16.gmra.mrb[0].mxu0 %v3000
          %v3039 = vpop.f32.mrb[0].mxu0
          %v3040 = vadd.f32 %v2985, %v3039
          %v3041 = vpop.f32.mrb[0].mxu0
          %v3042 = vpop.f32.mrb[0].mxu0
          %v3043 = vadd.f32 %v2985, %v3042
          %v3044 = vpop.f32.mrb[0].mxu0
          %3045 = vmatprep.mubr.bf16.mxu0 0
          %3046 = vmatmul.mubr.bf16.gmra.mrb[0].mxu0 %v3003
          %v3047 = vpop.f32.mrb[0].mxu0
          %v3048 = vadd.f32 %v2985, %v3047
          %v3049 = vpop.f32.mrb[0].mxu0
          %v3050 = vpop.f32.mrb[0].mxu0
          %v3051 = vadd.f32 %v2985, %v3050
          %v3052 = vpop.f32.mrb[0].mxu0
          %3053 = vdwg.mxu0
          %v3054 = vmax.f32 %v3040, -0.02
          %v3055 = vmax.f32 %v3043, -0.02
          %v3056 = vmax.f32 %v3048, -0.02
          %v3057 = vmax.f32 %v3051, -0.02
          %v3058 = vmin.f32 %v3054, 0.02
          %v3059 = vmin.f32 %v3055, 0.02
          %v3060 = vmin.f32 %v3056, 0.02
          %v3061 = vmin.f32 %v3057, 0.02
          %3062 = vst.msk [vmem:[%s1056] sm:$0xff] %vm1393, %v3058
          %3063 = vst.msk [vmem:[%s1056 + $0x8] sm:$0xff] %vm1393, %v3059
          %3064 = vst.msk [vmem:[%s1056 + $0x10] sm:$0xff] %vm1393, %v3060
          %3065 = vst.msk [vmem:[%s1056 + $0x18] sm:$0xff] %vm1393, %v3061
        $region136: #{tpu_custom_call.1} parent=111 // pred_fallthru
          _
        %s3066 = smul.u32 4, %s45
        %p3067 = scmp.lt.s32.totalorder %s3066, 3
        %s3068 = scalar_select %p3067, %s3066, 3
        %s3069 = smul.addr %s3068, 8
        %s3070 = scalar_lea.vmem %s23, %s3069
        // Predicated region
        $region137: #{tpu_custom_call.1} parent=111 // pred_check
          %p3071 = pneg %p639
        $region138: #{tpu_custom_call.1} parent=111 // pred_check_branch
          %3073 = sbr.rel (%p3071) target = $region140
        $region139: #{tpu_custom_call.1} parent=111 // pred_region
          %s3074 = smul.u32 4, %s45
        $region140: #{tpu_custom_call.1} parent=111 // pred_fallthru
          _
        // Predicated region
        $region141: #{tpu_custom_call.1} parent=111 // pred_check
          %p3075 = pneg %p639
        $region142: #{tpu_custom_call.1} parent=111 // pred_check_branch
          %3077 = sbr.rel (%p3075) target = $region144
        $region143: #{tpu_custom_call.1} parent=111 // pred_region
          %s3078 = smul.u32 4, %s45
          %p3079 = scmp.lt.s32.totalorder %s3078, 3
          %s3080 = scalar_select %p3079, %s3078, 3
          %s3081 = smul.addr %s3080, 8
          %s3082 = scalar_lea.vmem %s23, %s3081
        $region144: #{tpu_custom_call.1} parent=111 // pred_fallthru
          _
      $region112: #{tpu_custom_call.1} parent=5 // pred_fallthru
        _
      %p3083 = scmp.le.s32.totalorder 2, %s36
      // Predicated region
      $region145: #{tpu_custom_call.1} parent=5 // pred_check
        %p3084 = pneg %p3083
      $region146: #{tpu_custom_call.1} parent=5 // pred_check_branch
        %3086 = sbr.rel (%p3084) target = $region148
      $region147: #{tpu_custom_call.1} parent=5 // pred_region
        %s3087 = ssub.s32 %s36, 2
      $region148: #{tpu_custom_call.1} parent=5 // pred_fallthru
        _
    $region6: #{tpu_custom_call.1} parent=1 // loop_footer
      %s40 = sadd.s32 1, %s36
    $region7: #{tpu_custom_call.1} parent=1 // loop_footer_branch
      %35 = sbr.rel target = $region3
    $region8: #{tpu_custom_call.1} parent=1 // loop_exit
      _
    %3088 = vsyncpa [#allocation5], 1
    %s3089 = scalar_lea.sflag [#allocation5], 1
    %3090 = vsyncpa %s3089, 1
    %3091 = vsyncpa [#allocation7], 1
    %s3092 = scalar_lea.sflag [#allocation7], 1
    %3093 = vsyncpa %s3092, 1
    %3094 = vsyncpa [#allocation10], 1
    %s3095 = scalar_lea.sflag [#allocation10], 1
    %3096 = vsyncpa %s3095, 1

</llo_original>
